<compile_context>
chip_gen: v7x
topology: tpu7x:2x2x1
jax: 0.10.0
libtpu: 0.0.40
codegen_flags: <defaults>
</compile_context>

<pallas_src>
import jax
import jax.numpy as jnp
from jax.experimental import pallas as pl
from jax.experimental.pallas import tpu as pltpu

LANE = 128            # TPU lane width: pad feature dims to multiples of this
HIDDEN = 64           # real hidden size of the torch module
HIDDEN_PAD = 128      # lane-padded hidden size used inside the kernel
SMALL_BATCH_CUTOFF = 128   # below this, plain jnp beats kernel dispatch cost


def _round_up(n, m):
    return ((n + m - 1) // m) * m


def _num_tensorcores():
    """Grid-step count should be a multiple of this (v7x has 2 TCs/chip)."""
    try:
        kind = jax.devices()[0].device_kind.lower()
        return 2 if "v7" in kind else 1
    except Exception:
        return 1


# --------------------------------------------------------------------------
# Kernel: one batch tile of the full 3-layer MLP forward pass.
# --------------------------------------------------------------------------
def dqn_kernel(x_ref, w1_ref, b1_ref, w2_ref, b2_ref, w3_ref, b3_ref, o_ref):
    # Hoist bias reads once per body (no re-materialized broadcasts).
    b1 = b1_ref[...]
    b2 = b2_ref[...]
    b3 = b3_ref[...]

    # fc1 + ReLU  (bf16 MXU inputs, f32 accumulation, f32 elementwise)
    x = x_ref[...].astype(jnp.bfloat16)
    h = jnp.dot(x, w1_ref[...], preferred_element_type=jnp.float32)
    h = jnp.maximum(h + b1, 0.0)

    # fc2 + ReLU
    h = jnp.dot(h.astype(jnp.bfloat16), w2_ref[...],
                preferred_element_type=jnp.float32)
    h = jnp.maximum(h + b2, 0.0)

    # fc3 (no activation); store bf16 to halve the padded output writeback.
    o = jnp.dot(h.astype(jnp.bfloat16), w3_ref[...],
                preferred_element_type=jnp.float32)
    o_ref[...] = (o + b3).astype(o_ref.dtype)


# --------------------------------------------------------------------------
# Parameter init (torch nn.Linear-like) + lane padding / bf16 prep.
# --------------------------------------------------------------------------
def init_params(key, state_size, action_size, hidden=HIDDEN):
    """Deterministic init mimicking nn.Linear default (uniform +-1/sqrt(fan_in)).
    Weights stored transposed as (in, out) so the kernel computes x @ W + b.
    Keep these f32 masters for training; re-derive padded bf16 copies per step."""
    ks = jax.random.split(key, 6)

    def linear(kw, kb, fan_in, fan_out):
        bound = 1.0 / jnp.sqrt(fan_in)
        w = jax.random.uniform(kw, (fan_in, fan_out), jnp.float32, -bound, bound)
        b = jax.random.uniform(kb, (1, fan_out), jnp.float32, -bound, bound)
        return w, b

    w1, b1 = linear(ks[0], ks[1], state_size, hidden)
    w2, b2 = linear(ks[2], ks[3], hidden, hidden)
    w3, b3 = linear(ks[4], ks[5], hidden, action_size)
    return {"w1": w1, "b1": b1, "w2": w2, "b2": b2, "w3": w3, "b3": b3}


def prepare_params(params):
    """Zero-pad hidden/action dims to 128 lanes; cast weights to bf16.
    Zero padding is semantics-preserving: padded hidden columns get bias 0 and
    ReLU(0)=0, padded rows of the next weight are 0, so they contribute
    nothing; padded action columns are sliced off in the wrapper."""
    state_size = params["w1"].shape[0]
    action_size = params["w3"].shape[1]
    a_pad = _round_up(action_size, LANE)

    def pad2(a, rows, cols):
        out = jnp.zeros((rows, cols), a.dtype)
        return out.at[: a.shape[0], : a.shape[1]].set(a)

    padded = {
        "w1": pad2(params["w1"], state_size, HIDDEN_PAD).astype(jnp.bfloat16),
        "b1": pad2(params["b1"], 1, HIDDEN_PAD),
        "w2": pad2(params["w2"], HIDDEN_PAD, HIDDEN_PAD).astype(jnp.bfloat16),
        "b2": pad2(params["b2"], 1, HIDDEN_PAD),
        "w3": pad2(params["w3"], HIDDEN_PAD, a_pad).astype(jnp.bfloat16),
        "b3": pad2(params["b3"], 1, a_pad),
    }
    return padded, action_size


# --------------------------------------------------------------------------
# Wrapper: batch-gridded pallas_call (with tiny-batch jnp fast path).
# --------------------------------------------------------------------------
def dqn_forward(x, padded_params, action_size, *, tile_b=512,
                out_dtype=jnp.float32):
    """x: (B, state_size) float32 -> (B, action_size) out_dtype Q-values."""
    B, S = x.shape
    w1, b1 = padded_params["w1"], padded_params["b1"]
    w2, b2 = padded_params["w2"], padded_params["b2"]
    w3, b3 = padded_params["w3"], padded_params["b3"]
    H = w1.shape[1]
    A_pad = w3.shape[1]

    # Acting-step batches: pallas dispatch + grid overhead dominates; XLA's
    # fused GEMM path is as fast and avoids the padded (B,128) writeback.
    if B < SMALL_BATCH_CUTOFF:
        xb = x.astype(jnp.bfloat16)
        h = jnp.maximum(jnp.dot(xb, w1, preferred_element_type=jnp.float32) + b1, 0.0)
        h = jnp.maximum(jnp.dot(h.astype(jnp.bfloat16), w2,
                                preferred_element_type=jnp.float32) + b2, 0.0)
        q = jnp.dot(h.astype(jnp.bfloat16), w3,
                    preferred_element_type=jnp.float32) + b3
        return q[:, :action_size].astype(out_dtype)

    # Pick the grid-step count first (multiple of the TC count so v7x uses
    # both cores; single big step on v5e/v6e), then size the tile so the last
    # tile isn't mostly padding for awkward B. Multiple of 16 keeps the bf16
    # output block sublane-dense.
    cores = _num_tensorcores()
    g = max(cores, pl.cdiv(B, tile_b))
    g = _round_up(g, cores)
    tb = _round_up(pl.cdiv(B, g), 16)
    B_pad = tb * g
    if B_pad != B:
        x = jnp.pad(x, ((0, B_pad - B), (0, 0)))

    flops = 2 * B_pad * (S * H + H * H + H * A_pad)
    bytes_accessed = (
        B_pad * S * x.dtype.itemsize                       # x
        + sum(int(v.size) * v.dtype.itemsize               # weights + biases
              for v in padded_params.values())
        + B_pad * A_pad * 2                                 # output (bf16)
    )

    def run(single_buffer_resident):
        # Resident operands never change across grid steps -> single buffer.
        res = dict(pipeline_mode=pl.Buffered(1)) if single_buffer_resident else {}
        out = pl.pallas_call(
            dqn_kernel,
            out_shape=jax.ShapeDtypeStruct((B_pad, A_pad), jnp.bfloat16),
            grid=(g,),
            in_specs=[
                pl.BlockSpec((tb, S), lambda i: (i, 0)),           # x: streamed
                pl.BlockSpec((S, H), lambda i: (0, 0), **res),      # w1: resident
                pl.BlockSpec((1, H), lambda i: (0, 0), **res),      # b1: resident
                pl.BlockSpec((H, H), lambda i: (0, 0), **res),      # w2: resident
                pl.BlockSpec((1, H), lambda i: (0, 0), **res),      # b2: resident
                pl.BlockSpec((H, A_pad), lambda i: (0, 0), **res),  # w3: resident
                pl.BlockSpec((1, A_pad), lambda i: (0, 0), **res),  # b3: resident
            ],
            out_specs=pl.BlockSpec((tb, A_pad), lambda i: (i, 0)),
            compiler_params=pltpu.CompilerParams(
                dimension_semantics=("parallel",)),
            cost_estimate=pl.CostEstimate(
                flops=flops, transcendentals=0, bytes_accessed=bytes_accessed),
        )(x, w1, b1, w2, b2, w3, b3)
        return jax.block_until_ready(out)

    try:
        out = run(True)
    except Exception:
        # Fallback: default double-buffered specs (correctness identical;
        # VMEM headroom is huge either way at these sizes).
        out = run(False)

    return out[:B, :action_size].astype(out_dtype)


def dqn_reference(x, p):
    """Pure-JAX f32 reference of the same forward pass (unpadded params)."""
    h = jnp.maximum(x @ p["w1"] + p["b1"], 0.0)
    h = jnp.maximum(h @ p["w2"] + p["b2"], 0.0)
    return h @ p["w3"] + p["b3"]


if __name__ == "__main__":
    key = jax.random.PRNGKey(0)
    k_params, k_x1, k_x2, k_x3 = jax.random.split(key, 4)

    state_size = 32
    action_size = 8

    params = init_params(k_params, state_size, action_size)
    padded_params, a = prepare_params(params)

    # Training-style minibatch: exercises the Pallas grid path
    # (1 step of 512 on v5e/v6e, 2 steps of 256 on v7x).
    x_train = jax.random.normal(k_x1, (512, state_size), jnp.float32)
    q_train = jax.block_until_ready(dqn_forward(x_train, padded_params, a))

    # Awkward batch size: exercises the reduced-over-padding tile selection
    # (304 padded rows instead of 512).
    x_odd = jax.random.normal(k_x3, (300, state_size), jnp.float32)
    q_odd = jax.block_until_ready(dqn_forward(x_odd, padded_params, a))

    # Acting-step batch: routed around the kernel (pure-jnp fast path).
    x_act = jax.random.normal(k_x2, (8, state_size), jnp.float32)
    q_act = jax.block_until_ready(dqn_forward(x_act, padded_params, a))

    # Correctness check against pure-JAX f32 reference (bf16 MXU inputs and
    # bf16 output store -> loosened tolerance).
    ref_train = dqn_reference(x_train, params)
    ref_odd = dqn_reference(x_odd, params)
    ref_act = dqn_reference(x_act, params)
    assert q_train.shape == (512, action_size)
    assert q_odd.shape == (300, action_size)
    assert q_act.shape == (8, action_size)
    assert jnp.allclose(q_train, ref_train, atol=3e-2, rtol=3e-2)
    assert jnp.allclose(q_odd, ref_odd, atol=3e-2, rtol=3e-2)
    assert jnp.allclose(q_act, ref_act, atol=3e-2, rtol=3e-2)

    print("KERNEL_OK")
</pallas_src>

<mosaic_0001>
module attributes {stable_mosaic.version = 11 : i64} {
  func.func @dqn_kernel(%arg0: i32, %arg1: memref<512x32xf32, #tpu.memory_space<vmem>>, %arg2: memref<32x128xbf16, #tpu.memory_space<vmem>>, %arg3: memref<1x128xf32, #tpu.memory_space<vmem>>, %arg4: memref<128x128xbf16, #tpu.memory_space<vmem>>, %arg5: memref<1x128xf32, #tpu.memory_space<vmem>>, %arg6: memref<128x128xbf16, #tpu.memory_space<vmem>>, %arg7: memref<1x128xf32, #tpu.memory_space<vmem>>, %arg8: memref<512x128xbf16, #tpu.memory_space<vmem>>) attributes {dimension_semantics = [#tpu.dimension_semantics<parallel>], iteration_bounds = array<i64: 1>, scalar_prefetch = 0 : i64, scratch_operands = 0 : i64, tpu.core_type = #tpu.core_type<tc>, window_params = [{transform_indices = @transform_0, window_bounds = array<i64: 512, 32>}, {pipeline_mode = #tpu.pipeline_mode<synchronous>, transform_indices = @transform_1, window_bounds = array<i64: 32, 128>}, {pipeline_mode = #tpu.pipeline_mode<synchronous>, transform_indices = @transform_2, window_bounds = array<i64: 1, 128>}, {pipeline_mode = #tpu.pipeline_mode<synchronous>, transform_indices = @transform_3, window_bounds = array<i64: 128, 128>}, {pipeline_mode = #tpu.pipeline_mode<synchronous>, transform_indices = @transform_4, window_bounds = array<i64: 1, 128>}, {pipeline_mode = #tpu.pipeline_mode<synchronous>, transform_indices = @transform_5, window_bounds = array<i64: 128, 128>}, {pipeline_mode = #tpu.pipeline_mode<synchronous>, transform_indices = @transform_6, window_bounds = array<i64: 1, 128>}, {transform_indices = @transform_7, window_bounds = array<i64: 512, 128>}]} {
    %c0 = arith.constant 0 : index
    %c0_0 = arith.constant 0 : index
    %0 = vector.load %arg3[%c0, %c0_0] : memref<1x128xf32, #tpu.memory_space<vmem>>, vector<1x128xf32>
    %c0_1 = arith.constant 0 : index
    %c0_2 = arith.constant 0 : index
    %1 = vector.load %arg5[%c0_1, %c0_2] : memref<1x128xf32, #tpu.memory_space<vmem>>, vector<1x128xf32>
    %c0_3 = arith.constant 0 : index
    %c0_4 = arith.constant 0 : index
    %2 = vector.load %arg7[%c0_3, %c0_4] : memref<1x128xf32, #tpu.memory_space<vmem>>, vector<1x128xf32>
    %c0_5 = arith.constant 0 : index
    %c0_6 = arith.constant 0 : index
    %3 = vector.load %arg1[%c0_5, %c0_6] : memref<512x32xf32, #tpu.memory_space<vmem>>, vector<512x32xf32>
    %4 = arith.truncf %3 : vector<512x32xf32> to vector<512x32xbf16>
    %c0_7 = arith.constant 0 : index
    %c0_8 = arith.constant 0 : index
    %5 = vector.load %arg2[%c0_7, %c0_8] : memref<32x128xbf16, #tpu.memory_space<vmem>>, vector<32x128xbf16>
    %cst = arith.constant dense<0.000000e+00> : vector<512x128xf32>
    %6 = tpu.matmul %4, %5, %cst {dimension_numbers = #tpu.dot_dimension_numbers<[1], [0], [0], [1], [0, 0, 1, 1], [], []>} : vector<512x32xbf16>, vector<32x128xbf16>, vector<512x128xf32> -> vector<512x128xf32>
    %7 = vector.broadcast %0 : vector<1x128xf32> to vector<512x128xf32>
    %8 = arith.addf %6, %7 : vector<512x128xf32>
    %cst_9 = arith.constant 0.000000e+00 : f32
    %9 = vector.broadcast %cst_9 : f32 to vector<512x128xf32>
    %10 = arith.maximumf %8, %9 : vector<512x128xf32>
    %11 = arith.truncf %10 : vector<512x128xf32> to vector<512x128xbf16>
    %c0_10 = arith.constant 0 : index
    %c0_11 = arith.constant 0 : index
    %12 = vector.load %arg4[%c0_10, %c0_11] : memref<128x128xbf16, #tpu.memory_space<vmem>>, vector<128x128xbf16>
    %cst_12 = arith.constant dense<0.000000e+00> : vector<512x128xf32>
    %13 = tpu.matmul %11, %12, %cst_12 {dimension_numbers = #tpu.dot_dimension_numbers<[1], [0], [0], [1], [0, 0, 1, 1], [], []>} : vector<512x128xbf16>, vector<128x128xbf16>, vector<512x128xf32> -> vector<512x128xf32>
    %14 = vector.broadcast %1 : vector<1x128xf32> to vector<512x128xf32>
    %15 = arith.addf %13, %14 : vector<512x128xf32>
    %cst_13 = arith.constant 0.000000e+00 : f32
    %16 = vector.broadcast %cst_13 : f32 to vector<512x128xf32>
    %17 = arith.maximumf %15, %16 : vector<512x128xf32>
    %18 = arith.truncf %17 : vector<512x128xf32> to vector<512x128xbf16>
    %c0_14 = arith.constant 0 : index
    %c0_15 = arith.constant 0 : index
    %19 = vector.load %arg6[%c0_14, %c0_15] : memref<128x128xbf16, #tpu.memory_space<vmem>>, vector<128x128xbf16>
    %cst_16 = arith.constant dense<0.000000e+00> : vector<512x128xf32>
    %20 = tpu.matmul %18, %19, %cst_16 {dimension_numbers = #tpu.dot_dimension_numbers<[1], [0], [0], [1], [0, 0, 1, 1], [], []>} : vector<512x128xbf16>, vector<128x128xbf16>, vector<512x128xf32> -> vector<512x128xf32>
    %21 = vector.broadcast %2 : vector<1x128xf32> to vector<512x128xf32>
    %22 = arith.addf %20, %21 : vector<512x128xf32>
    %23 = arith.truncf %22 : vector<512x128xf32> to vector<512x128xbf16>
    %c0_17 = arith.constant 0 : index
    %c0_18 = arith.constant 0 : index
    %24 = vector.load %arg8[%c0_17, %c0_18] : memref<512x128xbf16, #tpu.memory_space<vmem>>, vector<512x128xbf16>
    tpu.vector_store %arg8[%c0_17, %c0_18], %23 {strides = array<i32>} : memref<512x128xbf16, #tpu.memory_space<vmem>>, vector<512x128xbf16>,
    return
  }
  func.func @transform_0(%arg0: i32) -> (i32, i32) {
    %c0_i32 = arith.constant 0 : i32
    %c0_i32_0 = arith.constant 0 : i32
    return %arg0, %c0_i32 : i32, i32
  }
  func.func @transform_1(%arg0: i32) -> (i32, i32) {
    %c0_i32 = arith.constant 0 : i32
    %c0_i32_0 = arith.constant 0 : i32
    %c0_i32_1 = arith.constant 0 : i32
    return %c0_i32, %c0_i32_0 : i32, i32
  }
  func.func @transform_2(%arg0: i32) -> (i32, i32) {
    %c0_i32 = arith.constant 0 : i32
    %c0_i32_0 = arith.constant 0 : i32
    %c0_i32_1 = arith.constant 0 : i32
    return %c0_i32, %c0_i32_0 : i32, i32
  }
  func.func @transform_3(%arg0: i32) -> (i32, i32) {
    %c0_i32 = arith.constant 0 : i32
    %c0_i32_0 = arith.constant 0 : i32
    %c0_i32_1 = arith.constant 0 : i32
    return %c0_i32, %c0_i32_0 : i32, i32
  }
  func.func @transform_4(%arg0: i32) -> (i32, i32) {
    %c0_i32 = arith.constant 0 : i32
    %c0_i32_0 = arith.constant 0 : i32
    %c0_i32_1 = arith.constant 0 : i32
    return %c0_i32, %c0_i32_0 : i32, i32
  }
  func.func @transform_5(%arg0: i32) -> (i32, i32) {
    %c0_i32 = arith.constant 0 : i32
    %c0_i32_0 = arith.constant 0 : i32
    %c0_i32_1 = arith.constant 0 : i32
    return %c0_i32, %c0_i32_0 : i32, i32
  }
  func.func @transform_6(%arg0: i32) -> (i32, i32) {
    %c0_i32 = arith.constant 0 : i32
    %c0_i32_0 = arith.constant 0 : i32
    %c0_i32_1 = arith.constant 0 : i32
    return %c0_i32, %c0_i32_0 : i32, i32
  }
  func.func @transform_7(%arg0: i32) -> (i32, i32) {
    %c0_i32 = arith.constant 0 : i32
    %c0_i32_0 = arith.constant 0 : i32
    return %arg0, %c0_i32 : i32, i32
  }
}

module attributes {stable_mosaic.version = 11 : i64} {
  func.func @dqn_kernel(%arg0: i32, %arg1: memref<512x32xf32, #tpu.memory_space<vmem>>, %arg2: memref<32x128xbf16, #tpu.memory_space<vmem>>, %arg3: memref<1x128xf32, #tpu.memory_space<vmem>>, %arg4: memref<128x128xbf16, #tpu.memory_space<vmem>>, %arg5: memref<1x128xf32, #tpu.memory_space<vmem>>, %arg6: memref<128x128xbf16, #tpu.memory_space<vmem>>, %arg7: memref<1x128xf32, #tpu.memory_space<vmem>>, %arg8: memref<512x128xbf16, #tpu.memory_space<vmem>>) attributes {dimension_semantics = [#tpu.dimension_semantics<parallel>], iteration_bounds = array<i64: 1>, scalar_prefetch = 0 : i64, scratch_operands = 0 : i64, tpu.core_type = #tpu.core_type<tc>, window_params = [{transform_indices = @transform_0, window_bounds = array<i64: 512, 32>}, {pipeline_mode = #tpu.pipeline_mode<synchronous>, transform_indices = @transform_1, window_bounds = array<i64: 32, 128>}, {pipeline_mode = #tpu.pipeline_mode<synchronous>, transform_indices = @transform_2, window_bounds = array<i64: 1, 128>}, {pipeline_mode = #tpu.pipeline_mode<synchronous>, transform_indices = @transform_3, window_bounds = array<i64: 128, 128>}, {pipeline_mode = #tpu.pipeline_mode<synchronous>, transform_indices = @transform_4, window_bounds = array<i64: 1, 128>}, {pipeline_mode = #tpu.pipeline_mode<synchronous>, transform_indices = @transform_5, window_bounds = array<i64: 128, 128>}, {pipeline_mode = #tpu.pipeline_mode<synchronous>, transform_indices = @transform_6, window_bounds = array<i64: 1, 128>}, {transform_indices = @transform_7, window_bounds = array<i64: 512, 128>}]} {
    %c0 = arith.constant 0 : index
    %c0_0 = arith.constant 0 : index
    %0 = vector.load %arg3[%c0, %c0_0] : memref<1x128xf32, #tpu.memory_space<vmem>>, vector<1x128xf32>
    %c0_1 = arith.constant 0 : index
    %c0_2 = arith.constant 0 : index
    %1 = vector.load %arg5[%c0_1, %c0_2] : memref<1x128xf32, #tpu.memory_space<vmem>>, vector<1x128xf32>
    %c0_3 = arith.constant 0 : index
    %c0_4 = arith.constant 0 : index
    %2 = vector.load %arg7[%c0_3, %c0_4] : memref<1x128xf32, #tpu.memory_space<vmem>>, vector<1x128xf32>
    %c0_5 = arith.constant 0 : index
    %c0_6 = arith.constant 0 : index
    %3 = vector.load %arg1[%c0_5, %c0_6] : memref<512x32xf32, #tpu.memory_space<vmem>>, vector<512x32xf32>
    %4 = arith.truncf %3 : vector<512x32xf32> to vector<512x32xbf16>
    %c0_7 = arith.constant 0 : index
    %c0_8 = arith.constant 0 : index
    %5 = vector.load %arg2[%c0_7, %c0_8] : memref<32x128xbf16, #tpu.memory_space<vmem>>, vector<32x128xbf16>
    %cst = arith.constant dense<0.000000e+00> : vector<512x128xf32>
    %6 = tpu.matmul %4, %5, %cst {dimension_numbers = #tpu.dot_dimension_numbers<[1], [0], [0], [1], [0, 0, 1, 1], [], []>} : vector<512x32xbf16>, vector<32x128xbf16>, vector<512x128xf32> -> vector<512x128xf32>
    %7 = vector.broadcast %0 : vector<1x128xf32> to vector<512x128xf32>
    %8 = arith.addf %6, %7 : vector<512x128xf32>
    %cst_9 = arith.constant 0.000000e+00 : f32
    %9 = vector.broadcast %cst_9 : f32 to vector<512x128xf32>
    %10 = arith.maximumf %8, %9 : vector<512x128xf32>
    %11 = arith.truncf %10 : vector<512x128xf32> to vector<512x128xbf16>
    %c0_10 = arith.constant 0 : index
    %c0_11 = arith.constant 0 : index
    %12 = vector.load %arg4[%c0_10, %c0_11] : memref<128x128xbf16, #tpu.memory_space<vmem>>, vector<128x128xbf16>
    %cst_12 = arith.constant dense<0.000000e+00> : vector<512x128xf32>
    %13 = tpu.matmul %11, %12, %cst_12 {dimension_numbers = #tpu.dot_dimension_numbers<[1], [0], [0], [1], [0, 0, 1, 1], [], []>} : vector<512x128xbf16>, vector<128x128xbf16>, vector<512x128xf32> -> vector<512x128xf32>
    %14 = vector.broadcast %1 : vector<1x128xf32> to vector<512x128xf32>
    %15 = arith.addf %13, %14 : vector<512x128xf32>
    %cst_13 = arith.constant 0.000000e+00 : f32
    %16 = vector.broadcast %cst_13 : f32 to vector<512x128xf32>
    %17 = arith.maximumf %15, %16 : vector<512x128xf32>
    %18 = arith.truncf %17 : vector<512x128xf32> to vector<512x128xbf16>
    %c0_14 = arith.constant 0 : index
    %c0_15 = arith.constant 0 : index
    %19 = vector.load %arg6[%c0_14, %c0_15] : memref<128x128xbf16, #tpu.memory_space<vmem>>, vector<128x128xbf16>
    %cst_16 = arith.constant dense<0.000000e+00> : vector<512x128xf32>
    %20 = tpu.matmul %18, %19, %cst_16 {dimension_numbers = #tpu.dot_dimension_numbers<[1], [0], [0], [1], [0, 0, 1, 1], [], []>} : vector<512x128xbf16>, vector<128x128xbf16>, vector<512x128xf32> -> vector<512x128xf32>
    %21 = vector.broadcast %2 : vector<1x128xf32> to vector<512x128xf32>
    %22 = arith.addf %20, %21 : vector<512x128xf32>
    %23 = arith.truncf %22 : vector<512x128xf32> to vector<512x128xbf16>
    %c0_17 = arith.constant 0 : index
    %c0_18 = arith.constant 0 : index
    %24 = vector.load %arg8[%c0_17, %c0_18] : memref<512x128xbf16, #tpu.memory_space<vmem>>, vector<512x128xbf16>
    tpu.vector_store %arg8[%c0_17, %c0_18], %23 {strides = array<i32>} : memref<512x128xbf16, #tpu.memory_space<vmem>>, vector<512x128xbf16>,
    return
  }
  func.func @transform_0(%arg0: i32) -> (i32, i32) {
    %c0_i32 = arith.constant 0 : i32
    %c0_i32_0 = arith.constant 0 : i32
    return %arg0, %c0_i32 : i32, i32
  }
  func.func @transform_1(%arg0: i32) -> (i32, i32) {
    %c0_i32 = arith.constant 0 : i32
    %c0_i32_0 = arith.constant 0 : i32
    %c0_i32_1 = arith.constant 0 : i32
    return %c0_i32, %c0_i32_0 : i32, i32
  }
  func.func @transform_2(%arg0: i32) -> (i32, i32) {
    %c0_i32 = arith.constant 0 : i32
    %c0_i32_0 = arith.constant 0 : i32
    %c0_i32_1 = arith.constant 0 : i32
    return %c0_i32, %c0_i32_0 : i32, i32
  }
  func.func @transform_3(%arg0: i32) -> (i32, i32) {
    %c0_i32 = arith.constant 0 : i32
    %c0_i32_0 = arith.constant 0 : i32
    %c0_i32_1 = arith.constant 0 : i32
    return %c0_i32, %c0_i32_0 : i32, i32
  }
  func.func @transform_4(%arg0: i32) -> (i32, i32) {
    %c0_i32 = arith.constant 0 : i32
    %c0_i32_0 = arith.constant 0 : i32
    %c0_i32_1 = arith.constant 0 : i32
    return %c0_i32, %c0_i32_0 : i32, i32
  }
  func.func @transform_5(%arg0: i32) -> (i32, i32) {
    %c0_i32 = arith.constant 0 : i32
    %c0_i32_0 = arith.constant 0 : i32
    %c0_i32_1 = arith.constant 0 : i32
    return %c0_i32, %c0_i32_0 : i32, i32
  }
  func.func @transform_6(%arg0: i32) -> (i32, i32) {
    %c0_i32 = arith.constant 0 : i32
    %c0_i32_0 = arith.constant 0 : i32
    %c0_i32_1 = arith.constant 0 : i32
    return %c0_i32, %c0_i32_0 : i32, i32
  }
  func.func @transform_7(%arg0: i32) -> (i32, i32) {
    %c0_i32 = arith.constant 0 : i32
    %c0_i32_0 = arith.constant 0 : i32
    return %arg0, %c0_i32 : i32, i32
  }
}

</mosaic_0001>

<llo_original>
// kernel: tpu_custom_call.1
$region0: #{tpu_custom_call.1}
  #allocation0 [shape = 'u32[]', space=smem, size = 0x4, offset = 0x4, fixed_abs, tag = 'smem constant byte address 0x4 - core index']
  #allocation1 [shape = 'u32[144,128]{1,0:T(1,128)}', space=vmem, size = 0x12000, scoped, tag = 'internal scratch']
  %s0 = inlined_call_operand.vmem [shape: f32[512,32], index: 0, kind: input, shape index: {}]
  %s1 = inlined_call_operand.vmem [shape: bf16[32,128], index: 1, kind: input, shape index: {}]
  %s2 = inlined_call_operand.vmem [shape: f32[1,128], index: 2, kind: input, shape index: {}]
  %s3 = inlined_call_operand.vmem [shape: bf16[128,128], index: 3, kind: input, shape index: {}]
  %s4 = inlined_call_operand.vmem [shape: f32[1,128], index: 4, kind: input, shape index: {}]
  %s5 = inlined_call_operand.vmem [shape: bf16[128,128], index: 5, kind: input, shape index: {}]
  %s6 = inlined_call_operand.vmem [shape: f32[1,128], index: 6, kind: input, shape index: {}]
  %s7 = inlined_call_operand.hbm [shape: bf16[512,128], index: 7, kind: output, shape index: {}]
  %s8 = sld [smem:[#allocation0]]
  $region38: #{tpu_custom_call.1} parent=0
    _
  %s10 = ssub.s32 1, %s8
  %s11 = scalar_select 0, %s10, %s8
  $region1: #{tpu_custom_call.1} parent=0
    #allocation2 [shape = 'u8[131072]{0}', space=vmem, size = 0x20000, scoped, tag = 'output window, operand 0, single buffered']
    #allocation3 [shape = 's32[1]{0}', space=sflag, size = 0x4, scoped, tag = 'scoped memory for tpu_custom_call.1']
    %12 = vsyncpa [#allocation3], 0
    // Predicated region
    $region2: #{tpu_custom_call.1} parent=1 // pred_check
      _
    $region3: #{tpu_custom_call.1} parent=1 // pred_check_branch
      %14 = sbr.rel (0) target = $region5
    $region4: #{tpu_custom_call.1} parent=1 // pred_region
      _
    $region5: #{tpu_custom_call.1} parent=1 // pred_fallthru
      _
    // Predicated region
    $region6: #{tpu_custom_call.1} parent=1 // pred_check
      _
    $region7: #{tpu_custom_call.1} parent=1 // pred_check_branch
      %16 = sbr.rel (0) target = $region9
    $region8: #{tpu_custom_call.1} parent=1 // pred_region
      _
    $region9: #{tpu_custom_call.1} parent=1 // pred_fallthru
      _
    // Predicated region
    $region10: #{tpu_custom_call.1} parent=1 // pred_check
      _
    $region11: #{tpu_custom_call.1} parent=1 // pred_check_branch
      %18 = sbr.rel (0) target = $region13
    $region12: #{tpu_custom_call.1} parent=1 // pred_region
      _
    $region13: #{tpu_custom_call.1} parent=1 // pred_fallthru
      _
    // Predicated region
    $region14: #{tpu_custom_call.1} parent=1 // pred_check
      _
    $region15: #{tpu_custom_call.1} parent=1 // pred_check_branch
      %20 = sbr.rel (0) target = $region17
    $region16: #{tpu_custom_call.1} parent=1 // pred_region
      _
    $region17: #{tpu_custom_call.1} parent=1 // pred_fallthru
      _
    // Predicated region
    $region18: #{tpu_custom_call.1} parent=1 // pred_check
      _
    $region19: #{tpu_custom_call.1} parent=1 // pred_check_branch
      %22 = sbr.rel (0) target = $region21
    $region20: #{tpu_custom_call.1} parent=1 // pred_region
      _
    $region21: #{tpu_custom_call.1} parent=1 // pred_fallthru
      _
    // Predicated region
    $region22: #{tpu_custom_call.1} parent=1 // pred_check
      _
    $region23: #{tpu_custom_call.1} parent=1 // pred_check_branch
      %24 = sbr.rel (0) target = $region25
    $region24: #{tpu_custom_call.1} parent=1 // pred_region
      _
    $region25: #{tpu_custom_call.1} parent=1 // pred_fallthru
      _
    // Predicated region
    $region26: #{tpu_custom_call.1} parent=1 // pred_check
      _
    $region27: #{tpu_custom_call.1} parent=1 // pred_check_branch
      %26 = sbr.rel (0) target = $region29
    $region28: #{tpu_custom_call.1} parent=1 // pred_region
      _
    $region29: #{tpu_custom_call.1} parent=1 // pred_fallthru
      _
    %v28 = vld [vmem:[%s2] sm:$0x1]
    %v29 = vld [vmem:[%s4] sm:$0x1]
    %v30 = vld [vmem:[%s6] sm:$0x1]
    %v31 = vld [vmem:[%s0] sm:$0xff]
    %v32 = vld [vmem:[%s0 + $0x8] sm:$0xff]
    %v33 = vld [vmem:[%s0 + $0x10] sm:$0xff]
    %v34 = vld [vmem:[%s0 + $0x18] sm:$0xff]
    %v35 = vld [vmem:[%s0 + $0x20] sm:$0xff]
    %v36 = vld [vmem:[%s0 + $0x28] sm:$0xff]
    %v37 = vld [vmem:[%s0 + $0x30] sm:$0xff]
    %v38 = vld [vmem:[%s0 + $0x38] sm:$0xff]
    %v39 = vld [vmem:[%s0 + $0x40] sm:$0xff]
    %v40 = vld [vmem:[%s0 + $0x48] sm:$0xff]
    %v41 = vld [vmem:[%s0 + $0x50] sm:$0xff]
    %v42 = vld [vmem:[%s0 + $0x58] sm:$0xff]
    %v43 = vld [vmem:[%s0 + $0x60] sm:$0xff]
    %v44 = vld [vmem:[%s0 + $0x68] sm:$0xff]
    %v45 = vld [vmem:[%s0 + $0x70] sm:$0xff]
    %v46 = vld [vmem:[%s0 + $0x78] sm:$0xff]
    %v47 = vld [vmem:[%s0 + $0x80] sm:$0xff]
    %v48 = vld [vmem:[%s0 + $0x88] sm:$0xff]
    %v49 = vld [vmem:[%s0 + $0x90] sm:$0xff]
    %v50 = vld [vmem:[%s0 + $0x98] sm:$0xff]
    %v51 = vld [vmem:[%s0 + $0xa0] sm:$0xff]
    %v52 = vld [vmem:[%s0 + $0xa8] sm:$0xff]
    %v53 = vld [vmem:[%s0 + $0xb0] sm:$0xff]
    %v54 = vld [vmem:[%s0 + $0xb8] sm:$0xff]
    %v55 = vld [vmem:[%s0 + $0xc0] sm:$0xff]
    %v56 = vld [vmem:[%s0 + $0xc8] sm:$0xff]
    %v57 = vld [vmem:[%s0 + $0xd0] sm:$0xff]
    %v58 = vld [vmem:[%s0 + $0xd8] sm:$0xff]
    %v59 = vld [vmem:[%s0 + $0xe0] sm:$0xff]
    %v60 = vld [vmem:[%s0 + $0xe8] sm:$0xff]
    %v61 = vld [vmem:[%s0 + $0xf0] sm:$0xff]
    %v62 = vld [vmem:[%s0 + $0xf8] sm:$0xff]
    %v63 = vld [vmem:[%s0 + $0x100] sm:$0xff]
    %v64 = vld [vmem:[%s0 + $0x108] sm:$0xff]
    %v65 = vld [vmem:[%s0 + $0x110] sm:$0xff]
    %v66 = vld [vmem:[%s0 + $0x118] sm:$0xff]
    %v67 = vld [vmem:[%s0 + $0x120] sm:$0xff]
    %v68 = vld [vmem:[%s0 + $0x128] sm:$0xff]
    %v69 = vld [vmem:[%s0 + $0x130] sm:$0xff]
    %v70 = vld [vmem:[%s0 + $0x138] sm:$0xff]
    %v71 = vld [vmem:[%s0 + $0x140] sm:$0xff]
    %v72 = vld [vmem:[%s0 + $0x148] sm:$0xff]
    %v73 = vld [vmem:[%s0 + $0x150] sm:$0xff]
    %v74 = vld [vmem:[%s0 + $0x158] sm:$0xff]
    %v75 = vld [vmem:[%s0 + $0x160] sm:$0xff]
    %v76 = vld [vmem:[%s0 + $0x168] sm:$0xff]
    %v77 = vld [vmem:[%s0 + $0x170] sm:$0xff]
    %v78 = vld [vmem:[%s0 + $0x178] sm:$0xff]
    %v79 = vld [vmem:[%s0 + $0x180] sm:$0xff]
    %v80 = vld [vmem:[%s0 + $0x188] sm:$0xff]
    %v81 = vld [vmem:[%s0 + $0x190] sm:$0xff]
    %v82 = vld [vmem:[%s0 + $0x198] sm:$0xff]
    %v83 = vld [vmem:[%s0 + $0x1a0] sm:$0xff]
    %v84 = vld [vmem:[%s0 + $0x1a8] sm:$0xff]
    %v85 = vld [vmem:[%s0 + $0x1b0] sm:$0xff]
    %v86 = vld [vmem:[%s0 + $0x1b8] sm:$0xff]
    %v87 = vld [vmem:[%s0 + $0x1c0] sm:$0xff]
    %v88 = vld [vmem:[%s0 + $0x1c8] sm:$0xff]
    %v89 = vld [vmem:[%s0 + $0x1d0] sm:$0xff]
    %v90 = vld [vmem:[%s0 + $0x1d8] sm:$0xff]
    %v91 = vld [vmem:[%s0 + $0x1e0] sm:$0xff]
    %v92 = vld [vmem:[%s0 + $0x1e8] sm:$0xff]
    %v93 = vld [vmem:[%s0 + $0x1f0] sm:$0xff]
    %v94 = vld [vmem:[%s0 + $0x1f8] sm:$0xff]
    %v95 = vpack.c.bf16 %v32, %v31
    %v96 = vpack.c.bf16 %v34, %v33
    %v97 = vpack.c.bf16 %v36, %v35
    %v98 = vpack.c.bf16 %v38, %v37
    %v99 = vpack.c.bf16 %v40, %v39
    %v100 = vpack.c.bf16 %v42, %v41
    %v101 = vpack.c.bf16 %v44, %v43
    %v102 = vpack.c.bf16 %v46, %v45
    %v103 = vpack.c.bf16 %v48, %v47
    %v104 = vpack.c.bf16 %v50, %v49
    %v105 = vpack.c.bf16 %v52, %v51
    %v106 = vpack.c.bf16 %v54, %v53
    %v107 = vpack.c.bf16 %v56, %v55
    %v108 = vpack.c.bf16 %v58, %v57
    %v109 = vpack.c.bf16 %v60, %v59
    %v110 = vpack.c.bf16 %v62, %v61
    %v111 = vpack.c.bf16 %v64, %v63
    %v112 = vpack.c.bf16 %v66, %v65
    %v113 = vpack.c.bf16 %v68, %v67
    %v114 = vpack.c.bf16 %v70, %v69
    %v115 = vpack.c.bf16 %v72, %v71
    %v116 = vpack.c.bf16 %v74, %v73
    %v117 = vpack.c.bf16 %v76, %v75
    %v118 = vpack.c.bf16 %v78, %v77
    %v119 = vpack.c.bf16 %v80, %v79
    %v120 = vpack.c.bf16 %v82, %v81
    %v121 = vpack.c.bf16 %v84, %v83
    %v122 = vpack.c.bf16 %v86, %v85
    %v123 = vpack.c.bf16 %v88, %v87
    %v124 = vpack.c.bf16 %v90, %v89
    %v125 = vpack.c.bf16 %v92, %v91
    %v126 = vpack.c.bf16 %v94, %v93
    %v127 = vld [vmem:[%s1] sm:$0xf]
    %v128 = vld [vmem:[%s1 + $0x4] sm:$0xf]
    %v129 = vld [vmem:[%s1 + $0x8] sm:$0xf]
    %v130 = vld [vmem:[%s1 + $0xc] sm:$0xf]
    %v132 = vlaneseq
    %v133 = vshrl.u32 %v132, 7
    %v134 = vsub.s32 0, %v133
    %v135 = vrot.slane %v28, %v134
    %v141 = vunpack.c.l.b16 %v127
    %v142 = vunpack.c.l.b16 %v128
    %v143 = vunpack.c.l.b16 %v129
    %v144 = vunpack.c.l.b16 %v130
    %v145 = vpack.c.b16 %v142, %v141
    %v146 = vpack.c.b16 %v144, %v143
    %vm149 = vcmask 261120
    %v151 = vsel %vm149, %v95, 0
    %v154 = vsel %vm149, %v96, 0
    %v157 = vsel %vm149, %v97, 0
    %v160 = vsel %vm149, %v98, 0
    %v163 = vsel %vm149, %v99, 0
    %v166 = vsel %vm149, %v100, 0
    %v169 = vsel %vm149, %v101, 0
    %v172 = vsel %vm149, %v102, 0
    %v175 = vsel %vm149, %v103, 0
    %v178 = vsel %vm149, %v104, 0
    %v181 = vsel %vm149, %v105, 0
    %v184 = vsel %vm149, %v106, 0
    %v187 = vsel %vm149, %v107, 0
    %v190 = vsel %vm149, %v108, 0
    %v193 = vsel %vm149, %v109, 0
    %v196 = vsel %vm149, %v110, 0
    %v199 = vsel %vm149, %v111, 0
    %v202 = vsel %vm149, %v112, 0
    %v205 = vsel %vm149, %v113, 0
    %v208 = vsel %vm149, %v114, 0
    %v211 = vsel %vm149, %v115, 0
    %v214 = vsel %vm149, %v116, 0
    %v217 = vsel %vm149, %v117, 0
    %v220 = vsel %vm149, %v118, 0
    %v223 = vsel %vm149, %v119, 0
    %v226 = vsel %vm149, %v120, 0
    %v229 = vsel %vm149, %v121, 0
    %v232 = vsel %vm149, %v122, 0
    %v235 = vsel %vm149, %v123, 0
    %v238 = vsel %vm149, %v124, 0
    %v241 = vsel %vm149, %v125, 0
    %v244 = vsel %vm149, %v126, 0
    %246 = vmatprep.subr.bf16.mxu0 0
    %247 = vmatpush1.bf16.msra.mxu0 %v145
    %248 = vmatprep.subr.bf16.mxu0 0
    %249 = vmatpush1.bf16.msra.mxu0 %v146
    %250 = vmatprep.subr.bf16.mxu0 0
    %251 = vmatpush1.bf16.msra.mxu0 0
    %252 = vmatprep.subr.bf16.mxu0 0
    %253 = vmatpush1.bf16.msra.mxu0 0
    %254 = vmatprep.subr.bf16.mxu0 0
    %255 = vmatpush1.bf16.msra.mxu0 0
    %256 = vmatprep.subr.bf16.mxu0 0
    %257 = vmatpush1.bf16.msra.mxu0 0
    %258 = vmatprep.subr.bf16.mxu0 0
    %259 = vmatpush1.bf16.msra.mxu0 0
    %260 = vmatprep.subr.bf16.mxu0 0
    %261 = vmatpush1.bf16.msra.mxu0 0
    %262 = vmatprep.subr.bf16.mxu0 0
    %263 = vmatpush1.bf16.msra.mxu0 0
    %264 = vmatprep.subr.bf16.mxu0 0
    %265 = vmatpush1.bf16.msra.mxu0 0
    %266 = vmatprep.subr.bf16.mxu0 0
    %267 = vmatpush1.bf16.msra.mxu0 0
    %268 = vmatprep.subr.bf16.mxu0 0
    %269 = vmatpush1.bf16.msra.mxu0 0
    %270 = vmatprep.subr.bf16.mxu0 0
    %271 = vmatpush1.bf16.msra.mxu0 0
    %272 = vmatprep.subr.bf16.mxu0 0
    %273 = vmatpush1.bf16.msra.mxu0 0
    %274 = vmatprep.subr.bf16.mxu0 0
    %275 = vmatpush1.bf16.msra.mxu0 0
    %276 = vmatprep.subr.bf16.mxu0 0
    %277 = vmatpush1.bf16.msra.mxu0 0
    %278 = vmatprep.mubr.bf16.mxu0 0
    %279 = vmatmul.mubr.bf16.gmra.mrb[0].mxu0 %v151
    %v280 = vpop.f32.mrb[0].mxu0
    %v281 = vadd.f32 %v135, %v280
    %v282 = vpop.f32.mrb[0].mxu0
    %v283 = vpop.f32.mrb[0].mxu0
    %v284 = vadd.f32 %v135, %v283
    %v285 = vpop.f32.mrb[0].mxu0
    %286 = vmatprep.mubr.bf16.mxu0 0
    %287 = vmatmul.mubr.bf16.gmra.mrb[0].mxu0 %v154
    %v288 = vpop.f32.mrb[0].mxu0
    %v289 = vadd.f32 %v135, %v288
    %v290 = vpop.f32.mrb[0].mxu0
    %v291 = vpop.f32.mrb[0].mxu0
    %v292 = vadd.f32 %v135, %v291
    %v293 = vpop.f32.mrb[0].mxu0
    %294 = vmatprep.mubr.bf16.mxu0 0
    %295 = vmatmul.mubr.bf16.gmra.mrb[0].mxu0 %v157
    %v296 = vpop.f32.mrb[0].mxu0
    %v297 = vadd.f32 %v135, %v296
    %v298 = vpop.f32.mrb[0].mxu0
    %v299 = vpop.f32.mrb[0].mxu0
    %v300 = vadd.f32 %v135, %v299
    %v301 = vpop.f32.mrb[0].mxu0
    %302 = vmatprep.mubr.bf16.mxu0 0
    %303 = vmatmul.mubr.bf16.gmra.mrb[0].mxu0 %v160
    %v304 = vpop.f32.mrb[0].mxu0
    %v305 = vadd.f32 %v135, %v304
    %v306 = vpop.f32.mrb[0].mxu0
    %v307 = vpop.f32.mrb[0].mxu0
    %v308 = vadd.f32 %v135, %v307
    %v309 = vpop.f32.mrb[0].mxu0
    %310 = vmatprep.mubr.bf16.mxu0 0
    %311 = vmatmul.mubr.bf16.gmra.mrb[0].mxu0 %v163
    %v312 = vpop.f32.mrb[0].mxu0
    %v313 = vadd.f32 %v135, %v312
    %v314 = vpop.f32.mrb[0].mxu0
    %v315 = vpop.f32.mrb[0].mxu0
    %v316 = vadd.f32 %v135, %v315
    %v317 = vpop.f32.mrb[0].mxu0
    %318 = vmatprep.mubr.bf16.mxu0 0
    %319 = vmatmul.mubr.bf16.gmra.mrb[0].mxu0 %v166
    %v320 = vpop.f32.mrb[0].mxu0
    %v321 = vadd.f32 %v135, %v320
    %v322 = vpop.f32.mrb[0].mxu0
    %v323 = vpop.f32.mrb[0].mxu0
    %v324 = vadd.f32 %v135, %v323
    %v325 = vpop.f32.mrb[0].mxu0
    %326 = vmatprep.mubr.bf16.mxu0 0
    %327 = vmatmul.mubr.bf16.gmra.mrb[0].mxu0 %v169
    %v328 = vpop.f32.mrb[0].mxu0
    %v329 = vadd.f32 %v135, %v328
    %v330 = vpop.f32.mrb[0].mxu0
    %v331 = vpop.f32.mrb[0].mxu0
    %v332 = vadd.f32 %v135, %v331
    %v333 = vpop.f32.mrb[0].mxu0
    %334 = vmatprep.mubr.bf16.mxu0 0
    %335 = vmatmul.mubr.bf16.gmra.mrb[0].mxu0 %v172
    %v336 = vpop.f32.mrb[0].mxu0
    %v337 = vadd.f32 %v135, %v336
    %v338 = vpop.f32.mrb[0].mxu0
    %v339 = vpop.f32.mrb[0].mxu0
    %v340 = vadd.f32 %v135, %v339
    %v341 = vpop.f32.mrb[0].mxu0
    %342 = vmatprep.mubr.bf16.mxu0 0
    %343 = vmatmul.mubr.bf16.gmra.mrb[0].mxu0 %v175
    %v344 = vpop.f32.mrb[0].mxu0
    %v345 = vadd.f32 %v135, %v344
    %v346 = vpop.f32.mrb[0].mxu0
    %v347 = vpop.f32.mrb[0].mxu0
    %v348 = vadd.f32 %v135, %v347
    %v349 = vpop.f32.mrb[0].mxu0
    %350 = vmatprep.mubr.bf16.mxu0 0
    %351 = vmatmul.mubr.bf16.gmra.mrb[0].mxu0 %v178
    %v352 = vpop.f32.mrb[0].mxu0
    %v353 = vadd.f32 %v135, %v352
    %v354 = vpop.f32.mrb[0].mxu0
    %v355 = vpop.f32.mrb[0].mxu0
    %v356 = vadd.f32 %v135, %v355
    %v357 = vpop.f32.mrb[0].mxu0
    %358 = vmatprep.mubr.bf16.mxu0 0
    %359 = vmatmul.mubr.bf16.gmra.mrb[0].mxu0 %v181
    %v360 = vpop.f32.mrb[0].mxu0
    %v361 = vadd.f32 %v135, %v360
    %v362 = vpop.f32.mrb[0].mxu0
    %v363 = vpop.f32.mrb[0].mxu0
    %v364 = vadd.f32 %v135, %v363
    %v365 = vpop.f32.mrb[0].mxu0
    %366 = vmatprep.mubr.bf16.mxu0 0
    %367 = vmatmul.mubr.bf16.gmra.mrb[0].mxu0 %v184
    %v368 = vpop.f32.mrb[0].mxu0
    %v369 = vadd.f32 %v135, %v368
    %v370 = vpop.f32.mrb[0].mxu0
    %v371 = vpop.f32.mrb[0].mxu0
    %v372 = vadd.f32 %v135, %v371
    %v373 = vpop.f32.mrb[0].mxu0
    %374 = vmatprep.mubr.bf16.mxu0 0
    %375 = vmatmul.mubr.bf16.gmra.mrb[0].mxu0 %v187
    %v376 = vpop.f32.mrb[0].mxu0
    %v377 = vadd.f32 %v135, %v376
    %v378 = vpop.f32.mrb[0].mxu0
    %v379 = vpop.f32.mrb[0].mxu0
    %v380 = vadd.f32 %v135, %v379
    %v381 = vpop.f32.mrb[0].mxu0
    %382 = vmatprep.mubr.bf16.mxu0 0
    %383 = vmatmul.mubr.bf16.gmra.mrb[0].mxu0 %v190
    %v384 = vpop.f32.mrb[0].mxu0
    %v385 = vadd.f32 %v135, %v384
    %v386 = vpop.f32.mrb[0].mxu0
    %v387 = vpop.f32.mrb[0].mxu0
    %v388 = vadd.f32 %v135, %v387
    %v389 = vpop.f32.mrb[0].mxu0
    %390 = vmatprep.mubr.bf16.mxu0 0
    %391 = vmatmul.mubr.bf16.gmra.mrb[0].mxu0 %v193
    %v392 = vpop.f32.mrb[0].mxu0
    %v393 = vadd.f32 %v135, %v392
    %v394 = vpop.f32.mrb[0].mxu0
    %v395 = vpop.f32.mrb[0].mxu0
    %v396 = vadd.f32 %v135, %v395
    %v397 = vpop.f32.mrb[0].mxu0
    %398 = vmatprep.mubr.bf16.mxu0 0
    %399 = vmatmul.mubr.bf16.gmra.mrb[0].mxu0 %v196
    %v400 = vpop.f32.mrb[0].mxu0
    %v401 = vadd.f32 %v135, %v400
    %v402 = vpop.f32.mrb[0].mxu0
    %v403 = vpop.f32.mrb[0].mxu0
    %v404 = vadd.f32 %v135, %v403
    %v405 = vpop.f32.mrb[0].mxu0
    %406 = vmatprep.mubr.bf16.mxu0 0
    %407 = vmatmul.mubr.bf16.gmra.mrb[0].mxu0 %v199
    %v408 = vpop.f32.mrb[0].mxu0
    %v409 = vadd.f32 %v135, %v408
    %v410 = vpop.f32.mrb[0].mxu0
    %v411 = vpop.f32.mrb[0].mxu0
    %v412 = vadd.f32 %v135, %v411
    %v413 = vpop.f32.mrb[0].mxu0
    %414 = vmatprep.mubr.bf16.mxu0 0
    %415 = vmatmul.mubr.bf16.gmra.mrb[0].mxu0 %v202
    %v416 = vpop.f32.mrb[0].mxu0
    %v417 = vadd.f32 %v135, %v416
    %v418 = vpop.f32.mrb[0].mxu0
    %v419 = vpop.f32.mrb[0].mxu0
    %v420 = vadd.f32 %v135, %v419
    %v421 = vpop.f32.mrb[0].mxu0
    %422 = vmatprep.mubr.bf16.mxu0 0
    %423 = vmatmul.mubr.bf16.gmra.mrb[0].mxu0 %v205
    %v424 = vpop.f32.mrb[0].mxu0
    %v425 = vadd.f32 %v135, %v424
    %v426 = vpop.f32.mrb[0].mxu0
    %v427 = vpop.f32.mrb[0].mxu0
    %v428 = vadd.f32 %v135, %v427
    %v429 = vpop.f32.mrb[0].mxu0
    %430 = vmatprep.mubr.bf16.mxu0 0
    %431 = vmatmul.mubr.bf16.gmra.mrb[0].mxu0 %v208
    %v432 = vpop.f32.mrb[0].mxu0
    %v433 = vadd.f32 %v135, %v432
    %v434 = vpop.f32.mrb[0].mxu0
    %v435 = vpop.f32.mrb[0].mxu0
    %v436 = vadd.f32 %v135, %v435
    %v437 = vpop.f32.mrb[0].mxu0
    %438 = vmatprep.mubr.bf16.mxu0 0
    %439 = vmatmul.mubr.bf16.gmra.mrb[0].mxu0 %v211
    %v440 = vpop.f32.mrb[0].mxu0
    %v441 = vadd.f32 %v135, %v440
    %v442 = vpop.f32.mrb[0].mxu0
    %v443 = vpop.f32.mrb[0].mxu0
    %v444 = vadd.f32 %v135, %v443
    %v445 = vpop.f32.mrb[0].mxu0
    %446 = vmatprep.mubr.bf16.mxu0 0
    %447 = vmatmul.mubr.bf16.gmra.mrb[0].mxu0 %v214
    %v448 = vpop.f32.mrb[0].mxu0
    %v449 = vadd.f32 %v135, %v448
    %v450 = vpop.f32.mrb[0].mxu0
    %v451 = vpop.f32.mrb[0].mxu0
    %v452 = vadd.f32 %v135, %v451
    %v453 = vpop.f32.mrb[0].mxu0
    %454 = vmatprep.mubr.bf16.mxu0 0
    %455 = vmatmul.mubr.bf16.gmra.mrb[0].mxu0 %v217
    %v456 = vpop.f32.mrb[0].mxu0
    %v457 = vadd.f32 %v135, %v456
    %v458 = vpop.f32.mrb[0].mxu0
    %v459 = vpop.f32.mrb[0].mxu0
    %v460 = vadd.f32 %v135, %v459
    %v461 = vpop.f32.mrb[0].mxu0
    %462 = vmatprep.mubr.bf16.mxu0 0
    %463 = vmatmul.mubr.bf16.gmra.mrb[0].mxu0 %v220
    %v464 = vpop.f32.mrb[0].mxu0
    %v465 = vadd.f32 %v135, %v464
    %v466 = vpop.f32.mrb[0].mxu0
    %v467 = vpop.f32.mrb[0].mxu0
    %v468 = vadd.f32 %v135, %v467
    %v469 = vpop.f32.mrb[0].mxu0
    %470 = vmatprep.mubr.bf16.mxu0 0
    %471 = vmatmul.mubr.bf16.gmra.mrb[0].mxu0 %v223
    %v472 = vpop.f32.mrb[0].mxu0
    %v473 = vadd.f32 %v135, %v472
    %v474 = vpop.f32.mrb[0].mxu0
    %v475 = vpop.f32.mrb[0].mxu0
    %v476 = vadd.f32 %v135, %v475
    %v477 = vpop.f32.mrb[0].mxu0
    %478 = vmatprep.mubr.bf16.mxu0 0
    %479 = vmatmul.mubr.bf16.gmra.mrb[0].mxu0 %v226
    %v480 = vpop.f32.mrb[0].mxu0
    %v481 = vadd.f32 %v135, %v480
    %v482 = vpop.f32.mrb[0].mxu0
    %v483 = vpop.f32.mrb[0].mxu0
    %v484 = vadd.f32 %v135, %v483
    %v485 = vpop.f32.mrb[0].mxu0
    %486 = vmatprep.mubr.bf16.mxu0 0
    %487 = vmatmul.mubr.bf16.gmra.mrb[0].mxu0 %v229
    %v488 = vpop.f32.mrb[0].mxu0
    %v489 = vadd.f32 %v135, %v488
    %v490 = vpop.f32.mrb[0].mxu0
    %v491 = vpop.f32.mrb[0].mxu0
    %v492 = vadd.f32 %v135, %v491
    %v493 = vpop.f32.mrb[0].mxu0
    %494 = vmatprep.mubr.bf16.mxu0 0
    %495 = vmatmul.mubr.bf16.gmra.mrb[0].mxu0 %v232
    %v496 = vpop.f32.mrb[0].mxu0
    %v497 = vadd.f32 %v135, %v496
    %v498 = vpop.f32.mrb[0].mxu0
    %v499 = vpop.f32.mrb[0].mxu0
    %v500 = vadd.f32 %v135, %v499
    %v501 = vpop.f32.mrb[0].mxu0
    %502 = vmatprep.mubr.bf16.mxu0 0
    %503 = vmatmul.mubr.bf16.gmra.mrb[0].mxu0 %v235
    %v504 = vpop.f32.mrb[0].mxu0
    %v505 = vadd.f32 %v135, %v504
    %v506 = vpop.f32.mrb[0].mxu0
    %v507 = vpop.f32.mrb[0].mxu0
    %v508 = vadd.f32 %v135, %v507
    %v509 = vpop.f32.mrb[0].mxu0
    %510 = vmatprep.mubr.bf16.mxu0 0
    %511 = vmatmul.mubr.bf16.gmra.mrb[0].mxu0 %v238
    %v512 = vpop.f32.mrb[0].mxu0
    %v513 = vadd.f32 %v135, %v512
    %v514 = vpop.f32.mrb[0].mxu0
    %v515 = vpop.f32.mrb[0].mxu0
    %v516 = vadd.f32 %v135, %v515
    %v517 = vpop.f32.mrb[0].mxu0
    %518 = vmatprep.mubr.bf16.mxu0 0
    %519 = vmatmul.mubr.bf16.gmra.mrb[0].mxu0 %v241
    %v520 = vpop.f32.mrb[0].mxu0
    %v521 = vadd.f32 %v135, %v520
    %v522 = vpop.f32.mrb[0].mxu0
    %v523 = vpop.f32.mrb[0].mxu0
    %v524 = vadd.f32 %v135, %v523
    %v525 = vpop.f32.mrb[0].mxu0
    %526 = vmatprep.mubr.bf16.mxu0 0
    %527 = vmatmul.mubr.bf16.gmra.mrb[0].mxu0 %v244
    %v528 = vpop.f32.mrb[0].mxu0
    %v529 = vadd.f32 %v135, %v528
    %v530 = vpop.f32.mrb[0].mxu0
    %v531 = vpop.f32.mrb[0].mxu0
    %v532 = vadd.f32 %v135, %v531
    %v533 = vpop.f32.mrb[0].mxu0
    %534 = vdwg.mxu0
    %v535 = vmax.f32 %v281, 0.0
    %v536 = vmax.f32 %v284, 0.0
    %v537 = vmax.f32 %v289, 0.0
    %v538 = vmax.f32 %v292, 0.0
    %v539 = vmax.f32 %v297, 0.0
    %v540 = vmax.f32 %v300, 0.0
    %v541 = vmax.f32 %v305, 0.0
    %v542 = vmax.f32 %v308, 0.0
    %v543 = vmax.f32 %v313, 0.0
    %v544 = vmax.f32 %v316, 0.0
    %v545 = vmax.f32 %v321, 0.0
    %v546 = vmax.f32 %v324, 0.0
    %v547 = vmax.f32 %v329, 0.0
    %v548 = vmax.f32 %v332, 0.0
    %v549 = vmax.f32 %v337, 0.0
    %v550 = vmax.f32 %v340, 0.0
    %v551 = vmax.f32 %v345, 0.0
    %v552 = vmax.f32 %v348, 0.0
    %v553 = vmax.f32 %v353, 0.0
    %v554 = vmax.f32 %v356, 0.0
    %v555 = vmax.f32 %v361, 0.0
    %v556 = vmax.f32 %v364, 0.0
    %v557 = vmax.f32 %v369, 0.0
    %v558 = vmax.f32 %v372, 0.0
    %v559 = vmax.f32 %v377, 0.0
    %v560 = vmax.f32 %v380, 0.0
    %v561 = vmax.f32 %v385, 0.0
    %v562 = vmax.f32 %v388, 0.0
    %v563 = vmax.f32 %v393, 0.0
    %v564 = vmax.f32 %v396, 0.0
    %v565 = vmax.f32 %v401, 0.0
    %v566 = vmax.f32 %v404, 0.0
    %v567 = vmax.f32 %v409, 0.0
    %v568 = vmax.f32 %v412, 0.0
    %v569 = vmax.f32 %v417, 0.0
    %v570 = vmax.f32 %v420, 0.0
    %v571 = vmax.f32 %v425, 0.0
    %v572 = vmax.f32 %v428, 0.0
    %v573 = vmax.f32 %v433, 0.0
    %v574 = vmax.f32 %v436, 0.0
    %v575 = vmax.f32 %v441, 0.0
    %v576 = vmax.f32 %v444, 0.0
    %v577 = vmax.f32 %v449, 0.0
    %v578 = vmax.f32 %v452, 0.0
    %v579 = vmax.f32 %v457, 0.0
    %v580 = vmax.f32 %v460, 0.0
    %v581 = vmax.f32 %v465, 0.0
    %v582 = vmax.f32 %v468, 0.0
    %v583 = vmax.f32 %v473, 0.0
    %v584 = vmax.f32 %v476, 0.0
    %v585 = vmax.f32 %v481, 0.0
    %v586 = vmax.f32 %v484, 0.0
    %v587 = vmax.f32 %v489, 0.0
    %v588 = vmax.f32 %v492, 0.0
    %v589 = vmax.f32 %v497, 0.0
    %v590 = vmax.f32 %v500, 0.0
    %v591 = vmax.f32 %v505, 0.0
    %v592 = vmax.f32 %v508, 0.0
    %v593 = vmax.f32 %v513, 0.0
    %v594 = vmax.f32 %v516, 0.0
    %v595 = vmax.f32 %v521, 0.0
    %v596 = vmax.f32 %v524, 0.0
    %v597 = vmax.f32 %v529, 0.0
    %v598 = vmax.f32 %v532, 0.0
    %v599 = vpack.c.bf16 %v536, %v535
    %v600 = vpack.c.bf16 %v538, %v537
    %v601 = vpack.c.bf16 %v540, %v539
    %v602 = vpack.c.bf16 %v542, %v541
    %v603 = vpack.c.bf16 %v544, %v543
    %v604 = vpack.c.bf16 %v546, %v545
    %v605 = vpack.c.bf16 %v548, %v547
    %v606 = vpack.c.bf16 %v550, %v549
    %v607 = vpack.c.bf16 %v552, %v551
    %v608 = vpack.c.bf16 %v554, %v553
    %v609 = vpack.c.bf16 %v556, %v555
    %v610 = vpack.c.bf16 %v558, %v557
    %v611 = vpack.c.bf16 %v560, %v559
    %v612 = vpack.c.bf16 %v562, %v561
    %v613 = vpack.c.bf16 %v564, %v563
    %v614 = vpack.c.bf16 %v566, %v565
    %v615 = vpack.c.bf16 %v568, %v567
    %v616 = vpack.c.bf16 %v570, %v569
    %v617 = vpack.c.bf16 %v572, %v571
    %v618 = vpack.c.bf16 %v574, %v573
    %v619 = vpack.c.bf16 %v576, %v575
    %v620 = vpack.c.bf16 %v578, %v577
    %v621 = vpack.c.bf16 %v580, %v579
    %v622 = vpack.c.bf16 %v582, %v581
    %v623 = vpack.c.bf16 %v584, %v583
    %v624 = vpack.c.bf16 %v586, %v585
    %v625 = vpack.c.bf16 %v588, %v587
    %v626 = vpack.c.bf16 %v590, %v589
    %v627 = vpack.c.bf16 %v592, %v591
    %v628 = vpack.c.bf16 %v594, %v593
    %v629 = vpack.c.bf16 %v596, %v595
    %v630 = vpack.c.bf16 %v598, %v597
    %v631 = vld [vmem:[%s3] sm:$0xf]
    %v632 = vld [vmem:[%s3 + $0x4] sm:$0xf]
    %v633 = vld [vmem:[%s3 + $0x8] sm:$0xf]
    %v634 = vld [vmem:[%s3 + $0xc] sm:$0xf]
    %v635 = vld [vmem:[%s3 + $0x10] sm:$0xf]
    %v636 = vld [vmem:[%s3 + $0x14] sm:$0xf]
    %v637 = vld [vmem:[%s3 + $0x18] sm:$0xf]
    %v638 = vld [vmem:[%s3 + $0x1c] sm:$0xf]
    %v639 = vld [vmem:[%s3 + $0x20] sm:$0xf]
    %v640 = vld [vmem:[%s3 + $0x24] sm:$0xf]
    %v641 = vld [vmem:[%s3 + $0x28] sm:$0xf]
    %v642 = vld [vmem:[%s3 + $0x2c] sm:$0xf]
    %v643 = vld [vmem:[%s3 + $0x30] sm:$0xf]
    %v644 = vld [vmem:[%s3 + $0x34] sm:$0xf]
    %v645 = vld [vmem:[%s3 + $0x38] sm:$0xf]
    %v646 = vld [vmem:[%s3 + $0x3c] sm:$0xf]
    %v648 = vlaneseq
    %v649 = vshrl.u32 %v648, 7
    %v650 = vsub.s32 0, %v649
    %v651 = vrot.slane %v29, %v650
    %v669 = vunpack.c.l.b16 %v631
    %v670 = vunpack.c.l.b16 %v632
    %v671 = vunpack.c.l.b16 %v633
    %v672 = vunpack.c.l.b16 %v634
    %v673 = vunpack.c.l.b16 %v635
    %v674 = vunpack.c.l.b16 %v636
    %v675 = vunpack.c.l.b16 %v637
    %v676 = vunpack.c.l.b16 %v638
    %v677 = vunpack.c.l.b16 %v639
    %v678 = vunpack.c.l.b16 %v640
    %v679 = vunpack.c.l.b16 %v641
    %v680 = vunpack.c.l.b16 %v642
    %v681 = vunpack.c.l.b16 %v643
    %v682 = vunpack.c.l.b16 %v644
    %v683 = vunpack.c.l.b16 %v645
    %v684 = vunpack.c.l.b16 %v646
    %v685 = vpack.c.b16 %v670, %v669
    %v686 = vpack.c.b16 %v672, %v671
    %v687 = vpack.c.b16 %v674, %v673
    %v688 = vpack.c.b16 %v676, %v675
    %v689 = vpack.c.b16 %v678, %v677
    %v690 = vpack.c.b16 %v680, %v679
    %v691 = vpack.c.b16 %v682, %v681
    %v692 = vpack.c.b16 %v684, %v683
    %701 = vmatprep.subr.bf16.mxu0 0
    %702 = vmatpush1.bf16.msra.mxu0 %v685
    %703 = vmatprep.subr.bf16.mxu0 0
    %704 = vmatpush1.bf16.msra.mxu0 %v686
    %705 = vmatprep.subr.bf16.mxu0 0
    %706 = vmatpush1.bf16.msra.mxu0 %v687
    %707 = vmatprep.subr.bf16.mxu0 0
    %708 = vmatpush1.bf16.msra.mxu0 %v688
    %709 = vmatprep.subr.bf16.mxu0 0
    %710 = vmatpush1.bf16.msra.mxu0 %v689
    %711 = vmatprep.subr.bf16.mxu0 0
    %712 = vmatpush1.bf16.msra.mxu0 %v690
    %713 = vmatprep.subr.bf16.mxu0 0
    %714 = vmatpush1.bf16.msra.mxu0 %v691
    %715 = vmatprep.subr.bf16.mxu0 0
    %716 = vmatpush1.bf16.msra.mxu0 %v692
    %717 = vmatprep.subr.bf16.mxu0 0
    %718 = vmatpush1.bf16.msra.mxu0 0
    %719 = vmatprep.subr.bf16.mxu0 0
    %720 = vmatpush1.bf16.msra.mxu0 0
    %721 = vmatprep.subr.bf16.mxu0 0
    %722 = vmatpush1.bf16.msra.mxu0 0
    %723 = vmatprep.subr.bf16.mxu0 0
    %724 = vmatpush1.bf16.msra.mxu0 0
    %725 = vmatprep.subr.bf16.mxu0 0
    %726 = vmatpush1.bf16.msra.mxu0 0
    %727 = vmatprep.subr.bf16.mxu0 0
    %728 = vmatpush1.bf16.msra.mxu0 0
    %729 = vmatprep.subr.bf16.mxu0 0
    %730 = vmatpush1.bf16.msra.mxu0 0
    %731 = vmatprep.subr.bf16.mxu0 0
    %732 = vmatpush1.bf16.msra.mxu0 0
    %733 = vmatprep.mubr.bf16.mxu0 0
    %734 = vmatmul.mubr.bf16.gmra.mrb[0].mxu0 %v599
    %v735 = vpop.f32.mrb[0].mxu0
    %v736 = vadd.f32 %v651, %v735
    %v737 = vpop.f32.mrb[0].mxu0
    %v738 = vpop.f32.mrb[0].mxu0
    %v739 = vadd.f32 %v651, %v738
    %v740 = vpop.f32.mrb[0].mxu0
    %741 = vmatprep.mubr.bf16.mxu0 0
    %742 = vmatmul.mubr.bf16.gmra.mrb[0].mxu0 %v600
    %v743 = vpop.f32.mrb[0].mxu0
    %v744 = vadd.f32 %v651, %v743
    %v745 = vpop.f32.mrb[0].mxu0
    %v746 = vpop.f32.mrb[0].mxu0
    %v747 = vadd.f32 %v651, %v746
    %v748 = vpop.f32.mrb[0].mxu0
    %749 = vmatprep.mubr.bf16.mxu0 0
    %750 = vmatmul.mubr.bf16.gmra.mrb[0].mxu0 %v601
    %v751 = vpop.f32.mrb[0].mxu0
    %v752 = vadd.f32 %v651, %v751
    %v753 = vpop.f32.mrb[0].mxu0
    %v754 = vpop.f32.mrb[0].mxu0
    %v755 = vadd.f32 %v651, %v754
    %v756 = vpop.f32.mrb[0].mxu0
    %757 = vmatprep.mubr.bf16.mxu0 0
    %758 = vmatmul.mubr.bf16.gmra.mrb[0].mxu0 %v602
    %v759 = vpop.f32.mrb[0].mxu0
    %v760 = vadd.f32 %v651, %v759
    %v761 = vpop.f32.mrb[0].mxu0
    %v762 = vpop.f32.mrb[0].mxu0
    %v763 = vadd.f32 %v651, %v762
    %v764 = vpop.f32.mrb[0].mxu0
    %765 = vmatprep.mubr.bf16.mxu0 0
    %766 = vmatmul.mubr.bf16.gmra.mrb[0].mxu0 %v603
    %v767 = vpop.f32.mrb[0].mxu0
    %v768 = vadd.f32 %v651, %v767
    %v769 = vpop.f32.mrb[0].mxu0
    %v770 = vpop.f32.mrb[0].mxu0
    %v771 = vadd.f32 %v651, %v770
    %v772 = vpop.f32.mrb[0].mxu0
    %773 = vmatprep.mubr.bf16.mxu0 0
    %774 = vmatmul.mubr.bf16.gmra.mrb[0].mxu0 %v604
    %v775 = vpop.f32.mrb[0].mxu0
    %v776 = vadd.f32 %v651, %v775
    %v777 = vpop.f32.mrb[0].mxu0
    %v778 = vpop.f32.mrb[0].mxu0
    %v779 = vadd.f32 %v651, %v778
    %v780 = vpop.f32.mrb[0].mxu0
    %781 = vmatprep.mubr.bf16.mxu0 0
    %782 = vmatmul.mubr.bf16.gmra.mrb[0].mxu0 %v605
    %v783 = vpop.f32.mrb[0].mxu0
    %v784 = vadd.f32 %v651, %v783
    %v785 = vpop.f32.mrb[0].mxu0
    %v786 = vpop.f32.mrb[0].mxu0
    %v787 = vadd.f32 %v651, %v786
    %v788 = vpop.f32.mrb[0].mxu0
    %789 = vmatprep.mubr.bf16.mxu0 0
    %790 = vmatmul.mubr.bf16.gmra.mrb[0].mxu0 %v606
    %v791 = vpop.f32.mrb[0].mxu0
    %v792 = vadd.f32 %v651, %v791
    %v793 = vpop.f32.mrb[0].mxu0
    %v794 = vpop.f32.mrb[0].mxu0
    %v795 = vadd.f32 %v651, %v794
    %v796 = vpop.f32.mrb[0].mxu0
    %797 = vmatprep.mubr.bf16.mxu0 0
    %798 = vmatmul.mubr.bf16.gmra.mrb[0].mxu0 %v607
    %v799 = vpop.f32.mrb[0].mxu0
    %v800 = vadd.f32 %v651, %v799
    %v801 = vpop.f32.mrb[0].mxu0
    %v802 = vpop.f32.mrb[0].mxu0
    %v803 = vadd.f32 %v651, %v802
    %v804 = vpop.f32.mrb[0].mxu0
    %805 = vmatprep.mubr.bf16.mxu0 0
    %806 = vmatmul.mubr.bf16.gmra.mrb[0].mxu0 %v608
    %v807 = vpop.f32.mrb[0].mxu0
    %v808 = vadd.f32 %v651, %v807
    %v809 = vpop.f32.mrb[0].mxu0
    %v810 = vpop.f32.mrb[0].mxu0
    %v811 = vadd.f32 %v651, %v810
    %v812 = vpop.f32.mrb[0].mxu0
    %813 = vmatprep.mubr.bf16.mxu0 0
    %814 = vmatmul.mubr.bf16.gmra.mrb[0].mxu0 %v609
    %v815 = vpop.f32.mrb[0].mxu0
    %v816 = vadd.f32 %v651, %v815
    %v817 = vpop.f32.mrb[0].mxu0
    %v818 = vpop.f32.mrb[0].mxu0
    %v819 = vadd.f32 %v651, %v818
    %v820 = vpop.f32.mrb[0].mxu0
    %821 = vmatprep.mubr.bf16.mxu0 0
    %822 = vmatmul.mubr.bf16.gmra.mrb[0].mxu0 %v610
    %v823 = vpop.f32.mrb[0].mxu0
    %v824 = vadd.f32 %v651, %v823
    %v825 = vpop.f32.mrb[0].mxu0
    %v826 = vpop.f32.mrb[0].mxu0
    %v827 = vadd.f32 %v651, %v826
    %v828 = vpop.f32.mrb[0].mxu0
    %829 = vmatprep.mubr.bf16.mxu0 0
    %830 = vmatmul.mubr.bf16.gmra.mrb[0].mxu0 %v611
    %v831 = vpop.f32.mrb[0].mxu0
    %v832 = vadd.f32 %v651, %v831
    %v833 = vpop.f32.mrb[0].mxu0
    %v834 = vpop.f32.mrb[0].mxu0
    %v835 = vadd.f32 %v651, %v834
    %v836 = vpop.f32.mrb[0].mxu0
    %837 = vmatprep.mubr.bf16.mxu0 0
    %838 = vmatmul.mubr.bf16.gmra.mrb[0].mxu0 %v612
    %v839 = vpop.f32.mrb[0].mxu0
    %v840 = vadd.f32 %v651, %v839
    %v841 = vpop.f32.mrb[0].mxu0
    %v842 = vpop.f32.mrb[0].mxu0
    %v843 = vadd.f32 %v651, %v842
    %v844 = vpop.f32.mrb[0].mxu0
    %845 = vmatprep.mubr.bf16.mxu0 0
    %846 = vmatmul.mubr.bf16.gmra.mrb[0].mxu0 %v613
    %v847 = vpop.f32.mrb[0].mxu0
    %v848 = vadd.f32 %v651, %v847
    %v849 = vpop.f32.mrb[0].mxu0
    %v850 = vpop.f32.mrb[0].mxu0
    %v851 = vadd.f32 %v651, %v850
    %v852 = vpop.f32.mrb[0].mxu0
    %853 = vmatprep.mubr.bf16.mxu0 0
    %854 = vmatmul.mubr.bf16.gmra.mrb[0].mxu0 %v614
    %v855 = vpop.f32.mrb[0].mxu0
    %v856 = vadd.f32 %v651, %v855
    %v857 = vpop.f32.mrb[0].mxu0
    %v858 = vpop.f32.mrb[0].mxu0
    %v859 = vadd.f32 %v651, %v858
    %v860 = vpop.f32.mrb[0].mxu0
    %861 = vmatprep.mubr.bf16.mxu0 0
    %862 = vmatmul.mubr.bf16.gmra.mrb[0].mxu0 %v615
    %v863 = vpop.f32.mrb[0].mxu0
    %v864 = vadd.f32 %v651, %v863
    %v865 = vpop.f32.mrb[0].mxu0
    %v866 = vpop.f32.mrb[0].mxu0
    %v867 = vadd.f32 %v651, %v866
    %v868 = vpop.f32.mrb[0].mxu0
    %869 = vmatprep.mubr.bf16.mxu0 0
    %870 = vmatmul.mubr.bf16.gmra.mrb[0].mxu0 %v616
    %v871 = vpop.f32.mrb[0].mxu0
    %v872 = vadd.f32 %v651, %v871
    %v873 = vpop.f32.mrb[0].mxu0
    %v874 = vpop.f32.mrb[0].mxu0
    %v875 = vadd.f32 %v651, %v874
    %v876 = vpop.f32.mrb[0].mxu0
    %877 = vmatprep.mubr.bf16.mxu0 0
    %878 = vmatmul.mubr.bf16.gmra.mrb[0].mxu0 %v617
    %v879 = vpop.f32.mrb[0].mxu0
    %v880 = vadd.f32 %v651, %v879
    %v881 = vpop.f32.mrb[0].mxu0
    %v882 = vpop.f32.mrb[0].mxu0
    %v883 = vadd.f32 %v651, %v882
    %v884 = vpop.f32.mrb[0].mxu0
    %885 = vmatprep.mubr.bf16.mxu0 0
    %886 = vmatmul.mubr.bf16.gmra.mrb[0].mxu0 %v618
    %v887 = vpop.f32.mrb[0].mxu0
    %v888 = vadd.f32 %v651, %v887
    %v889 = vpop.f32.mrb[0].mxu0
    %v890 = vpop.f32.mrb[0].mxu0
    %v891 = vadd.f32 %v651, %v890
    %v892 = vpop.f32.mrb[0].mxu0
    %893 = vmatprep.mubr.bf16.mxu0 0
    %894 = vmatmul.mubr.bf16.gmra.mrb[0].mxu0 %v619
    %v895 = vpop.f32.mrb[0].mxu0
    %v896 = vadd.f32 %v651, %v895
    %v897 = vpop.f32.mrb[0].mxu0
    %v898 = vpop.f32.mrb[0].mxu0
    %v899 = vadd.f32 %v651, %v898
    %v900 = vpop.f32.mrb[0].mxu0
    %901 = vmatprep.mubr.bf16.mxu0 0
    %902 = vmatmul.mubr.bf16.gmra.mrb[0].mxu0 %v620
    %v903 = vpop.f32.mrb[0].mxu0
    %v904 = vadd.f32 %v651, %v903
    %v905 = vpop.f32.mrb[0].mxu0
    %v906 = vpop.f32.mrb[0].mxu0
    %v907 = vadd.f32 %v651, %v906
    %v908 = vpop.f32.mrb[0].mxu0
    %909 = vmatprep.mubr.bf16.mxu0 0
    %910 = vmatmul.mubr.bf16.gmra.mrb[0].mxu0 %v621
    %v911 = vpop.f32.mrb[0].mxu0
    %v912 = vadd.f32 %v651, %v911
    %v913 = vpop.f32.mrb[0].mxu0
    %v914 = vpop.f32.mrb[0].mxu0
    %v915 = vadd.f32 %v651, %v914
    %v916 = vpop.f32.mrb[0].mxu0
    %917 = vmatprep.mubr.bf16.mxu0 0
    %918 = vmatmul.mubr.bf16.gmra.mrb[0].mxu0 %v622
    %v919 = vpop.f32.mrb[0].mxu0
    %v920 = vadd.f32 %v651, %v919
    %v921 = vpop.f32.mrb[0].mxu0
    %v922 = vpop.f32.mrb[0].mxu0
    %v923 = vadd.f32 %v651, %v922
    %v924 = vpop.f32.mrb[0].mxu0
    %925 = vmatprep.mubr.bf16.mxu0 0
    %926 = vmatmul.mubr.bf16.gmra.mrb[0].mxu0 %v623
    %v927 = vpop.f32.mrb[0].mxu0
    %v928 = vadd.f32 %v651, %v927
    %v929 = vpop.f32.mrb[0].mxu0
    %v930 = vpop.f32.mrb[0].mxu0
    %v931 = vadd.f32 %v651, %v930
    %v932 = vpop.f32.mrb[0].mxu0
    %933 = vmatprep.mubr.bf16.mxu0 0
    %934 = vmatmul.mubr.bf16.gmra.mrb[0].mxu0 %v624
    %v935 = vpop.f32.mrb[0].mxu0
    %v936 = vadd.f32 %v651, %v935
    %v937 = vpop.f32.mrb[0].mxu0
    %v938 = vpop.f32.mrb[0].mxu0
    %v939 = vadd.f32 %v651, %v938
    %v940 = vpop.f32.mrb[0].mxu0
    %941 = vmatprep.mubr.bf16.mxu0 0
    %942 = vmatmul.mubr.bf16.gmra.mrb[0].mxu0 %v625
    %v943 = vpop.f32.mrb[0].mxu0
    %v944 = vadd.f32 %v651, %v943
    %v945 = vpop.f32.mrb[0].mxu0
    %v946 = vpop.f32.mrb[0].mxu0
    %v947 = vadd.f32 %v651, %v946
    %v948 = vpop.f32.mrb[0].mxu0
    %949 = vmatprep.mubr.bf16.mxu0 0
    %950 = vmatmul.mubr.bf16.gmra.mrb[0].mxu0 %v626
    %v951 = vpop.f32.mrb[0].mxu0
    %v952 = vadd.f32 %v651, %v951
    %v953 = vpop.f32.mrb[0].mxu0
    %v954 = vpop.f32.mrb[0].mxu0
    %v955 = vadd.f32 %v651, %v954
    %v956 = vpop.f32.mrb[0].mxu0
    %957 = vmatprep.mubr.bf16.mxu0 0
    %958 = vmatmul.mubr.bf16.gmra.mrb[0].mxu0 %v627
    %v959 = vpop.f32.mrb[0].mxu0
    %v960 = vadd.f32 %v651, %v959
    %v961 = vpop.f32.mrb[0].mxu0
    %v962 = vpop.f32.mrb[0].mxu0
    %v963 = vadd.f32 %v651, %v962
    %v964 = vpop.f32.mrb[0].mxu0
    %965 = vmatprep.mubr.bf16.mxu0 0
    %966 = vmatmul.mubr.bf16.gmra.mrb[0].mxu0 %v628
    %v967 = vpop.f32.mrb[0].mxu0
    %v968 = vadd.f32 %v651, %v967
    %v969 = vpop.f32.mrb[0].mxu0
    %v970 = vpop.f32.mrb[0].mxu0
    %v971 = vadd.f32 %v651, %v970
    %v972 = vpop.f32.mrb[0].mxu0
    %973 = vmatprep.mubr.bf16.mxu0 0
    %974 = vmatmul.mubr.bf16.gmra.mrb[0].mxu0 %v629
    %v975 = vpop.f32.mrb[0].mxu0
    %v976 = vadd.f32 %v651, %v975
    %v977 = vpop.f32.mrb[0].mxu0
    %v978 = vpop.f32.mrb[0].mxu0
    %v979 = vadd.f32 %v651, %v978
    %v980 = vpop.f32.mrb[0].mxu0
    %981 = vmatprep.mubr.bf16.mxu0 0
    %982 = vmatmul.mubr.bf16.gmra.mrb[0].mxu0 %v630
    %v983 = vpop.f32.mrb[0].mxu0
    %v984 = vadd.f32 %v651, %v983
    %v985 = vpop.f32.mrb[0].mxu0
    %v986 = vpop.f32.mrb[0].mxu0
    %v987 = vadd.f32 %v651, %v986
    %v988 = vpop.f32.mrb[0].mxu0
    %989 = vdwg.mxu0
    %v990 = vmax.f32 %v736, 0.0
    %v991 = vmax.f32 %v739, 0.0
    %v992 = vmax.f32 %v744, 0.0
    %v993 = vmax.f32 %v747, 0.0
    %v994 = vmax.f32 %v752, 0.0
    %v995 = vmax.f32 %v755, 0.0
    %v996 = vmax.f32 %v760, 0.0
    %v997 = vmax.f32 %v763, 0.0
    %v998 = vmax.f32 %v768, 0.0
    %v999 = vmax.f32 %v771, 0.0
    %v1000 = vmax.f32 %v776, 0.0
    %v1001 = vmax.f32 %v779, 0.0
    %v1002 = vmax.f32 %v784, 0.0
    %v1003 = vmax.f32 %v787, 0.0
    %v1004 = vmax.f32 %v792, 0.0
    %v1005 = vmax.f32 %v795, 0.0
    %v1006 = vmax.f32 %v800, 0.0
    %v1007 = vmax.f32 %v803, 0.0
    %v1008 = vmax.f32 %v808, 0.0
    %v1009 = vmax.f32 %v811, 0.0
    %v1010 = vmax.f32 %v816, 0.0
    %v1011 = vmax.f32 %v819, 0.0
    %v1012 = vmax.f32 %v824, 0.0
    %v1013 = vmax.f32 %v827, 0.0
    %v1014 = vmax.f32 %v832, 0.0
    %v1015 = vmax.f32 %v835, 0.0
    %v1016 = vmax.f32 %v840, 0.0
    %v1017 = vmax.f32 %v843, 0.0
    %v1018 = vmax.f32 %v848, 0.0
    %v1019 = vmax.f32 %v851, 0.0
    %v1020 = vmax.f32 %v856, 0.0
    %v1021 = vmax.f32 %v859, 0.0
    %v1022 = vmax.f32 %v864, 0.0
    %v1023 = vmax.f32 %v867, 0.0
    %v1024 = vmax.f32 %v872, 0.0
    %v1025 = vmax.f32 %v875, 0.0
    %v1026 = vmax.f32 %v880, 0.0
    %v1027 = vmax.f32 %v883, 0.0
    %v1028 = vmax.f32 %v888, 0.0
    %v1029 = vmax.f32 %v891, 0.0
    %v1030 = vmax.f32 %v896, 0.0
    %v1031 = vmax.f32 %v899, 0.0
    %v1032 = vmax.f32 %v904, 0.0
    %v1033 = vmax.f32 %v907, 0.0
    %v1034 = vmax.f32 %v912, 0.0
    %v1035 = vmax.f32 %v915, 0.0
    %v1036 = vmax.f32 %v920, 0.0
    %v1037 = vmax.f32 %v923, 0.0
    %v1038 = vmax.f32 %v928, 0.0
    %v1039 = vmax.f32 %v931, 0.0
    %v1040 = vmax.f32 %v936, 0.0
    %v1041 = vmax.f32 %v939, 0.0
    %v1042 = vmax.f32 %v944, 0.0
    %v1043 = vmax.f32 %v947, 0.0
    %v1044 = vmax.f32 %v952, 0.0
    %v1045 = vmax.f32 %v955, 0.0
    %v1046 = vmax.f32 %v960, 0.0
    %v1047 = vmax.f32 %v963, 0.0
    %v1048 = vmax.f32 %v968, 0.0
    %v1049 = vmax.f32 %v971, 0.0
    %v1050 = vmax.f32 %v976, 0.0
    %v1051 = vmax.f32 %v979, 0.0
    %v1052 = vmax.f32 %v984, 0.0
    %v1053 = vmax.f32 %v987, 0.0
    %v1054 = vpack.c.bf16 %v991, %v990
    %v1055 = vpack.c.bf16 %v993, %v992
    %v1056 = vpack.c.bf16 %v995, %v994
    %v1057 = vpack.c.bf16 %v997, %v996
    %v1058 = vpack.c.bf16 %v999, %v998
    %v1059 = vpack.c.bf16 %v1001, %v1000
    %v1060 = vpack.c.bf16 %v1003, %v1002
    %v1061 = vpack.c.bf16 %v1005, %v1004
    %v1062 = vpack.c.bf16 %v1007, %v1006
    %v1063 = vpack.c.bf16 %v1009, %v1008
    %v1064 = vpack.c.bf16 %v1011, %v1010
    %v1065 = vpack.c.bf16 %v1013, %v1012
    %v1066 = vpack.c.bf16 %v1015, %v1014
    %v1067 = vpack.c.bf16 %v1017, %v1016
    %v1068 = vpack.c.bf16 %v1019, %v1018
    %v1069 = vpack.c.bf16 %v1021, %v1020
    %v1070 = vpack.c.bf16 %v1023, %v1022
    %v1071 = vpack.c.bf16 %v1025, %v1024
    %v1072 = vpack.c.bf16 %v1027, %v1026
    %v1073 = vpack.c.bf16 %v1029, %v1028
    %v1074 = vpack.c.bf16 %v1031, %v1030
    %v1075 = vpack.c.bf16 %v1033, %v1032
    %v1076 = vpack.c.bf16 %v1035, %v1034
    %v1077 = vpack.c.bf16 %v1037, %v1036
    %v1078 = vpack.c.bf16 %v1039, %v1038
    %v1079 = vpack.c.bf16 %v1041, %v1040
    %v1080 = vpack.c.bf16 %v1043, %v1042
    %v1081 = vpack.c.bf16 %v1045, %v1044
    %v1082 = vpack.c.bf16 %v1047, %v1046
    %v1083 = vpack.c.bf16 %v1049, %v1048
    %v1084 = vpack.c.bf16 %v1051, %v1050
    %v1085 = vpack.c.bf16 %v1053, %v1052
    %v1086 = vld [vmem:[%s5] sm:$0xf]
    %v1087 = vld [vmem:[%s5 + $0x4] sm:$0xf]
    %v1088 = vld [vmem:[%s5 + $0x8] sm:$0xf]
    %v1089 = vld [vmem:[%s5 + $0xc] sm:$0xf]
    %v1090 = vld [vmem:[%s5 + $0x10] sm:$0xf]
    %v1091 = vld [vmem:[%s5 + $0x14] sm:$0xf]
    %v1092 = vld [vmem:[%s5 + $0x18] sm:$0xf]
    %v1093 = vld [vmem:[%s5 + $0x1c] sm:$0xf]
    %v1094 = vld [vmem:[%s5 + $0x20] sm:$0xf]
    %v1095 = vld [vmem:[%s5 + $0x24] sm:$0xf]
    %v1096 = vld [vmem:[%s5 + $0x28] sm:$0xf]
    %v1097 = vld [vmem:[%s5 + $0x2c] sm:$0xf]
    %v1098 = vld [vmem:[%s5 + $0x30] sm:$0xf]
    %v1099 = vld [vmem:[%s5 + $0x34] sm:$0xf]
    %v1100 = vld [vmem:[%s5 + $0x38] sm:$0xf]
    %v1101 = vld [vmem:[%s5 + $0x3c] sm:$0xf]
    %v1103 = vlaneseq
    %v1104 = vshrl.u32 %v1103, 7
    %v1105 = vsub.s32 0, %v1104
    %v1106 = vrot.slane %v30, %v1105
    %v1124 = vunpack.c.l.b16 %v1086
    %v1125 = vunpack.c.l.b16 %v1087
    %v1126 = vunpack.c.l.b16 %v1088
    %v1127 = vunpack.c.l.b16 %v1089
    %v1128 = vunpack.c.l.b16 %v1090
    %v1129 = vunpack.c.l.b16 %v1091
    %v1130 = vunpack.c.l.b16 %v1092
    %v1131 = vunpack.c.l.b16 %v1093
    %v1132 = vunpack.c.l.b16 %v1094
    %v1133 = vunpack.c.l.b16 %v1095
    %v1134 = vunpack.c.l.b16 %v1096
    %v1135 = vunpack.c.l.b16 %v1097
    %v1136 = vunpack.c.l.b16 %v1098
    %v1137 = vunpack.c.l.b16 %v1099
    %v1138 = vunpack.c.l.b16 %v1100
    %v1139 = vunpack.c.l.b16 %v1101
    %v1140 = vpack.c.b16 %v1125, %v1124
    %v1141 = vpack.c.b16 %v1127, %v1126
    %v1142 = vpack.c.b16 %v1129, %v1128
    %v1143 = vpack.c.b16 %v1131, %v1130
    %v1144 = vpack.c.b16 %v1133, %v1132
    %v1145 = vpack.c.b16 %v1135, %v1134
    %v1146 = vpack.c.b16 %v1137, %v1136
    %v1147 = vpack.c.b16 %v1139, %v1138
    %1156 = vmatprep.subr.bf16.mxu0 0
    %1157 = vmatpush1.bf16.msra.mxu0 %v1140
    %1158 = vmatprep.subr.bf16.mxu0 0
    %1159 = vmatpush1.bf16.msra.mxu0 %v1141
    %1160 = vmatprep.subr.bf16.mxu0 0
    %1161 = vmatpush1.bf16.msra.mxu0 %v1142
    %1162 = vmatprep.subr.bf16.mxu0 0
    %1163 = vmatpush1.bf16.msra.mxu0 %v1143
    %1164 = vmatprep.subr.bf16.mxu0 0
    %1165 = vmatpush1.bf16.msra.mxu0 %v1144
    %1166 = vmatprep.subr.bf16.mxu0 0
    %1167 = vmatpush1.bf16.msra.mxu0 %v1145
    %1168 = vmatprep.subr.bf16.mxu0 0
    %1169 = vmatpush1.bf16.msra.mxu0 %v1146
    %1170 = vmatprep.subr.bf16.mxu0 0
    %1171 = vmatpush1.bf16.msra.mxu0 %v1147
    %1172 = vmatprep.subr.bf16.mxu0 0
    %1173 = vmatpush1.bf16.msra.mxu0 0
    %1174 = vmatprep.subr.bf16.mxu0 0
    %1175 = vmatpush1.bf16.msra.mxu0 0
    %1176 = vmatprep.subr.bf16.mxu0 0
    %1177 = vmatpush1.bf16.msra.mxu0 0
    %1178 = vmatprep.subr.bf16.mxu0 0
    %1179 = vmatpush1.bf16.msra.mxu0 0
    %1180 = vmatprep.subr.bf16.mxu0 0
    %1181 = vmatpush1.bf16.msra.mxu0 0
    %1182 = vmatprep.subr.bf16.mxu0 0
    %1183 = vmatpush1.bf16.msra.mxu0 0
    %1184 = vmatprep.subr.bf16.mxu0 0
    %1185 = vmatpush1.bf16.msra.mxu0 0
    %1186 = vmatprep.subr.bf16.mxu0 0
    %1187 = vmatpush1.bf16.msra.mxu0 0
    %1188 = vmatprep.mubr.bf16.mxu0 0
    %1189 = vmatmul.mubr.bf16.gmra.mrb[0].mxu0 %v1054
    %v1190 = vpop.f32.mrb[0].mxu0
    %v1191 = vadd.f32 %v1106, %v1190
    %v1192 = vpop.f32.mrb[0].mxu0
    %v1193 = vpop.f32.mrb[0].mxu0
    %v1194 = vadd.f32 %v1106, %v1193
    %v1195 = vpop.f32.mrb[0].mxu0
    %1196 = vmatprep.mubr.bf16.mxu0 0
    %1197 = vmatmul.mubr.bf16.gmra.mrb[0].mxu0 %v1055
    %v1198 = vpop.f32.mrb[0].mxu0
    %v1199 = vadd.f32 %v1106, %v1198
    %v1200 = vpop.f32.mrb[0].mxu0
    %v1201 = vpop.f32.mrb[0].mxu0
    %v1202 = vadd.f32 %v1106, %v1201
    %v1203 = vpop.f32.mrb[0].mxu0
    %1204 = vmatprep.mubr.bf16.mxu0 0
    %1205 = vmatmul.mubr.bf16.gmra.mrb[0].mxu0 %v1056
    %v1206 = vpop.f32.mrb[0].mxu0
    %v1207 = vadd.f32 %v1106, %v1206
    %v1208 = vpop.f32.mrb[0].mxu0
    %v1209 = vpop.f32.mrb[0].mxu0
    %v1210 = vadd.f32 %v1106, %v1209
    %v1211 = vpop.f32.mrb[0].mxu0
    %1212 = vmatprep.mubr.bf16.mxu0 0
    %1213 = vmatmul.mubr.bf16.gmra.mrb[0].mxu0 %v1057
    %v1214 = vpop.f32.mrb[0].mxu0
    %v1215 = vadd.f32 %v1106, %v1214
    %v1216 = vpop.f32.mrb[0].mxu0
    %v1217 = vpop.f32.mrb[0].mxu0
    %v1218 = vadd.f32 %v1106, %v1217
    %v1219 = vpop.f32.mrb[0].mxu0
    %1220 = vmatprep.mubr.bf16.mxu0 0
    %1221 = vmatmul.mubr.bf16.gmra.mrb[0].mxu0 %v1058
    %v1222 = vpop.f32.mrb[0].mxu0
    %v1223 = vadd.f32 %v1106, %v1222
    %v1224 = vpop.f32.mrb[0].mxu0
    %v1225 = vpop.f32.mrb[0].mxu0
    %v1226 = vadd.f32 %v1106, %v1225
    %v1227 = vpop.f32.mrb[0].mxu0
    %1228 = vmatprep.mubr.bf16.mxu0 0
    %1229 = vmatmul.mubr.bf16.gmra.mrb[0].mxu0 %v1059
    %v1230 = vpop.f32.mrb[0].mxu0
    %v1231 = vadd.f32 %v1106, %v1230
    %v1232 = vpop.f32.mrb[0].mxu0
    %v1233 = vpop.f32.mrb[0].mxu0
    %v1234 = vadd.f32 %v1106, %v1233
    %v1235 = vpop.f32.mrb[0].mxu0
    %1236 = vmatprep.mubr.bf16.mxu0 0
    %1237 = vmatmul.mubr.bf16.gmra.mrb[0].mxu0 %v1060
    %v1238 = vpop.f32.mrb[0].mxu0
    %v1239 = vadd.f32 %v1106, %v1238
    %v1240 = vpop.f32.mrb[0].mxu0
    %v1241 = vpop.f32.mrb[0].mxu0
    %v1242 = vadd.f32 %v1106, %v1241
    %v1243 = vpop.f32.mrb[0].mxu0
    %1244 = vmatprep.mubr.bf16.mxu0 0
    %1245 = vmatmul.mubr.bf16.gmra.mrb[0].mxu0 %v1061
    %v1246 = vpop.f32.mrb[0].mxu0
    %v1247 = vadd.f32 %v1106, %v1246
    %v1248 = vpop.f32.mrb[0].mxu0
    %v1249 = vpop.f32.mrb[0].mxu0
    %v1250 = vadd.f32 %v1106, %v1249
    %v1251 = vpop.f32.mrb[0].mxu0
    %1252 = vmatprep.mubr.bf16.mxu0 0
    %1253 = vmatmul.mubr.bf16.gmra.mrb[0].mxu0 %v1062
    %v1254 = vpop.f32.mrb[0].mxu0
    %v1255 = vadd.f32 %v1106, %v1254
    %v1256 = vpop.f32.mrb[0].mxu0
    %v1257 = vpop.f32.mrb[0].mxu0
    %v1258 = vadd.f32 %v1106, %v1257
    %v1259 = vpop.f32.mrb[0].mxu0
    %1260 = vmatprep.mubr.bf16.mxu0 0
    %1261 = vmatmul.mubr.bf16.gmra.mrb[0].mxu0 %v1063
    %v1262 = vpop.f32.mrb[0].mxu0
    %v1263 = vadd.f32 %v1106, %v1262
    %v1264 = vpop.f32.mrb[0].mxu0
    %v1265 = vpop.f32.mrb[0].mxu0
    %v1266 = vadd.f32 %v1106, %v1265
    %v1267 = vpop.f32.mrb[0].mxu0
    %1268 = vmatprep.mubr.bf16.mxu0 0
    %1269 = vmatmul.mubr.bf16.gmra.mrb[0].mxu0 %v1064
    %v1270 = vpop.f32.mrb[0].mxu0
    %v1271 = vadd.f32 %v1106, %v1270
    %v1272 = vpop.f32.mrb[0].mxu0
    %v1273 = vpop.f32.mrb[0].mxu0
    %v1274 = vadd.f32 %v1106, %v1273
    %v1275 = vpop.f32.mrb[0].mxu0
    %1276 = vmatprep.mubr.bf16.mxu0 0
    %1277 = vmatmul.mubr.bf16.gmra.mrb[0].mxu0 %v1065
    %v1278 = vpop.f32.mrb[0].mxu0
    %v1279 = vadd.f32 %v1106, %v1278
    %v1280 = vpop.f32.mrb[0].mxu0
    %v1281 = vpop.f32.mrb[0].mxu0
    %v1282 = vadd.f32 %v1106, %v1281
    %v1283 = vpop.f32.mrb[0].mxu0
    %1284 = vmatprep.mubr.bf16.mxu0 0
    %1285 = vmatmul.mubr.bf16.gmra.mrb[0].mxu0 %v1066
    %v1286 = vpop.f32.mrb[0].mxu0
    %v1287 = vadd.f32 %v1106, %v1286
    %v1288 = vpop.f32.mrb[0].mxu0
    %v1289 = vpop.f32.mrb[0].mxu0
    %v1290 = vadd.f32 %v1106, %v1289
    %v1291 = vpop.f32.mrb[0].mxu0
    %1292 = vmatprep.mubr.bf16.mxu0 0
    %1293 = vmatmul.mubr.bf16.gmra.mrb[0].mxu0 %v1067
    %v1294 = vpop.f32.mrb[0].mxu0
    %v1295 = vadd.f32 %v1106, %v1294
    %v1296 = vpop.f32.mrb[0].mxu0
    %v1297 = vpop.f32.mrb[0].mxu0
    %v1298 = vadd.f32 %v1106, %v1297
    %v1299 = vpop.f32.mrb[0].mxu0
    %1300 = vmatprep.mubr.bf16.mxu0 0
    %1301 = vmatmul.mubr.bf16.gmra.mrb[0].mxu0 %v1068
    %v1302 = vpop.f32.mrb[0].mxu0
    %v1303 = vadd.f32 %v1106, %v1302
    %v1304 = vpop.f32.mrb[0].mxu0
    %v1305 = vpop.f32.mrb[0].mxu0
    %v1306 = vadd.f32 %v1106, %v1305
    %v1307 = vpop.f32.mrb[0].mxu0
    %1308 = vmatprep.mubr.bf16.mxu0 0
    %1309 = vmatmul.mubr.bf16.gmra.mrb[0].mxu0 %v1069
    %v1310 = vpop.f32.mrb[0].mxu0
    %v1311 = vadd.f32 %v1106, %v1310
    %v1312 = vpop.f32.mrb[0].mxu0
    %v1313 = vpop.f32.mrb[0].mxu0
    %v1314 = vadd.f32 %v1106, %v1313
    %v1315 = vpop.f32.mrb[0].mxu0
    %1316 = vmatprep.mubr.bf16.mxu0 0
    %1317 = vmatmul.mubr.bf16.gmra.mrb[0].mxu0 %v1070
    %v1318 = vpop.f32.mrb[0].mxu0
    %v1319 = vadd.f32 %v1106, %v1318
    %v1320 = vpop.f32.mrb[0].mxu0
    %v1321 = vpop.f32.mrb[0].mxu0
    %v1322 = vadd.f32 %v1106, %v1321
    %v1323 = vpop.f32.mrb[0].mxu0
    %1324 = vmatprep.mubr.bf16.mxu0 0
    %1325 = vmatmul.mubr.bf16.gmra.mrb[0].mxu0 %v1071
    %v1326 = vpop.f32.mrb[0].mxu0
    %v1327 = vadd.f32 %v1106, %v1326
    %v1328 = vpop.f32.mrb[0].mxu0
    %v1329 = vpop.f32.mrb[0].mxu0
    %v1330 = vadd.f32 %v1106, %v1329
    %v1331 = vpop.f32.mrb[0].mxu0
    %1332 = vmatprep.mubr.bf16.mxu0 0
    %1333 = vmatmul.mubr.bf16.gmra.mrb[0].mxu0 %v1072
    %v1334 = vpop.f32.mrb[0].mxu0
    %v1335 = vadd.f32 %v1106, %v1334
    %v1336 = vpop.f32.mrb[0].mxu0
    %v1337 = vpop.f32.mrb[0].mxu0
    %v1338 = vadd.f32 %v1106, %v1337
    %v1339 = vpop.f32.mrb[0].mxu0
    %1340 = vmatprep.mubr.bf16.mxu0 0
    %1341 = vmatmul.mubr.bf16.gmra.mrb[0].mxu0 %v1073
    %v1342 = vpop.f32.mrb[0].mxu0
    %v1343 = vadd.f32 %v1106, %v1342
    %v1344 = vpop.f32.mrb[0].mxu0
    %v1345 = vpop.f32.mrb[0].mxu0
    %v1346 = vadd.f32 %v1106, %v1345
    %v1347 = vpop.f32.mrb[0].mxu0
    %1348 = vmatprep.mubr.bf16.mxu0 0
    %1349 = vmatmul.mubr.bf16.gmra.mrb[0].mxu0 %v1074
    %v1350 = vpop.f32.mrb[0].mxu0
    %v1351 = vadd.f32 %v1106, %v1350
    %v1352 = vpop.f32.mrb[0].mxu0
    %v1353 = vpop.f32.mrb[0].mxu0
    %v1354 = vadd.f32 %v1106, %v1353
    %v1355 = vpop.f32.mrb[0].mxu0
    %1356 = vmatprep.mubr.bf16.mxu0 0
    %1357 = vmatmul.mubr.bf16.gmra.mrb[0].mxu0 %v1075
    %v1358 = vpop.f32.mrb[0].mxu0
    %v1359 = vadd.f32 %v1106, %v1358
    %v1360 = vpop.f32.mrb[0].mxu0
    %v1361 = vpop.f32.mrb[0].mxu0
    %v1362 = vadd.f32 %v1106, %v1361
    %v1363 = vpop.f32.mrb[0].mxu0
    %1364 = vmatprep.mubr.bf16.mxu0 0
    %1365 = vmatmul.mubr.bf16.gmra.mrb[0].mxu0 %v1076
    %v1366 = vpop.f32.mrb[0].mxu0
    %v1367 = vadd.f32 %v1106, %v1366
    %v1368 = vpop.f32.mrb[0].mxu0
    %v1369 = vpop.f32.mrb[0].mxu0
    %v1370 = vadd.f32 %v1106, %v1369
    %v1371 = vpop.f32.mrb[0].mxu0
    %1372 = vmatprep.mubr.bf16.mxu0 0
    %1373 = vmatmul.mubr.bf16.gmra.mrb[0].mxu0 %v1077
    %v1374 = vpop.f32.mrb[0].mxu0
    %v1375 = vadd.f32 %v1106, %v1374
    %v1376 = vpop.f32.mrb[0].mxu0
    %v1377 = vpop.f32.mrb[0].mxu0
    %v1378 = vadd.f32 %v1106, %v1377
    %v1379 = vpop.f32.mrb[0].mxu0
    %1380 = vmatprep.mubr.bf16.mxu0 0
    %1381 = vmatmul.mubr.bf16.gmra.mrb[0].mxu0 %v1078
    %v1382 = vpop.f32.mrb[0].mxu0
    %v1383 = vadd.f32 %v1106, %v1382
    %v1384 = vpop.f32.mrb[0].mxu0
    %v1385 = vpop.f32.mrb[0].mxu0
    %v1386 = vadd.f32 %v1106, %v1385
    %v1387 = vpop.f32.mrb[0].mxu0
    %1388 = vmatprep.mubr.bf16.mxu0 0
    %1389 = vmatmul.mubr.bf16.gmra.mrb[0].mxu0 %v1079
    %v1390 = vpop.f32.mrb[0].mxu0
    %v1391 = vadd.f32 %v1106, %v1390
    %v1392 = vpop.f32.mrb[0].mxu0
    %v1393 = vpop.f32.mrb[0].mxu0
    %v1394 = vadd.f32 %v1106, %v1393
    %v1395 = vpop.f32.mrb[0].mxu0
    %1396 = vmatprep.mubr.bf16.mxu0 0
    %1397 = vmatmul.mubr.bf16.gmra.mrb[0].mxu0 %v1080
    %v1398 = vpop.f32.mrb[0].mxu0
    %v1399 = vadd.f32 %v1106, %v1398
    %v1400 = vpop.f32.mrb[0].mxu0
    %v1401 = vpop.f32.mrb[0].mxu0
    %v1402 = vadd.f32 %v1106, %v1401
    %v1403 = vpop.f32.mrb[0].mxu0
    %1404 = vmatprep.mubr.bf16.mxu0 0
    %1405 = vmatmul.mubr.bf16.gmra.mrb[0].mxu0 %v1081
    %v1406 = vpop.f32.mrb[0].mxu0
    %v1407 = vadd.f32 %v1106, %v1406
    %v1408 = vpop.f32.mrb[0].mxu0
    %v1409 = vpop.f32.mrb[0].mxu0
    %v1410 = vadd.f32 %v1106, %v1409
    %v1411 = vpop.f32.mrb[0].mxu0
    %1412 = vmatprep.mubr.bf16.mxu0 0
    %1413 = vmatmul.mubr.bf16.gmra.mrb[0].mxu0 %v1082
    %v1414 = vpop.f32.mrb[0].mxu0
    %v1415 = vadd.f32 %v1106, %v1414
    %v1416 = vpop.f32.mrb[0].mxu0
    %v1417 = vpop.f32.mrb[0].mxu0
    %v1418 = vadd.f32 %v1106, %v1417
    %v1419 = vpop.f32.mrb[0].mxu0
    %1420 = vmatprep.mubr.bf16.mxu0 0
    %1421 = vmatmul.mubr.bf16.gmra.mrb[0].mxu0 %v1083
    %v1422 = vpop.f32.mrb[0].mxu0
    %v1423 = vadd.f32 %v1106, %v1422
    %v1424 = vpop.f32.mrb[0].mxu0
    %v1425 = vpop.f32.mrb[0].mxu0
    %v1426 = vadd.f32 %v1106, %v1425
    %v1427 = vpop.f32.mrb[0].mxu0
    %1428 = vmatprep.mubr.bf16.mxu0 0
    %1429 = vmatmul.mubr.bf16.gmra.mrb[0].mxu0 %v1084
    %v1430 = vpop.f32.mrb[0].mxu0
    %v1431 = vadd.f32 %v1106, %v1430
    %v1432 = vpop.f32.mrb[0].mxu0
    %v1433 = vpop.f32.mrb[0].mxu0
    %v1434 = vadd.f32 %v1106, %v1433
    %v1435 = vpop.f32.mrb[0].mxu0
    %1436 = vmatprep.mubr.bf16.mxu0 0
    %1437 = vmatmul.mubr.bf16.gmra.mrb[0].mxu0 %v1085
    %v1438 = vpop.f32.mrb[0].mxu0
    %v1439 = vadd.f32 %v1106, %v1438
    %v1440 = vpop.f32.mrb[0].mxu0
    %v1441 = vpop.f32.mrb[0].mxu0
    %v1442 = vadd.f32 %v1106, %v1441
    %v1443 = vpop.f32.mrb[0].mxu0
    %1444 = vdwg.mxu0
    %v1445 = vpack.c.bf16 %v1194, %v1191
    %v1446 = vpack.c.bf16 %v1202, %v1199
    %v1447 = vpack.c.bf16 %v1210, %v1207
    %v1448 = vpack.c.bf16 %v1218, %v1215
    %v1449 = vpack.c.bf16 %v1226, %v1223
    %v1450 = vpack.c.bf16 %v1234, %v1231
    %v1451 = vpack.c.bf16 %v1242, %v1239
    %v1452 = vpack.c.bf16 %v1250, %v1247
    %v1453 = vpack.c.bf16 %v1258, %v1255
    %v1454 = vpack.c.bf16 %v1266, %v1263
    %v1455 = vpack.c.bf16 %v1274, %v1271
    %v1456 = vpack.c.bf16 %v1282, %v1279
    %v1457 = vpack.c.bf16 %v1290, %v1287
    %v1458 = vpack.c.bf16 %v1298, %v1295
    %v1459 = vpack.c.bf16 %v1306, %v1303
    %v1460 = vpack.c.bf16 %v1314, %v1311
    %v1461 = vpack.c.bf16 %v1322, %v1319
    %v1462 = vpack.c.bf16 %v1330, %v1327
    %v1463 = vpack.c.bf16 %v1338, %v1335
    %v1464 = vpack.c.bf16 %v1346, %v1343
    %v1465 = vpack.c.bf16 %v1354, %v1351
    %v1466 = vpack.c.bf16 %v1362, %v1359
    %v1467 = vpack.c.bf16 %v1370, %v1367
    %v1468 = vpack.c.bf16 %v1378, %v1375
    %v1469 = vpack.c.bf16 %v1386, %v1383
    %v1470 = vpack.c.bf16 %v1394, %v1391
    %v1471 = vpack.c.bf16 %v1402, %v1399
    %v1472 = vpack.c.bf16 %v1410, %v1407
    %v1473 = vpack.c.bf16 %v1418, %v1415
    %v1474 = vpack.c.bf16 %v1426, %v1423
    %v1475 = vpack.c.bf16 %v1434, %v1431
    %v1476 = vpack.c.bf16 %v1442, %v1439
    %v1509 = vunpack.c.l.b16 %v1445
    %v1510 = vunpack.c.h.b16 %v1445
    %v1511 = vunpack.c.l.b16 %v1446
    %v1512 = vunpack.c.h.b16 %v1446
    %v1513 = vunpack.c.l.b16 %v1447
    %v1514 = vunpack.c.h.b16 %v1447
    %v1515 = vunpack.c.l.b16 %v1448
    %v1516 = vunpack.c.h.b16 %v1448
    %v1517 = vunpack.c.l.b16 %v1449
    %v1518 = vunpack.c.h.b16 %v1449
    %v1519 = vunpack.c.l.b16 %v1450
    %v1520 = vunpack.c.h.b16 %v1450
    %v1521 = vunpack.c.l.b16 %v1451
    %v1522 = vunpack.c.h.b16 %v1451
    %v1523 = vunpack.c.l.b16 %v1452
    %v1524 = vunpack.c.h.b16 %v1452
    %v1525 = vunpack.c.l.b16 %v1453
    %v1526 = vunpack.c.h.b16 %v1453
    %v1527 = vunpack.c.l.b16 %v1454
    %v1528 = vunpack.c.h.b16 %v1454
    %v1529 = vunpack.c.l.b16 %v1455
    %v1530 = vunpack.c.h.b16 %v1455
    %v1531 = vunpack.c.l.b16 %v1456
    %v1532 = vunpack.c.h.b16 %v1456
    %v1533 = vunpack.c.l.b16 %v1457
    %v1534 = vunpack.c.h.b16 %v1457
    %v1535 = vunpack.c.l.b16 %v1458
    %v1536 = vunpack.c.h.b16 %v1458
    %v1537 = vunpack.c.l.b16 %v1459
    %v1538 = vunpack.c.h.b16 %v1459
    %v1539 = vunpack.c.l.b16 %v1460
    %v1540 = vunpack.c.h.b16 %v1460
    %v1541 = vunpack.c.l.b16 %v1461
    %v1542 = vunpack.c.h.b16 %v1461
    %v1543 = vunpack.c.l.b16 %v1462
    %v1544 = vunpack.c.h.b16 %v1462
    %v1545 = vunpack.c.l.b16 %v1463
    %v1546 = vunpack.c.h.b16 %v1463
    %v1547 = vunpack.c.l.b16 %v1464
    %v1548 = vunpack.c.h.b16 %v1464
    %v1549 = vunpack.c.l.b16 %v1465
    %v1550 = vunpack.c.h.b16 %v1465
    %v1551 = vunpack.c.l.b16 %v1466
    %v1552 = vunpack.c.h.b16 %v1466
    %v1553 = vunpack.c.l.b16 %v1467
    %v1554 = vunpack.c.h.b16 %v1467
    %v1555 = vunpack.c.l.b16 %v1468
    %v1556 = vunpack.c.h.b16 %v1468
    %v1557 = vunpack.c.l.b16 %v1469
    %v1558 = vunpack.c.h.b16 %v1469
    %v1559 = vunpack.c.l.b16 %v1470
    %v1560 = vunpack.c.h.b16 %v1470
    %v1561 = vunpack.c.l.b16 %v1471
    %v1562 = vunpack.c.h.b16 %v1471
    %v1563 = vunpack.c.l.b16 %v1472
    %v1564 = vunpack.c.h.b16 %v1472
    %v1565 = vunpack.c.l.b16 %v1473
    %v1566 = vunpack.c.h.b16 %v1473
    %v1567 = vunpack.c.l.b16 %v1474
    %v1568 = vunpack.c.h.b16 %v1474
    %v1569 = vunpack.c.l.b16 %v1475
    %v1570 = vunpack.c.h.b16 %v1475
    %v1571 = vunpack.c.l.b16 %v1476
    %v1572 = vunpack.c.h.b16 %v1476
    %v1573 = vpack.c.b16 %v1509, %v1509
    %v1574 = vpack.c.b16 %v1510, %v1510
    %v1575 = vpack.c.b16 %v1511, %v1511
    %v1576 = vpack.c.b16 %v1512, %v1512
    %v1577 = vpack.c.b16 %v1513, %v1513
    %v1578 = vpack.c.b16 %v1514, %v1514
    %v1579 = vpack.c.b16 %v1515, %v1515
    %v1580 = vpack.c.b16 %v1516, %v1516
    %v1581 = vpack.c.b16 %v1517, %v1517
    %v1582 = vpack.c.b16 %v1518, %v1518
    %v1583 = vpack.c.b16 %v1519, %v1519
    %v1584 = vpack.c.b16 %v1520, %v1520
    %v1585 = vpack.c.b16 %v1521, %v1521
    %v1586 = vpack.c.b16 %v1522, %v1522
    %v1587 = vpack.c.b16 %v1523, %v1523
    %v1588 = vpack.c.b16 %v1524, %v1524
    %v1589 = vpack.c.b16 %v1525, %v1525
    %v1590 = vpack.c.b16 %v1526, %v1526
    %v1591 = vpack.c.b16 %v1527, %v1527
    %v1592 = vpack.c.b16 %v1528, %v1528
    %v1593 = vpack.c.b16 %v1529, %v1529
    %v1594 = vpack.c.b16 %v1530, %v1530
    %v1595 = vpack.c.b16 %v1531, %v1531
    %v1596 = vpack.c.b16 %v1532, %v1532
    %v1597 = vpack.c.b16 %v1533, %v1533
    %v1598 = vpack.c.b16 %v1534, %v1534
    %v1599 = vpack.c.b16 %v1535, %v1535
    %v1600 = vpack.c.b16 %v1536, %v1536
    %v1601 = vpack.c.b16 %v1537, %v1537
    %v1602 = vpack.c.b16 %v1538, %v1538
    %v1603 = vpack.c.b16 %v1539, %v1539
    %v1604 = vpack.c.b16 %v1540, %v1540
    %v1605 = vpack.c.b16 %v1541, %v1541
    %v1606 = vpack.c.b16 %v1542, %v1542
    %v1607 = vpack.c.b16 %v1543, %v1543
    %v1608 = vpack.c.b16 %v1544, %v1544
    %v1609 = vpack.c.b16 %v1545, %v1545
    %v1610 = vpack.c.b16 %v1546, %v1546
    %v1611 = vpack.c.b16 %v1547, %v1547
    %v1612 = vpack.c.b16 %v1548, %v1548
    %v1613 = vpack.c.b16 %v1549, %v1549
    %v1614 = vpack.c.b16 %v1550, %v1550
    %v1615 = vpack.c.b16 %v1551, %v1551
    %v1616 = vpack.c.b16 %v1552, %v1552
    %v1617 = vpack.c.b16 %v1553, %v1553
    %v1618 = vpack.c.b16 %v1554, %v1554
    %v1619 = vpack.c.b16 %v1555, %v1555
    %v1620 = vpack.c.b16 %v1556, %v1556
    %v1621 = vpack.c.b16 %v1557, %v1557
    %v1622 = vpack.c.b16 %v1558, %v1558
    %v1623 = vpack.c.b16 %v1559, %v1559
    %v1624 = vpack.c.b16 %v1560, %v1560
    %v1625 = vpack.c.b16 %v1561, %v1561
    %v1626 = vpack.c.b16 %v1562, %v1562
    %v1627 = vpack.c.b16 %v1563, %v1563
    %v1628 = vpack.c.b16 %v1564, %v1564
    %v1629 = vpack.c.b16 %v1565, %v1565
    %v1630 = vpack.c.b16 %v1566, %v1566
    %v1631 = vpack.c.b16 %v1567, %v1567
    %v1632 = vpack.c.b16 %v1568, %v1568
    %v1633 = vpack.c.b16 %v1569, %v1569
    %v1634 = vpack.c.b16 %v1570, %v1570
    %v1635 = vpack.c.b16 %v1571, %v1571
    %v1636 = vpack.c.b16 %v1572, %v1572
    %1701 = vst [vmem:[#allocation2] sm:$0xf] %v1573
    %1702 = vst [vmem:[#allocation2 + $0x4] sm:$0xf] %v1574
    %1703 = vst [vmem:[#allocation2 + $0x8] sm:$0xf] %v1575
    %1704 = vst [vmem:[#allocation2 + $0xc] sm:$0xf] %v1576
    %1705 = vst [vmem:[#allocation2 + $0x10] sm:$0xf] %v1577
    %1706 = vst [vmem:[#allocation2 + $0x14] sm:$0xf] %v1578
    %1707 = vst [vmem:[#allocation2 + $0x18] sm:$0xf] %v1579
    %1708 = vst [vmem:[#allocation2 + $0x1c] sm:$0xf] %v1580
    %1709 = vst [vmem:[#allocation2 + $0x20] sm:$0xf] %v1581
    %1710 = vst [vmem:[#allocation2 + $0x24] sm:$0xf] %v1582
    %1711 = vst [vmem:[#allocation2 + $0x28] sm:$0xf] %v1583
    %1712 = vst [vmem:[#allocation2 + $0x2c] sm:$0xf] %v1584
    %1713 = vst [vmem:[#allocation2 + $0x30] sm:$0xf] %v1585
    %1714 = vst [vmem:[#allocation2 + $0x34] sm:$0xf] %v1586
    %1715 = vst [vmem:[#allocation2 + $0x38] sm:$0xf] %v1587
    %1716 = vst [vmem:[#allocation2 + $0x3c] sm:$0xf] %v1588
    %1717 = vst [vmem:[#allocation2 + $0x40] sm:$0xf] %v1589
    %1718 = vst [vmem:[#allocation2 + $0x44] sm:$0xf] %v1590
    %1719 = vst [vmem:[#allocation2 + $0x48] sm:$0xf] %v1591
    %1720 = vst [vmem:[#allocation2 + $0x4c] sm:$0xf] %v1592
    %1721 = vst [vmem:[#allocation2 + $0x50] sm:$0xf] %v1593
    %1722 = vst [vmem:[#allocation2 + $0x54] sm:$0xf] %v1594
    %1723 = vst [vmem:[#allocation2 + $0x58] sm:$0xf] %v1595
    %1724 = vst [vmem:[#allocation2 + $0x5c] sm:$0xf] %v1596
    %1725 = vst [vmem:[#allocation2 + $0x60] sm:$0xf] %v1597
    %1726 = vst [vmem:[#allocation2 + $0x64] sm:$0xf] %v1598
    %1727 = vst [vmem:[#allocation2 + $0x68] sm:$0xf] %v1599
    %1728 = vst [vmem:[#allocation2 + $0x6c] sm:$0xf] %v1600
    %1729 = vst [vmem:[#allocation2 + $0x70] sm:$0xf] %v1601
    %1730 = vst [vmem:[#allocation2 + $0x74] sm:$0xf] %v1602
    %1731 = vst [vmem:[#allocation2 + $0x78] sm:$0xf] %v1603
    %1732 = vst [vmem:[#allocation2 + $0x7c] sm:$0xf] %v1604
    %1733 = vst [vmem:[#allocation2 + $0x80] sm:$0xf] %v1605
    %1734 = vst [vmem:[#allocation2 + $0x84] sm:$0xf] %v1606
    %1735 = vst [vmem:[#allocation2 + $0x88] sm:$0xf] %v1607
    %1736 = vst [vmem:[#allocation2 + $0x8c] sm:$0xf] %v1608
    %1737 = vst [vmem:[#allocation2 + $0x90] sm:$0xf] %v1609
    %1738 = vst [vmem:[#allocation2 + $0x94] sm:$0xf] %v1610
    %1739 = vst [vmem:[#allocation2 + $0x98] sm:$0xf] %v1611
    %1740 = vst [vmem:[#allocation2 + $0x9c] sm:$0xf] %v1612
    %1741 = vst [vmem:[#allocation2 + $0xa0] sm:$0xf] %v1613
    %1742 = vst [vmem:[#allocation2 + $0xa4] sm:$0xf] %v1614
    %1743 = vst [vmem:[#allocation2 + $0xa8] sm:$0xf] %v1615
    %1744 = vst [vmem:[#allocation2 + $0xac] sm:$0xf] %v1616
    %1745 = vst [vmem:[#allocation2 + $0xb0] sm:$0xf] %v1617
    %1746 = vst [vmem:[#allocation2 + $0xb4] sm:$0xf] %v1618
    %1747 = vst [vmem:[#allocation2 + $0xb8] sm:$0xf] %v1619
    %1748 = vst [vmem:[#allocation2 + $0xbc] sm:$0xf] %v1620
    %1749 = vst [vmem:[#allocation2 + $0xc0] sm:$0xf] %v1621
    %1750 = vst [vmem:[#allocation2 + $0xc4] sm:$0xf] %v1622
    %1751 = vst [vmem:[#allocation2 + $0xc8] sm:$0xf] %v1623
    %1752 = vst [vmem:[#allocation2 + $0xcc] sm:$0xf] %v1624
    %1753 = vst [vmem:[#allocation2 + $0xd0] sm:$0xf] %v1625
    %1754 = vst [vmem:[#allocation2 + $0xd4] sm:$0xf] %v1626
    %1755 = vst [vmem:[#allocation2 + $0xd8] sm:$0xf] %v1627
    %1756 = vst [vmem:[#allocation2 + $0xdc] sm:$0xf] %v1628
    %1757 = vst [vmem:[#allocation2 + $0xe0] sm:$0xf] %v1629
    %1758 = vst [vmem:[#allocation2 + $0xe4] sm:$0xf] %v1630
    %1759 = vst [vmem:[#allocation2 + $0xe8] sm:$0xf] %v1631
    %1760 = vst [vmem:[#allocation2 + $0xec] sm:$0xf] %v1632
    %1761 = vst [vmem:[#allocation2 + $0xf0] sm:$0xf] %v1633
    %1762 = vst [vmem:[#allocation2 + $0xf4] sm:$0xf] %v1634
    %1763 = vst [vmem:[#allocation2 + $0xf8] sm:$0xf] %v1635
    %1764 = vst [vmem:[#allocation2 + $0xfc] sm:$0xf] %v1636
    // Predicated region
    $region30: #{tpu_custom_call.1} parent=1 // pred_check
      _
    $region31: #{tpu_custom_call.1} parent=1 // pred_check_branch
      %1766 = sbr.rel (0) target = $region33
    $region32: #{tpu_custom_call.1} parent=1 // pred_region
      %s1768 = ssub.s32 4096, 4096
      %1769 = vsyncadd [#allocation3], %s1768
      %s1770 = sshll.u32 [#allocation2], 4
      %s1771 = int_to_ptr.vmem [resolvable:$true] %s1770
      %1776 = dma.vmem_to_hbm [thread:$0]  %s1771, 4096, %s7, [#allocation3], 64, 64, 4
    $region33: #{tpu_custom_call.1} parent=1 // pred_fallthru
      _
    // Predicated region
    $region34: #{tpu_custom_call.1} parent=1 // pred_check
      _
    $region35: #{tpu_custom_call.1} parent=1 // pred_check_branch
      %1778 = sbr.rel (0) target = $region37
    $region36: #{tpu_custom_call.1} parent=1 // pred_region
      %1779 = dma.done [#allocation3], 4096
    $region37: #{tpu_custom_call.1} parent=1 // pred_fallthru
      _
    %1780 = vsyncpa [#allocation3], 1

// kernel: tpu_custom_call.1
$region0: #{tpu_custom_call.1}
  #allocation0 [shape = 'u32[]', space=smem, size = 0x4, offset = 0x4, fixed_abs, tag = 'smem constant byte address 0x4 - core index']
  #allocation1 [shape = 'u32[144,128]{1,0:T(1,128)}', space=vmem, size = 0x12000, scoped, tag = 'internal scratch']
  %s0 = inlined_call_operand.vmem [shape: f32[512,32], index: 0, kind: input, shape index: {}]
  %s1 = inlined_call_operand.vmem [shape: bf16[32,128], index: 1, kind: input, shape index: {}]
  %s2 = inlined_call_operand.vmem [shape: f32[1,128], index: 2, kind: input, shape index: {}]
  %s3 = inlined_call_operand.vmem [shape: bf16[128,128], index: 3, kind: input, shape index: {}]
  %s4 = inlined_call_operand.vmem [shape: f32[1,128], index: 4, kind: input, shape index: {}]
  %s5 = inlined_call_operand.vmem [shape: bf16[128,128], index: 5, kind: input, shape index: {}]
  %s6 = inlined_call_operand.vmem [shape: f32[1,128], index: 6, kind: input, shape index: {}]
  %s7 = inlined_call_operand.hbm [shape: bf16[512,128], index: 7, kind: output, shape index: {}]
  %s8 = sld [smem:[#allocation0]]
  $region38: #{tpu_custom_call.1} parent=0
    _
  %s10 = ssub.s32 1, %s8
  %s11 = scalar_select 0, %s10, %s8
  $region1: #{tpu_custom_call.1} parent=0
    #allocation2 [shape = 'u8[131072]{0}', space=vmem, size = 0x20000, scoped, tag = 'output window, operand 0, single buffered']
    #allocation3 [shape = 's32[1]{0}', space=sflag, size = 0x4, scoped, tag = 'scoped memory for tpu_custom_call.1']
    %12 = vsyncpa [#allocation3], 0
    // Predicated region
    $region2: #{tpu_custom_call.1} parent=1 // pred_check
      _
    $region3: #{tpu_custom_call.1} parent=1 // pred_check_branch
      %14 = sbr.rel (0) target = $region5
    $region4: #{tpu_custom_call.1} parent=1 // pred_region
      _
    $region5: #{tpu_custom_call.1} parent=1 // pred_fallthru
      _
    // Predicated region
    $region6: #{tpu_custom_call.1} parent=1 // pred_check
      _
    $region7: #{tpu_custom_call.1} parent=1 // pred_check_branch
      %16 = sbr.rel (0) target = $region9
    $region8: #{tpu_custom_call.1} parent=1 // pred_region
      _
    $region9: #{tpu_custom_call.1} parent=1 // pred_fallthru
      _
    // Predicated region
    $region10: #{tpu_custom_call.1} parent=1 // pred_check
      _
    $region11: #{tpu_custom_call.1} parent=1 // pred_check_branch
      %18 = sbr.rel (0) target = $region13
    $region12: #{tpu_custom_call.1} parent=1 // pred_region
      _
    $region13: #{tpu_custom_call.1} parent=1 // pred_fallthru
      _
    // Predicated region
    $region14: #{tpu_custom_call.1} parent=1 // pred_check
      _
    $region15: #{tpu_custom_call.1} parent=1 // pred_check_branch
      %20 = sbr.rel (0) target = $region17
    $region16: #{tpu_custom_call.1} parent=1 // pred_region
      _
    $region17: #{tpu_custom_call.1} parent=1 // pred_fallthru
      _
    // Predicated region
    $region18: #{tpu_custom_call.1} parent=1 // pred_check
      _
    $region19: #{tpu_custom_call.1} parent=1 // pred_check_branch
      %22 = sbr.rel (0) target = $region21
    $region20: #{tpu_custom_call.1} parent=1 // pred_region
      _
    $region21: #{tpu_custom_call.1} parent=1 // pred_fallthru
      _
    // Predicated region
    $region22: #{tpu_custom_call.1} parent=1 // pred_check
      _
    $region23: #{tpu_custom_call.1} parent=1 // pred_check_branch
      %24 = sbr.rel (0) target = $region25
    $region24: #{tpu_custom_call.1} parent=1 // pred_region
      _
    $region25: #{tpu_custom_call.1} parent=1 // pred_fallthru
      _
    // Predicated region
    $region26: #{tpu_custom_call.1} parent=1 // pred_check
      _
    $region27: #{tpu_custom_call.1} parent=1 // pred_check_branch
      %26 = sbr.rel (0) target = $region29
    $region28: #{tpu_custom_call.1} parent=1 // pred_region
      _
    $region29: #{tpu_custom_call.1} parent=1 // pred_fallthru
      _
    %v28 = vld [vmem:[%s2] sm:$0x1]
    %v29 = vld [vmem:[%s4] sm:$0x1]
    %v30 = vld [vmem:[%s6] sm:$0x1]
    %v31 = vld [vmem:[%s0] sm:$0xff]
    %v32 = vld [vmem:[%s0 + $0x8] sm:$0xff]
    %v33 = vld [vmem:[%s0 + $0x10] sm:$0xff]
    %v34 = vld [vmem:[%s0 + $0x18] sm:$0xff]
    %v35 = vld [vmem:[%s0 + $0x20] sm:$0xff]
    %v36 = vld [vmem:[%s0 + $0x28] sm:$0xff]
    %v37 = vld [vmem:[%s0 + $0x30] sm:$0xff]
    %v38 = vld [vmem:[%s0 + $0x38] sm:$0xff]
    %v39 = vld [vmem:[%s0 + $0x40] sm:$0xff]
    %v40 = vld [vmem:[%s0 + $0x48] sm:$0xff]
    %v41 = vld [vmem:[%s0 + $0x50] sm:$0xff]
    %v42 = vld [vmem:[%s0 + $0x58] sm:$0xff]
    %v43 = vld [vmem:[%s0 + $0x60] sm:$0xff]
    %v44 = vld [vmem:[%s0 + $0x68] sm:$0xff]
    %v45 = vld [vmem:[%s0 + $0x70] sm:$0xff]
    %v46 = vld [vmem:[%s0 + $0x78] sm:$0xff]
    %v47 = vld [vmem:[%s0 + $0x80] sm:$0xff]
    %v48 = vld [vmem:[%s0 + $0x88] sm:$0xff]
    %v49 = vld [vmem:[%s0 + $0x90] sm:$0xff]
    %v50 = vld [vmem:[%s0 + $0x98] sm:$0xff]
    %v51 = vld [vmem:[%s0 + $0xa0] sm:$0xff]
    %v52 = vld [vmem:[%s0 + $0xa8] sm:$0xff]
    %v53 = vld [vmem:[%s0 + $0xb0] sm:$0xff]
    %v54 = vld [vmem:[%s0 + $0xb8] sm:$0xff]
    %v55 = vld [vmem:[%s0 + $0xc0] sm:$0xff]
    %v56 = vld [vmem:[%s0 + $0xc8] sm:$0xff]
    %v57 = vld [vmem:[%s0 + $0xd0] sm:$0xff]
    %v58 = vld [vmem:[%s0 + $0xd8] sm:$0xff]
    %v59 = vld [vmem:[%s0 + $0xe0] sm:$0xff]
    %v60 = vld [vmem:[%s0 + $0xe8] sm:$0xff]
    %v61 = vld [vmem:[%s0 + $0xf0] sm:$0xff]
    %v62 = vld [vmem:[%s0 + $0xf8] sm:$0xff]
    %v63 = vld [vmem:[%s0 + $0x100] sm:$0xff]
    %v64 = vld [vmem:[%s0 + $0x108] sm:$0xff]
    %v65 = vld [vmem:[%s0 + $0x110] sm:$0xff]
    %v66 = vld [vmem:[%s0 + $0x118] sm:$0xff]
    %v67 = vld [vmem:[%s0 + $0x120] sm:$0xff]
    %v68 = vld [vmem:[%s0 + $0x128] sm:$0xff]
    %v69 = vld [vmem:[%s0 + $0x130] sm:$0xff]
    %v70 = vld [vmem:[%s0 + $0x138] sm:$0xff]
    %v71 = vld [vmem:[%s0 + $0x140] sm:$0xff]
    %v72 = vld [vmem:[%s0 + $0x148] sm:$0xff]
    %v73 = vld [vmem:[%s0 + $0x150] sm:$0xff]
    %v74 = vld [vmem:[%s0 + $0x158] sm:$0xff]
    %v75 = vld [vmem:[%s0 + $0x160] sm:$0xff]
    %v76 = vld [vmem:[%s0 + $0x168] sm:$0xff]
    %v77 = vld [vmem:[%s0 + $0x170] sm:$0xff]
    %v78 = vld [vmem:[%s0 + $0x178] sm:$0xff]
    %v79 = vld [vmem:[%s0 + $0x180] sm:$0xff]
    %v80 = vld [vmem:[%s0 + $0x188] sm:$0xff]
    %v81 = vld [vmem:[%s0 + $0x190] sm:$0xff]
    %v82 = vld [vmem:[%s0 + $0x198] sm:$0xff]
    %v83 = vld [vmem:[%s0 + $0x1a0] sm:$0xff]
    %v84 = vld [vmem:[%s0 + $0x1a8] sm:$0xff]
    %v85 = vld [vmem:[%s0 + $0x1b0] sm:$0xff]
    %v86 = vld [vmem:[%s0 + $0x1b8] sm:$0xff]
    %v87 = vld [vmem:[%s0 + $0x1c0] sm:$0xff]
    %v88 = vld [vmem:[%s0 + $0x1c8] sm:$0xff]
    %v89 = vld [vmem:[%s0 + $0x1d0] sm:$0xff]
    %v90 = vld [vmem:[%s0 + $0x1d8] sm:$0xff]
    %v91 = vld [vmem:[%s0 + $0x1e0] sm:$0xff]
    %v92 = vld [vmem:[%s0 + $0x1e8] sm:$0xff]
    %v93 = vld [vmem:[%s0 + $0x1f0] sm:$0xff]
    %v94 = vld [vmem:[%s0 + $0x1f8] sm:$0xff]
    %v95 = vpack.c.bf16 %v32, %v31
    %v96 = vpack.c.bf16 %v34, %v33
    %v97 = vpack.c.bf16 %v36, %v35
    %v98 = vpack.c.bf16 %v38, %v37
    %v99 = vpack.c.bf16 %v40, %v39
    %v100 = vpack.c.bf16 %v42, %v41
    %v101 = vpack.c.bf16 %v44, %v43
    %v102 = vpack.c.bf16 %v46, %v45
    %v103 = vpack.c.bf16 %v48, %v47
    %v104 = vpack.c.bf16 %v50, %v49
    %v105 = vpack.c.bf16 %v52, %v51
    %v106 = vpack.c.bf16 %v54, %v53
    %v107 = vpack.c.bf16 %v56, %v55
    %v108 = vpack.c.bf16 %v58, %v57
    %v109 = vpack.c.bf16 %v60, %v59
    %v110 = vpack.c.bf16 %v62, %v61
    %v111 = vpack.c.bf16 %v64, %v63
    %v112 = vpack.c.bf16 %v66, %v65
    %v113 = vpack.c.bf16 %v68, %v67
    %v114 = vpack.c.bf16 %v70, %v69
    %v115 = vpack.c.bf16 %v72, %v71
    %v116 = vpack.c.bf16 %v74, %v73
    %v117 = vpack.c.bf16 %v76, %v75
    %v118 = vpack.c.bf16 %v78, %v77
    %v119 = vpack.c.bf16 %v80, %v79
    %v120 = vpack.c.bf16 %v82, %v81
    %v121 = vpack.c.bf16 %v84, %v83
    %v122 = vpack.c.bf16 %v86, %v85
    %v123 = vpack.c.bf16 %v88, %v87
    %v124 = vpack.c.bf16 %v90, %v89
    %v125 = vpack.c.bf16 %v92, %v91
    %v126 = vpack.c.bf16 %v94, %v93
    %v127 = vld [vmem:[%s1] sm:$0xf]
    %v128 = vld [vmem:[%s1 + $0x4] sm:$0xf]
    %v129 = vld [vmem:[%s1 + $0x8] sm:$0xf]
    %v130 = vld [vmem:[%s1 + $0xc] sm:$0xf]
    %v132 = vlaneseq
    %v133 = vshrl.u32 %v132, 7
    %v134 = vsub.s32 0, %v133
    %v135 = vrot.slane %v28, %v134
    %v141 = vunpack.c.l.b16 %v127
    %v142 = vunpack.c.l.b16 %v128
    %v143 = vunpack.c.l.b16 %v129
    %v144 = vunpack.c.l.b16 %v130
    %v145 = vpack.c.b16 %v142, %v141
    %v146 = vpack.c.b16 %v144, %v143
    %vm149 = vcmask 261120
    %v151 = vsel %vm149, %v95, 0
    %v154 = vsel %vm149, %v96, 0
    %v157 = vsel %vm149, %v97, 0
    %v160 = vsel %vm149, %v98, 0
    %v163 = vsel %vm149, %v99, 0
    %v166 = vsel %vm149, %v100, 0
    %v169 = vsel %vm149, %v101, 0
    %v172 = vsel %vm149, %v102, 0
    %v175 = vsel %vm149, %v103, 0
    %v178 = vsel %vm149, %v104, 0
    %v181 = vsel %vm149, %v105, 0
    %v184 = vsel %vm149, %v106, 0
    %v187 = vsel %vm149, %v107, 0
    %v190 = vsel %vm149, %v108, 0
    %v193 = vsel %vm149, %v109, 0
    %v196 = vsel %vm149, %v110, 0
    %v199 = vsel %vm149, %v111, 0
    %v202 = vsel %vm149, %v112, 0
    %v205 = vsel %vm149, %v113, 0
    %v208 = vsel %vm149, %v114, 0
    %v211 = vsel %vm149, %v115, 0
    %v214 = vsel %vm149, %v116, 0
    %v217 = vsel %vm149, %v117, 0
    %v220 = vsel %vm149, %v118, 0
    %v223 = vsel %vm149, %v119, 0
    %v226 = vsel %vm149, %v120, 0
    %v229 = vsel %vm149, %v121, 0
    %v232 = vsel %vm149, %v122, 0
    %v235 = vsel %vm149, %v123, 0
    %v238 = vsel %vm149, %v124, 0
    %v241 = vsel %vm149, %v125, 0
    %v244 = vsel %vm149, %v126, 0
    %246 = vmatprep.subr.bf16.mxu0 0
    %247 = vmatpush1.bf16.msra.mxu0 %v145
    %248 = vmatprep.subr.bf16.mxu0 0
    %249 = vmatpush1.bf16.msra.mxu0 %v146
    %250 = vmatprep.subr.bf16.mxu0 0
    %251 = vmatpush1.bf16.msra.mxu0 0
    %252 = vmatprep.subr.bf16.mxu0 0
    %253 = vmatpush1.bf16.msra.mxu0 0
    %254 = vmatprep.subr.bf16.mxu0 0
    %255 = vmatpush1.bf16.msra.mxu0 0
    %256 = vmatprep.subr.bf16.mxu0 0
    %257 = vmatpush1.bf16.msra.mxu0 0
    %258 = vmatprep.subr.bf16.mxu0 0
    %259 = vmatpush1.bf16.msra.mxu0 0
    %260 = vmatprep.subr.bf16.mxu0 0
    %261 = vmatpush1.bf16.msra.mxu0 0
    %262 = vmatprep.subr.bf16.mxu0 0
    %263 = vmatpush1.bf16.msra.mxu0 0
    %264 = vmatprep.subr.bf16.mxu0 0
    %265 = vmatpush1.bf16.msra.mxu0 0
    %266 = vmatprep.subr.bf16.mxu0 0
    %267 = vmatpush1.bf16.msra.mxu0 0
    %268 = vmatprep.subr.bf16.mxu0 0
    %269 = vmatpush1.bf16.msra.mxu0 0
    %270 = vmatprep.subr.bf16.mxu0 0
    %271 = vmatpush1.bf16.msra.mxu0 0
    %272 = vmatprep.subr.bf16.mxu0 0
    %273 = vmatpush1.bf16.msra.mxu0 0
    %274 = vmatprep.subr.bf16.mxu0 0
    %275 = vmatpush1.bf16.msra.mxu0 0
    %276 = vmatprep.subr.bf16.mxu0 0
    %277 = vmatpush1.bf16.msra.mxu0 0
    %278 = vmatprep.mubr.bf16.mxu0 0
    %279 = vmatmul.mubr.bf16.gmra.mrb[0].mxu0 %v151
    %v280 = vpop.f32.mrb[0].mxu0
    %v281 = vadd.f32 %v135, %v280
    %v282 = vpop.f32.mrb[0].mxu0
    %v283 = vpop.f32.mrb[0].mxu0
    %v284 = vadd.f32 %v135, %v283
    %v285 = vpop.f32.mrb[0].mxu0
    %286 = vmatprep.mubr.bf16.mxu0 0
    %287 = vmatmul.mubr.bf16.gmra.mrb[0].mxu0 %v154
    %v288 = vpop.f32.mrb[0].mxu0
    %v289 = vadd.f32 %v135, %v288
    %v290 = vpop.f32.mrb[0].mxu0
    %v291 = vpop.f32.mrb[0].mxu0
    %v292 = vadd.f32 %v135, %v291
    %v293 = vpop.f32.mrb[0].mxu0
    %294 = vmatprep.mubr.bf16.mxu0 0
    %295 = vmatmul.mubr.bf16.gmra.mrb[0].mxu0 %v157
    %v296 = vpop.f32.mrb[0].mxu0
    %v297 = vadd.f32 %v135, %v296
    %v298 = vpop.f32.mrb[0].mxu0
    %v299 = vpop.f32.mrb[0].mxu0
    %v300 = vadd.f32 %v135, %v299
    %v301 = vpop.f32.mrb[0].mxu0
    %302 = vmatprep.mubr.bf16.mxu0 0
    %303 = vmatmul.mubr.bf16.gmra.mrb[0].mxu0 %v160
    %v304 = vpop.f32.mrb[0].mxu0
    %v305 = vadd.f32 %v135, %v304
    %v306 = vpop.f32.mrb[0].mxu0
    %v307 = vpop.f32.mrb[0].mxu0
    %v308 = vadd.f32 %v135, %v307
    %v309 = vpop.f32.mrb[0].mxu0
    %310 = vmatprep.mubr.bf16.mxu0 0
    %311 = vmatmul.mubr.bf16.gmra.mrb[0].mxu0 %v163
    %v312 = vpop.f32.mrb[0].mxu0
    %v313 = vadd.f32 %v135, %v312
    %v314 = vpop.f32.mrb[0].mxu0
    %v315 = vpop.f32.mrb[0].mxu0
    %v316 = vadd.f32 %v135, %v315
    %v317 = vpop.f32.mrb[0].mxu0
    %318 = vmatprep.mubr.bf16.mxu0 0
    %319 = vmatmul.mubr.bf16.gmra.mrb[0].mxu0 %v166
    %v320 = vpop.f32.mrb[0].mxu0
    %v321 = vadd.f32 %v135, %v320
    %v322 = vpop.f32.mrb[0].mxu0
    %v323 = vpop.f32.mrb[0].mxu0
    %v324 = vadd.f32 %v135, %v323
    %v325 = vpop.f32.mrb[0].mxu0
    %326 = vmatprep.mubr.bf16.mxu0 0
    %327 = vmatmul.mubr.bf16.gmra.mrb[0].mxu0 %v169
    %v328 = vpop.f32.mrb[0].mxu0
    %v329 = vadd.f32 %v135, %v328
    %v330 = vpop.f32.mrb[0].mxu0
    %v331 = vpop.f32.mrb[0].mxu0
    %v332 = vadd.f32 %v135, %v331
    %v333 = vpop.f32.mrb[0].mxu0
    %334 = vmatprep.mubr.bf16.mxu0 0
    %335 = vmatmul.mubr.bf16.gmra.mrb[0].mxu0 %v172
    %v336 = vpop.f32.mrb[0].mxu0
    %v337 = vadd.f32 %v135, %v336
    %v338 = vpop.f32.mrb[0].mxu0
    %v339 = vpop.f32.mrb[0].mxu0
    %v340 = vadd.f32 %v135, %v339
    %v341 = vpop.f32.mrb[0].mxu0
    %342 = vmatprep.mubr.bf16.mxu0 0
    %343 = vmatmul.mubr.bf16.gmra.mrb[0].mxu0 %v175
    %v344 = vpop.f32.mrb[0].mxu0
    %v345 = vadd.f32 %v135, %v344
    %v346 = vpop.f32.mrb[0].mxu0
    %v347 = vpop.f32.mrb[0].mxu0
    %v348 = vadd.f32 %v135, %v347
    %v349 = vpop.f32.mrb[0].mxu0
    %350 = vmatprep.mubr.bf16.mxu0 0
    %351 = vmatmul.mubr.bf16.gmra.mrb[0].mxu0 %v178
    %v352 = vpop.f32.mrb[0].mxu0
    %v353 = vadd.f32 %v135, %v352
    %v354 = vpop.f32.mrb[0].mxu0
    %v355 = vpop.f32.mrb[0].mxu0
    %v356 = vadd.f32 %v135, %v355
    %v357 = vpop.f32.mrb[0].mxu0
    %358 = vmatprep.mubr.bf16.mxu0 0
    %359 = vmatmul.mubr.bf16.gmra.mrb[0].mxu0 %v181
    %v360 = vpop.f32.mrb[0].mxu0
    %v361 = vadd.f32 %v135, %v360
    %v362 = vpop.f32.mrb[0].mxu0
    %v363 = vpop.f32.mrb[0].mxu0
    %v364 = vadd.f32 %v135, %v363
    %v365 = vpop.f32.mrb[0].mxu0
    %366 = vmatprep.mubr.bf16.mxu0 0
    %367 = vmatmul.mubr.bf16.gmra.mrb[0].mxu0 %v184
    %v368 = vpop.f32.mrb[0].mxu0
    %v369 = vadd.f32 %v135, %v368
    %v370 = vpop.f32.mrb[0].mxu0
    %v371 = vpop.f32.mrb[0].mxu0
    %v372 = vadd.f32 %v135, %v371
    %v373 = vpop.f32.mrb[0].mxu0
    %374 = vmatprep.mubr.bf16.mxu0 0
    %375 = vmatmul.mubr.bf16.gmra.mrb[0].mxu0 %v187
    %v376 = vpop.f32.mrb[0].mxu0
    %v377 = vadd.f32 %v135, %v376
    %v378 = vpop.f32.mrb[0].mxu0
    %v379 = vpop.f32.mrb[0].mxu0
    %v380 = vadd.f32 %v135, %v379
    %v381 = vpop.f32.mrb[0].mxu0
    %382 = vmatprep.mubr.bf16.mxu0 0
    %383 = vmatmul.mubr.bf16.gmra.mrb[0].mxu0 %v190
    %v384 = vpop.f32.mrb[0].mxu0
    %v385 = vadd.f32 %v135, %v384
    %v386 = vpop.f32.mrb[0].mxu0
    %v387 = vpop.f32.mrb[0].mxu0
    %v388 = vadd.f32 %v135, %v387
    %v389 = vpop.f32.mrb[0].mxu0
    %390 = vmatprep.mubr.bf16.mxu0 0
    %391 = vmatmul.mubr.bf16.gmra.mrb[0].mxu0 %v193
    %v392 = vpop.f32.mrb[0].mxu0
    %v393 = vadd.f32 %v135, %v392
    %v394 = vpop.f32.mrb[0].mxu0
    %v395 = vpop.f32.mrb[0].mxu0
    %v396 = vadd.f32 %v135, %v395
    %v397 = vpop.f32.mrb[0].mxu0
    %398 = vmatprep.mubr.bf16.mxu0 0
    %399 = vmatmul.mubr.bf16.gmra.mrb[0].mxu0 %v196
    %v400 = vpop.f32.mrb[0].mxu0
    %v401 = vadd.f32 %v135, %v400
    %v402 = vpop.f32.mrb[0].mxu0
    %v403 = vpop.f32.mrb[0].mxu0
    %v404 = vadd.f32 %v135, %v403
    %v405 = vpop.f32.mrb[0].mxu0
    %406 = vmatprep.mubr.bf16.mxu0 0
    %407 = vmatmul.mubr.bf16.gmra.mrb[0].mxu0 %v199
    %v408 = vpop.f32.mrb[0].mxu0
    %v409 = vadd.f32 %v135, %v408
    %v410 = vpop.f32.mrb[0].mxu0
    %v411 = vpop.f32.mrb[0].mxu0
    %v412 = vadd.f32 %v135, %v411
    %v413 = vpop.f32.mrb[0].mxu0
    %414 = vmatprep.mubr.bf16.mxu0 0
    %415 = vmatmul.mubr.bf16.gmra.mrb[0].mxu0 %v202
    %v416 = vpop.f32.mrb[0].mxu0
    %v417 = vadd.f32 %v135, %v416
    %v418 = vpop.f32.mrb[0].mxu0
    %v419 = vpop.f32.mrb[0].mxu0
    %v420 = vadd.f32 %v135, %v419
    %v421 = vpop.f32.mrb[0].mxu0
    %422 = vmatprep.mubr.bf16.mxu0 0
    %423 = vmatmul.mubr.bf16.gmra.mrb[0].mxu0 %v205
    %v424 = vpop.f32.mrb[0].mxu0
    %v425 = vadd.f32 %v135, %v424
    %v426 = vpop.f32.mrb[0].mxu0
    %v427 = vpop.f32.mrb[0].mxu0
    %v428 = vadd.f32 %v135, %v427
    %v429 = vpop.f32.mrb[0].mxu0
    %430 = vmatprep.mubr.bf16.mxu0 0
    %431 = vmatmul.mubr.bf16.gmra.mrb[0].mxu0 %v208
    %v432 = vpop.f32.mrb[0].mxu0
    %v433 = vadd.f32 %v135, %v432
    %v434 = vpop.f32.mrb[0].mxu0
    %v435 = vpop.f32.mrb[0].mxu0
    %v436 = vadd.f32 %v135, %v435
    %v437 = vpop.f32.mrb[0].mxu0
    %438 = vmatprep.mubr.bf16.mxu0 0
    %439 = vmatmul.mubr.bf16.gmra.mrb[0].mxu0 %v211
    %v440 = vpop.f32.mrb[0].mxu0
    %v441 = vadd.f32 %v135, %v440
    %v442 = vpop.f32.mrb[0].mxu0
    %v443 = vpop.f32.mrb[0].mxu0
    %v444 = vadd.f32 %v135, %v443
    %v445 = vpop.f32.mrb[0].mxu0
    %446 = vmatprep.mubr.bf16.mxu0 0
    %447 = vmatmul.mubr.bf16.gmra.mrb[0].mxu0 %v214
    %v448 = vpop.f32.mrb[0].mxu0
    %v449 = vadd.f32 %v135, %v448
    %v450 = vpop.f32.mrb[0].mxu0
    %v451 = vpop.f32.mrb[0].mxu0
    %v452 = vadd.f32 %v135, %v451
    %v453 = vpop.f32.mrb[0].mxu0
    %454 = vmatprep.mubr.bf16.mxu0 0
    %455 = vmatmul.mubr.bf16.gmra.mrb[0].mxu0 %v217
    %v456 = vpop.f32.mrb[0].mxu0
    %v457 = vadd.f32 %v135, %v456
    %v458 = vpop.f32.mrb[0].mxu0
    %v459 = vpop.f32.mrb[0].mxu0
    %v460 = vadd.f32 %v135, %v459
    %v461 = vpop.f32.mrb[0].mxu0
    %462 = vmatprep.mubr.bf16.mxu0 0
    %463 = vmatmul.mubr.bf16.gmra.mrb[0].mxu0 %v220
    %v464 = vpop.f32.mrb[0].mxu0
    %v465 = vadd.f32 %v135, %v464
    %v466 = vpop.f32.mrb[0].mxu0
    %v467 = vpop.f32.mrb[0].mxu0
    %v468 = vadd.f32 %v135, %v467
    %v469 = vpop.f32.mrb[0].mxu0
    %470 = vmatprep.mubr.bf16.mxu0 0
    %471 = vmatmul.mubr.bf16.gmra.mrb[0].mxu0 %v223
    %v472 = vpop.f32.mrb[0].mxu0
    %v473 = vadd.f32 %v135, %v472
    %v474 = vpop.f32.mrb[0].mxu0
    %v475 = vpop.f32.mrb[0].mxu0
    %v476 = vadd.f32 %v135, %v475
    %v477 = vpop.f32.mrb[0].mxu0
    %478 = vmatprep.mubr.bf16.mxu0 0
    %479 = vmatmul.mubr.bf16.gmra.mrb[0].mxu0 %v226
    %v480 = vpop.f32.mrb[0].mxu0
    %v481 = vadd.f32 %v135, %v480
    %v482 = vpop.f32.mrb[0].mxu0
    %v483 = vpop.f32.mrb[0].mxu0
    %v484 = vadd.f32 %v135, %v483
    %v485 = vpop.f32.mrb[0].mxu0
    %486 = vmatprep.mubr.bf16.mxu0 0
    %487 = vmatmul.mubr.bf16.gmra.mrb[0].mxu0 %v229
    %v488 = vpop.f32.mrb[0].mxu0
    %v489 = vadd.f32 %v135, %v488
    %v490 = vpop.f32.mrb[0].mxu0
    %v491 = vpop.f32.mrb[0].mxu0
    %v492 = vadd.f32 %v135, %v491
    %v493 = vpop.f32.mrb[0].mxu0
    %494 = vmatprep.mubr.bf16.mxu0 0
    %495 = vmatmul.mubr.bf16.gmra.mrb[0].mxu0 %v232
    %v496 = vpop.f32.mrb[0].mxu0
    %v497 = vadd.f32 %v135, %v496
    %v498 = vpop.f32.mrb[0].mxu0
    %v499 = vpop.f32.mrb[0].mxu0
    %v500 = vadd.f32 %v135, %v499
    %v501 = vpop.f32.mrb[0].mxu0
    %502 = vmatprep.mubr.bf16.mxu0 0
    %503 = vmatmul.mubr.bf16.gmra.mrb[0].mxu0 %v235
    %v504 = vpop.f32.mrb[0].mxu0
    %v505 = vadd.f32 %v135, %v504
    %v506 = vpop.f32.mrb[0].mxu0
    %v507 = vpop.f32.mrb[0].mxu0
    %v508 = vadd.f32 %v135, %v507
    %v509 = vpop.f32.mrb[0].mxu0
    %510 = vmatprep.mubr.bf16.mxu0 0
    %511 = vmatmul.mubr.bf16.gmra.mrb[0].mxu0 %v238
    %v512 = vpop.f32.mrb[0].mxu0
    %v513 = vadd.f32 %v135, %v512
    %v514 = vpop.f32.mrb[0].mxu0
    %v515 = vpop.f32.mrb[0].mxu0
    %v516 = vadd.f32 %v135, %v515
    %v517 = vpop.f32.mrb[0].mxu0
    %518 = vmatprep.mubr.bf16.mxu0 0
    %519 = vmatmul.mubr.bf16.gmra.mrb[0].mxu0 %v241
    %v520 = vpop.f32.mrb[0].mxu0
    %v521 = vadd.f32 %v135, %v520
    %v522 = vpop.f32.mrb[0].mxu0
    %v523 = vpop.f32.mrb[0].mxu0
    %v524 = vadd.f32 %v135, %v523
    %v525 = vpop.f32.mrb[0].mxu0
    %526 = vmatprep.mubr.bf16.mxu0 0
    %527 = vmatmul.mubr.bf16.gmra.mrb[0].mxu0 %v244
    %v528 = vpop.f32.mrb[0].mxu0
    %v529 = vadd.f32 %v135, %v528
    %v530 = vpop.f32.mrb[0].mxu0
    %v531 = vpop.f32.mrb[0].mxu0
    %v532 = vadd.f32 %v135, %v531
    %v533 = vpop.f32.mrb[0].mxu0
    %534 = vdwg.mxu0
    %v535 = vmax.f32 %v281, 0.0
    %v536 = vmax.f32 %v284, 0.0
    %v537 = vmax.f32 %v289, 0.0
    %v538 = vmax.f32 %v292, 0.0
    %v539 = vmax.f32 %v297, 0.0
    %v540 = vmax.f32 %v300, 0.0
    %v541 = vmax.f32 %v305, 0.0
    %v542 = vmax.f32 %v308, 0.0
    %v543 = vmax.f32 %v313, 0.0
    %v544 = vmax.f32 %v316, 0.0
    %v545 = vmax.f32 %v321, 0.0
    %v546 = vmax.f32 %v324, 0.0
    %v547 = vmax.f32 %v329, 0.0
    %v548 = vmax.f32 %v332, 0.0
    %v549 = vmax.f32 %v337, 0.0
    %v550 = vmax.f32 %v340, 0.0
    %v551 = vmax.f32 %v345, 0.0
    %v552 = vmax.f32 %v348, 0.0
    %v553 = vmax.f32 %v353, 0.0
    %v554 = vmax.f32 %v356, 0.0
    %v555 = vmax.f32 %v361, 0.0
    %v556 = vmax.f32 %v364, 0.0
    %v557 = vmax.f32 %v369, 0.0
    %v558 = vmax.f32 %v372, 0.0
    %v559 = vmax.f32 %v377, 0.0
    %v560 = vmax.f32 %v380, 0.0
    %v561 = vmax.f32 %v385, 0.0
    %v562 = vmax.f32 %v388, 0.0
    %v563 = vmax.f32 %v393, 0.0
    %v564 = vmax.f32 %v396, 0.0
    %v565 = vmax.f32 %v401, 0.0
    %v566 = vmax.f32 %v404, 0.0
    %v567 = vmax.f32 %v409, 0.0
    %v568 = vmax.f32 %v412, 0.0
    %v569 = vmax.f32 %v417, 0.0
    %v570 = vmax.f32 %v420, 0.0
    %v571 = vmax.f32 %v425, 0.0
    %v572 = vmax.f32 %v428, 0.0
    %v573 = vmax.f32 %v433, 0.0
    %v574 = vmax.f32 %v436, 0.0
    %v575 = vmax.f32 %v441, 0.0
    %v576 = vmax.f32 %v444, 0.0
    %v577 = vmax.f32 %v449, 0.0
    %v578 = vmax.f32 %v452, 0.0
    %v579 = vmax.f32 %v457, 0.0
    %v580 = vmax.f32 %v460, 0.0
    %v581 = vmax.f32 %v465, 0.0
    %v582 = vmax.f32 %v468, 0.0
    %v583 = vmax.f32 %v473, 0.0
    %v584 = vmax.f32 %v476, 0.0
    %v585 = vmax.f32 %v481, 0.0
    %v586 = vmax.f32 %v484, 0.0
    %v587 = vmax.f32 %v489, 0.0
    %v588 = vmax.f32 %v492, 0.0
    %v589 = vmax.f32 %v497, 0.0
    %v590 = vmax.f32 %v500, 0.0
    %v591 = vmax.f32 %v505, 0.0
    %v592 = vmax.f32 %v508, 0.0
    %v593 = vmax.f32 %v513, 0.0
    %v594 = vmax.f32 %v516, 0.0
    %v595 = vmax.f32 %v521, 0.0
    %v596 = vmax.f32 %v524, 0.0
    %v597 = vmax.f32 %v529, 0.0
    %v598 = vmax.f32 %v532, 0.0
    %v599 = vpack.c.bf16 %v536, %v535
    %v600 = vpack.c.bf16 %v538, %v537
    %v601 = vpack.c.bf16 %v540, %v539
    %v602 = vpack.c.bf16 %v542, %v541
    %v603 = vpack.c.bf16 %v544, %v543
    %v604 = vpack.c.bf16 %v546, %v545
    %v605 = vpack.c.bf16 %v548, %v547
    %v606 = vpack.c.bf16 %v550, %v549
    %v607 = vpack.c.bf16 %v552, %v551
    %v608 = vpack.c.bf16 %v554, %v553
    %v609 = vpack.c.bf16 %v556, %v555
    %v610 = vpack.c.bf16 %v558, %v557
    %v611 = vpack.c.bf16 %v560, %v559
    %v612 = vpack.c.bf16 %v562, %v561
    %v613 = vpack.c.bf16 %v564, %v563
    %v614 = vpack.c.bf16 %v566, %v565
    %v615 = vpack.c.bf16 %v568, %v567
    %v616 = vpack.c.bf16 %v570, %v569
    %v617 = vpack.c.bf16 %v572, %v571
    %v618 = vpack.c.bf16 %v574, %v573
    %v619 = vpack.c.bf16 %v576, %v575
    %v620 = vpack.c.bf16 %v578, %v577
    %v621 = vpack.c.bf16 %v580, %v579
    %v622 = vpack.c.bf16 %v582, %v581
    %v623 = vpack.c.bf16 %v584, %v583
    %v624 = vpack.c.bf16 %v586, %v585
    %v625 = vpack.c.bf16 %v588, %v587
    %v626 = vpack.c.bf16 %v590, %v589
    %v627 = vpack.c.bf16 %v592, %v591
    %v628 = vpack.c.bf16 %v594, %v593
    %v629 = vpack.c.bf16 %v596, %v595
    %v630 = vpack.c.bf16 %v598, %v597
    %v631 = vld [vmem:[%s3] sm:$0xf]
    %v632 = vld [vmem:[%s3 + $0x4] sm:$0xf]
    %v633 = vld [vmem:[%s3 + $0x8] sm:$0xf]
    %v634 = vld [vmem:[%s3 + $0xc] sm:$0xf]
    %v635 = vld [vmem:[%s3 + $0x10] sm:$0xf]
    %v636 = vld [vmem:[%s3 + $0x14] sm:$0xf]
    %v637 = vld [vmem:[%s3 + $0x18] sm:$0xf]
    %v638 = vld [vmem:[%s3 + $0x1c] sm:$0xf]
    %v639 = vld [vmem:[%s3 + $0x20] sm:$0xf]
    %v640 = vld [vmem:[%s3 + $0x24] sm:$0xf]
    %v641 = vld [vmem:[%s3 + $0x28] sm:$0xf]
    %v642 = vld [vmem:[%s3 + $0x2c] sm:$0xf]
    %v643 = vld [vmem:[%s3 + $0x30] sm:$0xf]
    %v644 = vld [vmem:[%s3 + $0x34] sm:$0xf]
    %v645 = vld [vmem:[%s3 + $0x38] sm:$0xf]
    %v646 = vld [vmem:[%s3 + $0x3c] sm:$0xf]
    %v648 = vlaneseq
    %v649 = vshrl.u32 %v648, 7
    %v650 = vsub.s32 0, %v649
    %v651 = vrot.slane %v29, %v650
    %v669 = vunpack.c.l.b16 %v631
    %v670 = vunpack.c.l.b16 %v632
    %v671 = vunpack.c.l.b16 %v633
    %v672 = vunpack.c.l.b16 %v634
    %v673 = vunpack.c.l.b16 %v635
    %v674 = vunpack.c.l.b16 %v636
    %v675 = vunpack.c.l.b16 %v637
    %v676 = vunpack.c.l.b16 %v638
    %v677 = vunpack.c.l.b16 %v639
    %v678 = vunpack.c.l.b16 %v640
    %v679 = vunpack.c.l.b16 %v641
    %v680 = vunpack.c.l.b16 %v642
    %v681 = vunpack.c.l.b16 %v643
    %v682 = vunpack.c.l.b16 %v644
    %v683 = vunpack.c.l.b16 %v645
    %v684 = vunpack.c.l.b16 %v646
    %v685 = vpack.c.b16 %v670, %v669
    %v686 = vpack.c.b16 %v672, %v671
    %v687 = vpack.c.b16 %v674, %v673
    %v688 = vpack.c.b16 %v676, %v675
    %v689 = vpack.c.b16 %v678, %v677
    %v690 = vpack.c.b16 %v680, %v679
    %v691 = vpack.c.b16 %v682, %v681
    %v692 = vpack.c.b16 %v684, %v683
    %701 = vmatprep.subr.bf16.mxu0 0
    %702 = vmatpush1.bf16.msra.mxu0 %v685
    %703 = vmatprep.subr.bf16.mxu0 0
    %704 = vmatpush1.bf16.msra.mxu0 %v686
    %705 = vmatprep.subr.bf16.mxu0 0
    %706 = vmatpush1.bf16.msra.mxu0 %v687
    %707 = vmatprep.subr.bf16.mxu0 0
    %708 = vmatpush1.bf16.msra.mxu0 %v688
    %709 = vmatprep.subr.bf16.mxu0 0
    %710 = vmatpush1.bf16.msra.mxu0 %v689
    %711 = vmatprep.subr.bf16.mxu0 0
    %712 = vmatpush1.bf16.msra.mxu0 %v690
    %713 = vmatprep.subr.bf16.mxu0 0
    %714 = vmatpush1.bf16.msra.mxu0 %v691
    %715 = vmatprep.subr.bf16.mxu0 0
    %716 = vmatpush1.bf16.msra.mxu0 %v692
    %717 = vmatprep.subr.bf16.mxu0 0
    %718 = vmatpush1.bf16.msra.mxu0 0
    %719 = vmatprep.subr.bf16.mxu0 0
    %720 = vmatpush1.bf16.msra.mxu0 0
    %721 = vmatprep.subr.bf16.mxu0 0
    %722 = vmatpush1.bf16.msra.mxu0 0
    %723 = vmatprep.subr.bf16.mxu0 0
    %724 = vmatpush1.bf16.msra.mxu0 0
    %725 = vmatprep.subr.bf16.mxu0 0
    %726 = vmatpush1.bf16.msra.mxu0 0
    %727 = vmatprep.subr.bf16.mxu0 0
    %728 = vmatpush1.bf16.msra.mxu0 0
    %729 = vmatprep.subr.bf16.mxu0 0
    %730 = vmatpush1.bf16.msra.mxu0 0
    %731 = vmatprep.subr.bf16.mxu0 0
    %732 = vmatpush1.bf16.msra.mxu0 0
    %733 = vmatprep.mubr.bf16.mxu0 0
    %734 = vmatmul.mubr.bf16.gmra.mrb[0].mxu0 %v599
    %v735 = vpop.f32.mrb[0].mxu0
    %v736 = vadd.f32 %v651, %v735
    %v737 = vpop.f32.mrb[0].mxu0
    %v738 = vpop.f32.mrb[0].mxu0
    %v739 = vadd.f32 %v651, %v738
    %v740 = vpop.f32.mrb[0].mxu0
    %741 = vmatprep.mubr.bf16.mxu0 0
    %742 = vmatmul.mubr.bf16.gmra.mrb[0].mxu0 %v600
    %v743 = vpop.f32.mrb[0].mxu0
    %v744 = vadd.f32 %v651, %v743
    %v745 = vpop.f32.mrb[0].mxu0
    %v746 = vpop.f32.mrb[0].mxu0
    %v747 = vadd.f32 %v651, %v746
    %v748 = vpop.f32.mrb[0].mxu0
    %749 = vmatprep.mubr.bf16.mxu0 0
    %750 = vmatmul.mubr.bf16.gmra.mrb[0].mxu0 %v601
    %v751 = vpop.f32.mrb[0].mxu0
    %v752 = vadd.f32 %v651, %v751
    %v753 = vpop.f32.mrb[0].mxu0
    %v754 = vpop.f32.mrb[0].mxu0
    %v755 = vadd.f32 %v651, %v754
    %v756 = vpop.f32.mrb[0].mxu0
    %757 = vmatprep.mubr.bf16.mxu0 0
    %758 = vmatmul.mubr.bf16.gmra.mrb[0].mxu0 %v602
    %v759 = vpop.f32.mrb[0].mxu0
    %v760 = vadd.f32 %v651, %v759
    %v761 = vpop.f32.mrb[0].mxu0
    %v762 = vpop.f32.mrb[0].mxu0
    %v763 = vadd.f32 %v651, %v762
    %v764 = vpop.f32.mrb[0].mxu0
    %765 = vmatprep.mubr.bf16.mxu0 0
    %766 = vmatmul.mubr.bf16.gmra.mrb[0].mxu0 %v603
    %v767 = vpop.f32.mrb[0].mxu0
    %v768 = vadd.f32 %v651, %v767
    %v769 = vpop.f32.mrb[0].mxu0
    %v770 = vpop.f32.mrb[0].mxu0
    %v771 = vadd.f32 %v651, %v770
    %v772 = vpop.f32.mrb[0].mxu0
    %773 = vmatprep.mubr.bf16.mxu0 0
    %774 = vmatmul.mubr.bf16.gmra.mrb[0].mxu0 %v604
    %v775 = vpop.f32.mrb[0].mxu0
    %v776 = vadd.f32 %v651, %v775
    %v777 = vpop.f32.mrb[0].mxu0
    %v778 = vpop.f32.mrb[0].mxu0
    %v779 = vadd.f32 %v651, %v778
    %v780 = vpop.f32.mrb[0].mxu0
    %781 = vmatprep.mubr.bf16.mxu0 0
    %782 = vmatmul.mubr.bf16.gmra.mrb[0].mxu0 %v605
    %v783 = vpop.f32.mrb[0].mxu0
    %v784 = vadd.f32 %v651, %v783
    %v785 = vpop.f32.mrb[0].mxu0
    %v786 = vpop.f32.mrb[0].mxu0
    %v787 = vadd.f32 %v651, %v786
    %v788 = vpop.f32.mrb[0].mxu0
    %789 = vmatprep.mubr.bf16.mxu0 0
    %790 = vmatmul.mubr.bf16.gmra.mrb[0].mxu0 %v606
    %v791 = vpop.f32.mrb[0].mxu0
    %v792 = vadd.f32 %v651, %v791
    %v793 = vpop.f32.mrb[0].mxu0
    %v794 = vpop.f32.mrb[0].mxu0
    %v795 = vadd.f32 %v651, %v794
    %v796 = vpop.f32.mrb[0].mxu0
    %797 = vmatprep.mubr.bf16.mxu0 0
    %798 = vmatmul.mubr.bf16.gmra.mrb[0].mxu0 %v607
    %v799 = vpop.f32.mrb[0].mxu0
    %v800 = vadd.f32 %v651, %v799
    %v801 = vpop.f32.mrb[0].mxu0
    %v802 = vpop.f32.mrb[0].mxu0
    %v803 = vadd.f32 %v651, %v802
    %v804 = vpop.f32.mrb[0].mxu0
    %805 = vmatprep.mubr.bf16.mxu0 0
    %806 = vmatmul.mubr.bf16.gmra.mrb[0].mxu0 %v608
    %v807 = vpop.f32.mrb[0].mxu0
    %v808 = vadd.f32 %v651, %v807
    %v809 = vpop.f32.mrb[0].mxu0
    %v810 = vpop.f32.mrb[0].mxu0
    %v811 = vadd.f32 %v651, %v810
    %v812 = vpop.f32.mrb[0].mxu0
    %813 = vmatprep.mubr.bf16.mxu0 0
    %814 = vmatmul.mubr.bf16.gmra.mrb[0].mxu0 %v609
    %v815 = vpop.f32.mrb[0].mxu0
    %v816 = vadd.f32 %v651, %v815
    %v817 = vpop.f32.mrb[0].mxu0
    %v818 = vpop.f32.mrb[0].mxu0
    %v819 = vadd.f32 %v651, %v818
    %v820 = vpop.f32.mrb[0].mxu0
    %821 = vmatprep.mubr.bf16.mxu0 0
    %822 = vmatmul.mubr.bf16.gmra.mrb[0].mxu0 %v610
    %v823 = vpop.f32.mrb[0].mxu0
    %v824 = vadd.f32 %v651, %v823
    %v825 = vpop.f32.mrb[0].mxu0
    %v826 = vpop.f32.mrb[0].mxu0
    %v827 = vadd.f32 %v651, %v826
    %v828 = vpop.f32.mrb[0].mxu0
    %829 = vmatprep.mubr.bf16.mxu0 0
    %830 = vmatmul.mubr.bf16.gmra.mrb[0].mxu0 %v611
    %v831 = vpop.f32.mrb[0].mxu0
    %v832 = vadd.f32 %v651, %v831
    %v833 = vpop.f32.mrb[0].mxu0
    %v834 = vpop.f32.mrb[0].mxu0
    %v835 = vadd.f32 %v651, %v834
    %v836 = vpop.f32.mrb[0].mxu0
    %837 = vmatprep.mubr.bf16.mxu0 0
    %838 = vmatmul.mubr.bf16.gmra.mrb[0].mxu0 %v612
    %v839 = vpop.f32.mrb[0].mxu0
    %v840 = vadd.f32 %v651, %v839
    %v841 = vpop.f32.mrb[0].mxu0
    %v842 = vpop.f32.mrb[0].mxu0
    %v843 = vadd.f32 %v651, %v842
    %v844 = vpop.f32.mrb[0].mxu0
    %845 = vmatprep.mubr.bf16.mxu0 0
    %846 = vmatmul.mubr.bf16.gmra.mrb[0].mxu0 %v613
    %v847 = vpop.f32.mrb[0].mxu0
    %v848 = vadd.f32 %v651, %v847
    %v849 = vpop.f32.mrb[0].mxu0
    %v850 = vpop.f32.mrb[0].mxu0
    %v851 = vadd.f32 %v651, %v850
    %v852 = vpop.f32.mrb[0].mxu0
    %853 = vmatprep.mubr.bf16.mxu0 0
    %854 = vmatmul.mubr.bf16.gmra.mrb[0].mxu0 %v614
    %v855 = vpop.f32.mrb[0].mxu0
    %v856 = vadd.f32 %v651, %v855
    %v857 = vpop.f32.mrb[0].mxu0
    %v858 = vpop.f32.mrb[0].mxu0
    %v859 = vadd.f32 %v651, %v858
    %v860 = vpop.f32.mrb[0].mxu0
    %861 = vmatprep.mubr.bf16.mxu0 0
    %862 = vmatmul.mubr.bf16.gmra.mrb[0].mxu0 %v615
    %v863 = vpop.f32.mrb[0].mxu0
    %v864 = vadd.f32 %v651, %v863
    %v865 = vpop.f32.mrb[0].mxu0
    %v866 = vpop.f32.mrb[0].mxu0
    %v867 = vadd.f32 %v651, %v866
    %v868 = vpop.f32.mrb[0].mxu0
    %869 = vmatprep.mubr.bf16.mxu0 0
    %870 = vmatmul.mubr.bf16.gmra.mrb[0].mxu0 %v616
    %v871 = vpop.f32.mrb[0].mxu0
    %v872 = vadd.f32 %v651, %v871
    %v873 = vpop.f32.mrb[0].mxu0
    %v874 = vpop.f32.mrb[0].mxu0
    %v875 = vadd.f32 %v651, %v874
    %v876 = vpop.f32.mrb[0].mxu0
    %877 = vmatprep.mubr.bf16.mxu0 0
    %878 = vmatmul.mubr.bf16.gmra.mrb[0].mxu0 %v617
    %v879 = vpop.f32.mrb[0].mxu0
    %v880 = vadd.f32 %v651, %v879
    %v881 = vpop.f32.mrb[0].mxu0
    %v882 = vpop.f32.mrb[0].mxu0
    %v883 = vadd.f32 %v651, %v882
    %v884 = vpop.f32.mrb[0].mxu0
    %885 = vmatprep.mubr.bf16.mxu0 0
    %886 = vmatmul.mubr.bf16.gmra.mrb[0].mxu0 %v618
    %v887 = vpop.f32.mrb[0].mxu0
    %v888 = vadd.f32 %v651, %v887
    %v889 = vpop.f32.mrb[0].mxu0
    %v890 = vpop.f32.mrb[0].mxu0
    %v891 = vadd.f32 %v651, %v890
    %v892 = vpop.f32.mrb[0].mxu0
    %893 = vmatprep.mubr.bf16.mxu0 0
    %894 = vmatmul.mubr.bf16.gmra.mrb[0].mxu0 %v619
    %v895 = vpop.f32.mrb[0].mxu0
    %v896 = vadd.f32 %v651, %v895
    %v897 = vpop.f32.mrb[0].mxu0
    %v898 = vpop.f32.mrb[0].mxu0
    %v899 = vadd.f32 %v651, %v898
    %v900 = vpop.f32.mrb[0].mxu0
    %901 = vmatprep.mubr.bf16.mxu0 0
    %902 = vmatmul.mubr.bf16.gmra.mrb[0].mxu0 %v620
    %v903 = vpop.f32.mrb[0].mxu0
    %v904 = vadd.f32 %v651, %v903
    %v905 = vpop.f32.mrb[0].mxu0
    %v906 = vpop.f32.mrb[0].mxu0
    %v907 = vadd.f32 %v651, %v906
    %v908 = vpop.f32.mrb[0].mxu0
    %909 = vmatprep.mubr.bf16.mxu0 0
    %910 = vmatmul.mubr.bf16.gmra.mrb[0].mxu0 %v621
    %v911 = vpop.f32.mrb[0].mxu0
    %v912 = vadd.f32 %v651, %v911
    %v913 = vpop.f32.mrb[0].mxu0
    %v914 = vpop.f32.mrb[0].mxu0
    %v915 = vadd.f32 %v651, %v914
    %v916 = vpop.f32.mrb[0].mxu0
    %917 = vmatprep.mubr.bf16.mxu0 0
    %918 = vmatmul.mubr.bf16.gmra.mrb[0].mxu0 %v622
    %v919 = vpop.f32.mrb[0].mxu0
    %v920 = vadd.f32 %v651, %v919
    %v921 = vpop.f32.mrb[0].mxu0
    %v922 = vpop.f32.mrb[0].mxu0
    %v923 = vadd.f32 %v651, %v922
    %v924 = vpop.f32.mrb[0].mxu0
    %925 = vmatprep.mubr.bf16.mxu0 0
    %926 = vmatmul.mubr.bf16.gmra.mrb[0].mxu0 %v623
    %v927 = vpop.f32.mrb[0].mxu0
    %v928 = vadd.f32 %v651, %v927
    %v929 = vpop.f32.mrb[0].mxu0
    %v930 = vpop.f32.mrb[0].mxu0
    %v931 = vadd.f32 %v651, %v930
    %v932 = vpop.f32.mrb[0].mxu0
    %933 = vmatprep.mubr.bf16.mxu0 0
    %934 = vmatmul.mubr.bf16.gmra.mrb[0].mxu0 %v624
    %v935 = vpop.f32.mrb[0].mxu0
    %v936 = vadd.f32 %v651, %v935
    %v937 = vpop.f32.mrb[0].mxu0
    %v938 = vpop.f32.mrb[0].mxu0
    %v939 = vadd.f32 %v651, %v938
    %v940 = vpop.f32.mrb[0].mxu0
    %941 = vmatprep.mubr.bf16.mxu0 0
    %942 = vmatmul.mubr.bf16.gmra.mrb[0].mxu0 %v625
    %v943 = vpop.f32.mrb[0].mxu0
    %v944 = vadd.f32 %v651, %v943
    %v945 = vpop.f32.mrb[0].mxu0
    %v946 = vpop.f32.mrb[0].mxu0
    %v947 = vadd.f32 %v651, %v946
    %v948 = vpop.f32.mrb[0].mxu0
    %949 = vmatprep.mubr.bf16.mxu0 0
    %950 = vmatmul.mubr.bf16.gmra.mrb[0].mxu0 %v626
    %v951 = vpop.f32.mrb[0].mxu0
    %v952 = vadd.f32 %v651, %v951
    %v953 = vpop.f32.mrb[0].mxu0
    %v954 = vpop.f32.mrb[0].mxu0
    %v955 = vadd.f32 %v651, %v954
    %v956 = vpop.f32.mrb[0].mxu0
    %957 = vmatprep.mubr.bf16.mxu0 0
    %958 = vmatmul.mubr.bf16.gmra.mrb[0].mxu0 %v627
    %v959 = vpop.f32.mrb[0].mxu0
    %v960 = vadd.f32 %v651, %v959
    %v961 = vpop.f32.mrb[0].mxu0
    %v962 = vpop.f32.mrb[0].mxu0
    %v963 = vadd.f32 %v651, %v962
    %v964 = vpop.f32.mrb[0].mxu0
    %965 = vmatprep.mubr.bf16.mxu0 0
    %966 = vmatmul.mubr.bf16.gmra.mrb[0].mxu0 %v628
    %v967 = vpop.f32.mrb[0].mxu0
    %v968 = vadd.f32 %v651, %v967
    %v969 = vpop.f32.mrb[0].mxu0
    %v970 = vpop.f32.mrb[0].mxu0
    %v971 = vadd.f32 %v651, %v970
    %v972 = vpop.f32.mrb[0].mxu0
    %973 = vmatprep.mubr.bf16.mxu0 0
    %974 = vmatmul.mubr.bf16.gmra.mrb[0].mxu0 %v629
    %v975 = vpop.f32.mrb[0].mxu0
    %v976 = vadd.f32 %v651, %v975
    %v977 = vpop.f32.mrb[0].mxu0
    %v978 = vpop.f32.mrb[0].mxu0
    %v979 = vadd.f32 %v651, %v978
    %v980 = vpop.f32.mrb[0].mxu0
    %981 = vmatprep.mubr.bf16.mxu0 0
    %982 = vmatmul.mubr.bf16.gmra.mrb[0].mxu0 %v630
    %v983 = vpop.f32.mrb[0].mxu0
    %v984 = vadd.f32 %v651, %v983
    %v985 = vpop.f32.mrb[0].mxu0
    %v986 = vpop.f32.mrb[0].mxu0
    %v987 = vadd.f32 %v651, %v986
    %v988 = vpop.f32.mrb[0].mxu0
    %989 = vdwg.mxu0
    %v990 = vmax.f32 %v736, 0.0
    %v991 = vmax.f32 %v739, 0.0
    %v992 = vmax.f32 %v744, 0.0
    %v993 = vmax.f32 %v747, 0.0
    %v994 = vmax.f32 %v752, 0.0
    %v995 = vmax.f32 %v755, 0.0
    %v996 = vmax.f32 %v760, 0.0
    %v997 = vmax.f32 %v763, 0.0
    %v998 = vmax.f32 %v768, 0.0
    %v999 = vmax.f32 %v771, 0.0
    %v1000 = vmax.f32 %v776, 0.0
    %v1001 = vmax.f32 %v779, 0.0
    %v1002 = vmax.f32 %v784, 0.0
    %v1003 = vmax.f32 %v787, 0.0
    %v1004 = vmax.f32 %v792, 0.0
    %v1005 = vmax.f32 %v795, 0.0
    %v1006 = vmax.f32 %v800, 0.0
    %v1007 = vmax.f32 %v803, 0.0
    %v1008 = vmax.f32 %v808, 0.0
    %v1009 = vmax.f32 %v811, 0.0
    %v1010 = vmax.f32 %v816, 0.0
    %v1011 = vmax.f32 %v819, 0.0
    %v1012 = vmax.f32 %v824, 0.0
    %v1013 = vmax.f32 %v827, 0.0
    %v1014 = vmax.f32 %v832, 0.0
    %v1015 = vmax.f32 %v835, 0.0
    %v1016 = vmax.f32 %v840, 0.0
    %v1017 = vmax.f32 %v843, 0.0
    %v1018 = vmax.f32 %v848, 0.0
    %v1019 = vmax.f32 %v851, 0.0
    %v1020 = vmax.f32 %v856, 0.0
    %v1021 = vmax.f32 %v859, 0.0
    %v1022 = vmax.f32 %v864, 0.0
    %v1023 = vmax.f32 %v867, 0.0
    %v1024 = vmax.f32 %v872, 0.0
    %v1025 = vmax.f32 %v875, 0.0
    %v1026 = vmax.f32 %v880, 0.0
    %v1027 = vmax.f32 %v883, 0.0
    %v1028 = vmax.f32 %v888, 0.0
    %v1029 = vmax.f32 %v891, 0.0
    %v1030 = vmax.f32 %v896, 0.0
    %v1031 = vmax.f32 %v899, 0.0
    %v1032 = vmax.f32 %v904, 0.0
    %v1033 = vmax.f32 %v907, 0.0
    %v1034 = vmax.f32 %v912, 0.0
    %v1035 = vmax.f32 %v915, 0.0
    %v1036 = vmax.f32 %v920, 0.0
    %v1037 = vmax.f32 %v923, 0.0
    %v1038 = vmax.f32 %v928, 0.0
    %v1039 = vmax.f32 %v931, 0.0
    %v1040 = vmax.f32 %v936, 0.0
    %v1041 = vmax.f32 %v939, 0.0
    %v1042 = vmax.f32 %v944, 0.0
    %v1043 = vmax.f32 %v947, 0.0
    %v1044 = vmax.f32 %v952, 0.0
    %v1045 = vmax.f32 %v955, 0.0
    %v1046 = vmax.f32 %v960, 0.0
    %v1047 = vmax.f32 %v963, 0.0
    %v1048 = vmax.f32 %v968, 0.0
    %v1049 = vmax.f32 %v971, 0.0
    %v1050 = vmax.f32 %v976, 0.0
    %v1051 = vmax.f32 %v979, 0.0
    %v1052 = vmax.f32 %v984, 0.0
    %v1053 = vmax.f32 %v987, 0.0
    %v1054 = vpack.c.bf16 %v991, %v990
    %v1055 = vpack.c.bf16 %v993, %v992
    %v1056 = vpack.c.bf16 %v995, %v994
    %v1057 = vpack.c.bf16 %v997, %v996
    %v1058 = vpack.c.bf16 %v999, %v998
    %v1059 = vpack.c.bf16 %v1001, %v1000
    %v1060 = vpack.c.bf16 %v1003, %v1002
    %v1061 = vpack.c.bf16 %v1005, %v1004
    %v1062 = vpack.c.bf16 %v1007, %v1006
    %v1063 = vpack.c.bf16 %v1009, %v1008
    %v1064 = vpack.c.bf16 %v1011, %v1010
    %v1065 = vpack.c.bf16 %v1013, %v1012
    %v1066 = vpack.c.bf16 %v1015, %v1014
    %v1067 = vpack.c.bf16 %v1017, %v1016
    %v1068 = vpack.c.bf16 %v1019, %v1018
    %v1069 = vpack.c.bf16 %v1021, %v1020
    %v1070 = vpack.c.bf16 %v1023, %v1022
    %v1071 = vpack.c.bf16 %v1025, %v1024
    %v1072 = vpack.c.bf16 %v1027, %v1026
    %v1073 = vpack.c.bf16 %v1029, %v1028
    %v1074 = vpack.c.bf16 %v1031, %v1030
    %v1075 = vpack.c.bf16 %v1033, %v1032
    %v1076 = vpack.c.bf16 %v1035, %v1034
    %v1077 = vpack.c.bf16 %v1037, %v1036
    %v1078 = vpack.c.bf16 %v1039, %v1038
    %v1079 = vpack.c.bf16 %v1041, %v1040
    %v1080 = vpack.c.bf16 %v1043, %v1042
    %v1081 = vpack.c.bf16 %v1045, %v1044
    %v1082 = vpack.c.bf16 %v1047, %v1046
    %v1083 = vpack.c.bf16 %v1049, %v1048
    %v1084 = vpack.c.bf16 %v1051, %v1050
    %v1085 = vpack.c.bf16 %v1053, %v1052
    %v1086 = vld [vmem:[%s5] sm:$0xf]
    %v1087 = vld [vmem:[%s5 + $0x4] sm:$0xf]
    %v1088 = vld [vmem:[%s5 + $0x8] sm:$0xf]
    %v1089 = vld [vmem:[%s5 + $0xc] sm:$0xf]
    %v1090 = vld [vmem:[%s5 + $0x10] sm:$0xf]
    %v1091 = vld [vmem:[%s5 + $0x14] sm:$0xf]
    %v1092 = vld [vmem:[%s5 + $0x18] sm:$0xf]
    %v1093 = vld [vmem:[%s5 + $0x1c] sm:$0xf]
    %v1094 = vld [vmem:[%s5 + $0x20] sm:$0xf]
    %v1095 = vld [vmem:[%s5 + $0x24] sm:$0xf]
    %v1096 = vld [vmem:[%s5 + $0x28] sm:$0xf]
    %v1097 = vld [vmem:[%s5 + $0x2c] sm:$0xf]
    %v1098 = vld [vmem:[%s5 + $0x30] sm:$0xf]
    %v1099 = vld [vmem:[%s5 + $0x34] sm:$0xf]
    %v1100 = vld [vmem:[%s5 + $0x38] sm:$0xf]
    %v1101 = vld [vmem:[%s5 + $0x3c] sm:$0xf]
    %v1103 = vlaneseq
    %v1104 = vshrl.u32 %v1103, 7
    %v1105 = vsub.s32 0, %v1104
    %v1106 = vrot.slane %v30, %v1105
    %v1124 = vunpack.c.l.b16 %v1086
    %v1125 = vunpack.c.l.b16 %v1087
    %v1126 = vunpack.c.l.b16 %v1088
    %v1127 = vunpack.c.l.b16 %v1089
    %v1128 = vunpack.c.l.b16 %v1090
    %v1129 = vunpack.c.l.b16 %v1091
    %v1130 = vunpack.c.l.b16 %v1092
    %v1131 = vunpack.c.l.b16 %v1093
    %v1132 = vunpack.c.l.b16 %v1094
    %v1133 = vunpack.c.l.b16 %v1095
    %v1134 = vunpack.c.l.b16 %v1096
    %v1135 = vunpack.c.l.b16 %v1097
    %v1136 = vunpack.c.l.b16 %v1098
    %v1137 = vunpack.c.l.b16 %v1099
    %v1138 = vunpack.c.l.b16 %v1100
    %v1139 = vunpack.c.l.b16 %v1101
    %v1140 = vpack.c.b16 %v1125, %v1124
    %v1141 = vpack.c.b16 %v1127, %v1126
    %v1142 = vpack.c.b16 %v1129, %v1128
    %v1143 = vpack.c.b16 %v1131, %v1130
    %v1144 = vpack.c.b16 %v1133, %v1132
    %v1145 = vpack.c.b16 %v1135, %v1134
    %v1146 = vpack.c.b16 %v1137, %v1136
    %v1147 = vpack.c.b16 %v1139, %v1138
    %1156 = vmatprep.subr.bf16.mxu0 0
    %1157 = vmatpush1.bf16.msra.mxu0 %v1140
    %1158 = vmatprep.subr.bf16.mxu0 0
    %1159 = vmatpush1.bf16.msra.mxu0 %v1141
    %1160 = vmatprep.subr.bf16.mxu0 0
    %1161 = vmatpush1.bf16.msra.mxu0 %v1142
    %1162 = vmatprep.subr.bf16.mxu0 0
    %1163 = vmatpush1.bf16.msra.mxu0 %v1143
    %1164 = vmatprep.subr.bf16.mxu0 0
    %1165 = vmatpush1.bf16.msra.mxu0 %v1144
    %1166 = vmatprep.subr.bf16.mxu0 0
    %1167 = vmatpush1.bf16.msra.mxu0 %v1145
    %1168 = vmatprep.subr.bf16.mxu0 0
    %1169 = vmatpush1.bf16.msra.mxu0 %v1146
    %1170 = vmatprep.subr.bf16.mxu0 0
    %1171 = vmatpush1.bf16.msra.mxu0 %v1147
    %1172 = vmatprep.subr.bf16.mxu0 0
    %1173 = vmatpush1.bf16.msra.mxu0 0
    %1174 = vmatprep.subr.bf16.mxu0 0
    %1175 = vmatpush1.bf16.msra.mxu0 0
    %1176 = vmatprep.subr.bf16.mxu0 0
    %1177 = vmatpush1.bf16.msra.mxu0 0
    %1178 = vmatprep.subr.bf16.mxu0 0
    %1179 = vmatpush1.bf16.msra.mxu0 0
    %1180 = vmatprep.subr.bf16.mxu0 0
    %1181 = vmatpush1.bf16.msra.mxu0 0
    %1182 = vmatprep.subr.bf16.mxu0 0
    %1183 = vmatpush1.bf16.msra.mxu0 0
    %1184 = vmatprep.subr.bf16.mxu0 0
    %1185 = vmatpush1.bf16.msra.mxu0 0
    %1186 = vmatprep.subr.bf16.mxu0 0
    %1187 = vmatpush1.bf16.msra.mxu0 0
    %1188 = vmatprep.mubr.bf16.mxu0 0
    %1189 = vmatmul.mubr.bf16.gmra.mrb[0].mxu0 %v1054
    %v1190 = vpop.f32.mrb[0].mxu0
    %v1191 = vadd.f32 %v1106, %v1190
    %v1192 = vpop.f32.mrb[0].mxu0
    %v1193 = vpop.f32.mrb[0].mxu0
    %v1194 = vadd.f32 %v1106, %v1193
    %v1195 = vpop.f32.mrb[0].mxu0
    %1196 = vmatprep.mubr.bf16.mxu0 0
    %1197 = vmatmul.mubr.bf16.gmra.mrb[0].mxu0 %v1055
    %v1198 = vpop.f32.mrb[0].mxu0
    %v1199 = vadd.f32 %v1106, %v1198
    %v1200 = vpop.f32.mrb[0].mxu0
    %v1201 = vpop.f32.mrb[0].mxu0
    %v1202 = vadd.f32 %v1106, %v1201
    %v1203 = vpop.f32.mrb[0].mxu0
    %1204 = vmatprep.mubr.bf16.mxu0 0
    %1205 = vmatmul.mubr.bf16.gmra.mrb[0].mxu0 %v1056
    %v1206 = vpop.f32.mrb[0].mxu0
    %v1207 = vadd.f32 %v1106, %v1206
    %v1208 = vpop.f32.mrb[0].mxu0
    %v1209 = vpop.f32.mrb[0].mxu0
    %v1210 = vadd.f32 %v1106, %v1209
    %v1211 = vpop.f32.mrb[0].mxu0
    %1212 = vmatprep.mubr.bf16.mxu0 0
    %1213 = vmatmul.mubr.bf16.gmra.mrb[0].mxu0 %v1057
    %v1214 = vpop.f32.mrb[0].mxu0
    %v1215 = vadd.f32 %v1106, %v1214
    %v1216 = vpop.f32.mrb[0].mxu0
    %v1217 = vpop.f32.mrb[0].mxu0
    %v1218 = vadd.f32 %v1106, %v1217
    %v1219 = vpop.f32.mrb[0].mxu0
    %1220 = vmatprep.mubr.bf16.mxu0 0
    %1221 = vmatmul.mubr.bf16.gmra.mrb[0].mxu0 %v1058
    %v1222 = vpop.f32.mrb[0].mxu0
    %v1223 = vadd.f32 %v1106, %v1222
    %v1224 = vpop.f32.mrb[0].mxu0
    %v1225 = vpop.f32.mrb[0].mxu0
    %v1226 = vadd.f32 %v1106, %v1225
    %v1227 = vpop.f32.mrb[0].mxu0
    %1228 = vmatprep.mubr.bf16.mxu0 0
    %1229 = vmatmul.mubr.bf16.gmra.mrb[0].mxu0 %v1059
    %v1230 = vpop.f32.mrb[0].mxu0
    %v1231 = vadd.f32 %v1106, %v1230
    %v1232 = vpop.f32.mrb[0].mxu0
    %v1233 = vpop.f32.mrb[0].mxu0
    %v1234 = vadd.f32 %v1106, %v1233
    %v1235 = vpop.f32.mrb[0].mxu0
    %1236 = vmatprep.mubr.bf16.mxu0 0
    %1237 = vmatmul.mubr.bf16.gmra.mrb[0].mxu0 %v1060
    %v1238 = vpop.f32.mrb[0].mxu0
    %v1239 = vadd.f32 %v1106, %v1238
    %v1240 = vpop.f32.mrb[0].mxu0
    %v1241 = vpop.f32.mrb[0].mxu0
    %v1242 = vadd.f32 %v1106, %v1241
    %v1243 = vpop.f32.mrb[0].mxu0
    %1244 = vmatprep.mubr.bf16.mxu0 0
    %1245 = vmatmul.mubr.bf16.gmra.mrb[0].mxu0 %v1061
    %v1246 = vpop.f32.mrb[0].mxu0
    %v1247 = vadd.f32 %v1106, %v1246
    %v1248 = vpop.f32.mrb[0].mxu0
    %v1249 = vpop.f32.mrb[0].mxu0
    %v1250 = vadd.f32 %v1106, %v1249
    %v1251 = vpop.f32.mrb[0].mxu0
    %1252 = vmatprep.mubr.bf16.mxu0 0
    %1253 = vmatmul.mubr.bf16.gmra.mrb[0].mxu0 %v1062
    %v1254 = vpop.f32.mrb[0].mxu0
    %v1255 = vadd.f32 %v1106, %v1254
    %v1256 = vpop.f32.mrb[0].mxu0
    %v1257 = vpop.f32.mrb[0].mxu0
    %v1258 = vadd.f32 %v1106, %v1257
    %v1259 = vpop.f32.mrb[0].mxu0
    %1260 = vmatprep.mubr.bf16.mxu0 0
    %1261 = vmatmul.mubr.bf16.gmra.mrb[0].mxu0 %v1063
    %v1262 = vpop.f32.mrb[0].mxu0
    %v1263 = vadd.f32 %v1106, %v1262
    %v1264 = vpop.f32.mrb[0].mxu0
    %v1265 = vpop.f32.mrb[0].mxu0
    %v1266 = vadd.f32 %v1106, %v1265
    %v1267 = vpop.f32.mrb[0].mxu0
    %1268 = vmatprep.mubr.bf16.mxu0 0
    %1269 = vmatmul.mubr.bf16.gmra.mrb[0].mxu0 %v1064
    %v1270 = vpop.f32.mrb[0].mxu0
    %v1271 = vadd.f32 %v1106, %v1270
    %v1272 = vpop.f32.mrb[0].mxu0
    %v1273 = vpop.f32.mrb[0].mxu0
    %v1274 = vadd.f32 %v1106, %v1273
    %v1275 = vpop.f32.mrb[0].mxu0
    %1276 = vmatprep.mubr.bf16.mxu0 0
    %1277 = vmatmul.mubr.bf16.gmra.mrb[0].mxu0 %v1065
    %v1278 = vpop.f32.mrb[0].mxu0
    %v1279 = vadd.f32 %v1106, %v1278
    %v1280 = vpop.f32.mrb[0].mxu0
    %v1281 = vpop.f32.mrb[0].mxu0
    %v1282 = vadd.f32 %v1106, %v1281
    %v1283 = vpop.f32.mrb[0].mxu0
    %1284 = vmatprep.mubr.bf16.mxu0 0
    %1285 = vmatmul.mubr.bf16.gmra.mrb[0].mxu0 %v1066
    %v1286 = vpop.f32.mrb[0].mxu0
    %v1287 = vadd.f32 %v1106, %v1286
    %v1288 = vpop.f32.mrb[0].mxu0
    %v1289 = vpop.f32.mrb[0].mxu0
    %v1290 = vadd.f32 %v1106, %v1289
    %v1291 = vpop.f32.mrb[0].mxu0
    %1292 = vmatprep.mubr.bf16.mxu0 0
    %1293 = vmatmul.mubr.bf16.gmra.mrb[0].mxu0 %v1067
    %v1294 = vpop.f32.mrb[0].mxu0
    %v1295 = vadd.f32 %v1106, %v1294
    %v1296 = vpop.f32.mrb[0].mxu0
    %v1297 = vpop.f32.mrb[0].mxu0
    %v1298 = vadd.f32 %v1106, %v1297
    %v1299 = vpop.f32.mrb[0].mxu0
    %1300 = vmatprep.mubr.bf16.mxu0 0
    %1301 = vmatmul.mubr.bf16.gmra.mrb[0].mxu0 %v1068
    %v1302 = vpop.f32.mrb[0].mxu0
    %v1303 = vadd.f32 %v1106, %v1302
    %v1304 = vpop.f32.mrb[0].mxu0
    %v1305 = vpop.f32.mrb[0].mxu0
    %v1306 = vadd.f32 %v1106, %v1305
    %v1307 = vpop.f32.mrb[0].mxu0
    %1308 = vmatprep.mubr.bf16.mxu0 0
    %1309 = vmatmul.mubr.bf16.gmra.mrb[0].mxu0 %v1069
    %v1310 = vpop.f32.mrb[0].mxu0
    %v1311 = vadd.f32 %v1106, %v1310
    %v1312 = vpop.f32.mrb[0].mxu0
    %v1313 = vpop.f32.mrb[0].mxu0
    %v1314 = vadd.f32 %v1106, %v1313
    %v1315 = vpop.f32.mrb[0].mxu0
    %1316 = vmatprep.mubr.bf16.mxu0 0
    %1317 = vmatmul.mubr.bf16.gmra.mrb[0].mxu0 %v1070
    %v1318 = vpop.f32.mrb[0].mxu0
    %v1319 = vadd.f32 %v1106, %v1318
    %v1320 = vpop.f32.mrb[0].mxu0
    %v1321 = vpop.f32.mrb[0].mxu0
    %v1322 = vadd.f32 %v1106, %v1321
    %v1323 = vpop.f32.mrb[0].mxu0
    %1324 = vmatprep.mubr.bf16.mxu0 0
    %1325 = vmatmul.mubr.bf16.gmra.mrb[0].mxu0 %v1071
    %v1326 = vpop.f32.mrb[0].mxu0
    %v1327 = vadd.f32 %v1106, %v1326
    %v1328 = vpop.f32.mrb[0].mxu0
    %v1329 = vpop.f32.mrb[0].mxu0
    %v1330 = vadd.f32 %v1106, %v1329
    %v1331 = vpop.f32.mrb[0].mxu0
    %1332 = vmatprep.mubr.bf16.mxu0 0
    %1333 = vmatmul.mubr.bf16.gmra.mrb[0].mxu0 %v1072
    %v1334 = vpop.f32.mrb[0].mxu0
    %v1335 = vadd.f32 %v1106, %v1334
    %v1336 = vpop.f32.mrb[0].mxu0
    %v1337 = vpop.f32.mrb[0].mxu0
    %v1338 = vadd.f32 %v1106, %v1337
    %v1339 = vpop.f32.mrb[0].mxu0
    %1340 = vmatprep.mubr.bf16.mxu0 0
    %1341 = vmatmul.mubr.bf16.gmra.mrb[0].mxu0 %v1073
    %v1342 = vpop.f32.mrb[0].mxu0
    %v1343 = vadd.f32 %v1106, %v1342
    %v1344 = vpop.f32.mrb[0].mxu0
    %v1345 = vpop.f32.mrb[0].mxu0
    %v1346 = vadd.f32 %v1106, %v1345
    %v1347 = vpop.f32.mrb[0].mxu0
    %1348 = vmatprep.mubr.bf16.mxu0 0
    %1349 = vmatmul.mubr.bf16.gmra.mrb[0].mxu0 %v1074
    %v1350 = vpop.f32.mrb[0].mxu0
    %v1351 = vadd.f32 %v1106, %v1350
    %v1352 = vpop.f32.mrb[0].mxu0
    %v1353 = vpop.f32.mrb[0].mxu0
    %v1354 = vadd.f32 %v1106, %v1353
    %v1355 = vpop.f32.mrb[0].mxu0
    %1356 = vmatprep.mubr.bf16.mxu0 0
    %1357 = vmatmul.mubr.bf16.gmra.mrb[0].mxu0 %v1075
    %v1358 = vpop.f32.mrb[0].mxu0
    %v1359 = vadd.f32 %v1106, %v1358
    %v1360 = vpop.f32.mrb[0].mxu0
    %v1361 = vpop.f32.mrb[0].mxu0
    %v1362 = vadd.f32 %v1106, %v1361
    %v1363 = vpop.f32.mrb[0].mxu0
    %1364 = vmatprep.mubr.bf16.mxu0 0
    %1365 = vmatmul.mubr.bf16.gmra.mrb[0].mxu0 %v1076
    %v1366 = vpop.f32.mrb[0].mxu0
    %v1367 = vadd.f32 %v1106, %v1366
    %v1368 = vpop.f32.mrb[0].mxu0
    %v1369 = vpop.f32.mrb[0].mxu0
    %v1370 = vadd.f32 %v1106, %v1369
    %v1371 = vpop.f32.mrb[0].mxu0
    %1372 = vmatprep.mubr.bf16.mxu0 0
    %1373 = vmatmul.mubr.bf16.gmra.mrb[0].mxu0 %v1077
    %v1374 = vpop.f32.mrb[0].mxu0
    %v1375 = vadd.f32 %v1106, %v1374
    %v1376 = vpop.f32.mrb[0].mxu0
    %v1377 = vpop.f32.mrb[0].mxu0
    %v1378 = vadd.f32 %v1106, %v1377
    %v1379 = vpop.f32.mrb[0].mxu0
    %1380 = vmatprep.mubr.bf16.mxu0 0
    %1381 = vmatmul.mubr.bf16.gmra.mrb[0].mxu0 %v1078
    %v1382 = vpop.f32.mrb[0].mxu0
    %v1383 = vadd.f32 %v1106, %v1382
    %v1384 = vpop.f32.mrb[0].mxu0
    %v1385 = vpop.f32.mrb[0].mxu0
    %v1386 = vadd.f32 %v1106, %v1385
    %v1387 = vpop.f32.mrb[0].mxu0
    %1388 = vmatprep.mubr.bf16.mxu0 0
    %1389 = vmatmul.mubr.bf16.gmra.mrb[0].mxu0 %v1079
    %v1390 = vpop.f32.mrb[0].mxu0
    %v1391 = vadd.f32 %v1106, %v1390
    %v1392 = vpop.f32.mrb[0].mxu0
    %v1393 = vpop.f32.mrb[0].mxu0
    %v1394 = vadd.f32 %v1106, %v1393
    %v1395 = vpop.f32.mrb[0].mxu0
    %1396 = vmatprep.mubr.bf16.mxu0 0
    %1397 = vmatmul.mubr.bf16.gmra.mrb[0].mxu0 %v1080
    %v1398 = vpop.f32.mrb[0].mxu0
    %v1399 = vadd.f32 %v1106, %v1398
    %v1400 = vpop.f32.mrb[0].mxu0
    %v1401 = vpop.f32.mrb[0].mxu0
    %v1402 = vadd.f32 %v1106, %v1401
    %v1403 = vpop.f32.mrb[0].mxu0
    %1404 = vmatprep.mubr.bf16.mxu0 0
    %1405 = vmatmul.mubr.bf16.gmra.mrb[0].mxu0 %v1081
    %v1406 = vpop.f32.mrb[0].mxu0
    %v1407 = vadd.f32 %v1106, %v1406
    %v1408 = vpop.f32.mrb[0].mxu0
    %v1409 = vpop.f32.mrb[0].mxu0
    %v1410 = vadd.f32 %v1106, %v1409
    %v1411 = vpop.f32.mrb[0].mxu0
    %1412 = vmatprep.mubr.bf16.mxu0 0
    %1413 = vmatmul.mubr.bf16.gmra.mrb[0].mxu0 %v1082
    %v1414 = vpop.f32.mrb[0].mxu0
    %v1415 = vadd.f32 %v1106, %v1414
    %v1416 = vpop.f32.mrb[0].mxu0
    %v1417 = vpop.f32.mrb[0].mxu0
    %v1418 = vadd.f32 %v1106, %v1417
    %v1419 = vpop.f32.mrb[0].mxu0
    %1420 = vmatprep.mubr.bf16.mxu0 0
    %1421 = vmatmul.mubr.bf16.gmra.mrb[0].mxu0 %v1083
    %v1422 = vpop.f32.mrb[0].mxu0
    %v1423 = vadd.f32 %v1106, %v1422
    %v1424 = vpop.f32.mrb[0].mxu0
    %v1425 = vpop.f32.mrb[0].mxu0
    %v1426 = vadd.f32 %v1106, %v1425
    %v1427 = vpop.f32.mrb[0].mxu0
    %1428 = vmatprep.mubr.bf16.mxu0 0
    %1429 = vmatmul.mubr.bf16.gmra.mrb[0].mxu0 %v1084
    %v1430 = vpop.f32.mrb[0].mxu0
    %v1431 = vadd.f32 %v1106, %v1430
    %v1432 = vpop.f32.mrb[0].mxu0
    %v1433 = vpop.f32.mrb[0].mxu0
    %v1434 = vadd.f32 %v1106, %v1433
    %v1435 = vpop.f32.mrb[0].mxu0
    %1436 = vmatprep.mubr.bf16.mxu0 0
    %1437 = vmatmul.mubr.bf16.gmra.mrb[0].mxu0 %v1085
    %v1438 = vpop.f32.mrb[0].mxu0
    %v1439 = vadd.f32 %v1106, %v1438
    %v1440 = vpop.f32.mrb[0].mxu0
    %v1441 = vpop.f32.mrb[0].mxu0
    %v1442 = vadd.f32 %v1106, %v1441
    %v1443 = vpop.f32.mrb[0].mxu0
    %1444 = vdwg.mxu0
    %v1445 = vpack.c.bf16 %v1194, %v1191
    %v1446 = vpack.c.bf16 %v1202, %v1199
    %v1447 = vpack.c.bf16 %v1210, %v1207
    %v1448 = vpack.c.bf16 %v1218, %v1215
    %v1449 = vpack.c.bf16 %v1226, %v1223
    %v1450 = vpack.c.bf16 %v1234, %v1231
    %v1451 = vpack.c.bf16 %v1242, %v1239
    %v1452 = vpack.c.bf16 %v1250, %v1247
    %v1453 = vpack.c.bf16 %v1258, %v1255
    %v1454 = vpack.c.bf16 %v1266, %v1263
    %v1455 = vpack.c.bf16 %v1274, %v1271
    %v1456 = vpack.c.bf16 %v1282, %v1279
    %v1457 = vpack.c.bf16 %v1290, %v1287
    %v1458 = vpack.c.bf16 %v1298, %v1295
    %v1459 = vpack.c.bf16 %v1306, %v1303
    %v1460 = vpack.c.bf16 %v1314, %v1311
    %v1461 = vpack.c.bf16 %v1322, %v1319
    %v1462 = vpack.c.bf16 %v1330, %v1327
    %v1463 = vpack.c.bf16 %v1338, %v1335
    %v1464 = vpack.c.bf16 %v1346, %v1343
    %v1465 = vpack.c.bf16 %v1354, %v1351
    %v1466 = vpack.c.bf16 %v1362, %v1359
    %v1467 = vpack.c.bf16 %v1370, %v1367
    %v1468 = vpack.c.bf16 %v1378, %v1375
    %v1469 = vpack.c.bf16 %v1386, %v1383
    %v1470 = vpack.c.bf16 %v1394, %v1391
    %v1471 = vpack.c.bf16 %v1402, %v1399
    %v1472 = vpack.c.bf16 %v1410, %v1407
    %v1473 = vpack.c.bf16 %v1418, %v1415
    %v1474 = vpack.c.bf16 %v1426, %v1423
    %v1475 = vpack.c.bf16 %v1434, %v1431
    %v1476 = vpack.c.bf16 %v1442, %v1439
    %v1509 = vunpack.c.l.b16 %v1445
    %v1510 = vunpack.c.h.b16 %v1445
    %v1511 = vunpack.c.l.b16 %v1446
    %v1512 = vunpack.c.h.b16 %v1446
    %v1513 = vunpack.c.l.b16 %v1447
    %v1514 = vunpack.c.h.b16 %v1447
    %v1515 = vunpack.c.l.b16 %v1448
    %v1516 = vunpack.c.h.b16 %v1448
    %v1517 = vunpack.c.l.b16 %v1449
    %v1518 = vunpack.c.h.b16 %v1449
    %v1519 = vunpack.c.l.b16 %v1450
    %v1520 = vunpack.c.h.b16 %v1450
    %v1521 = vunpack.c.l.b16 %v1451
    %v1522 = vunpack.c.h.b16 %v1451
    %v1523 = vunpack.c.l.b16 %v1452
    %v1524 = vunpack.c.h.b16 %v1452
    %v1525 = vunpack.c.l.b16 %v1453
    %v1526 = vunpack.c.h.b16 %v1453
    %v1527 = vunpack.c.l.b16 %v1454
    %v1528 = vunpack.c.h.b16 %v1454
    %v1529 = vunpack.c.l.b16 %v1455
    %v1530 = vunpack.c.h.b16 %v1455
    %v1531 = vunpack.c.l.b16 %v1456
    %v1532 = vunpack.c.h.b16 %v1456
    %v1533 = vunpack.c.l.b16 %v1457
    %v1534 = vunpack.c.h.b16 %v1457
    %v1535 = vunpack.c.l.b16 %v1458
    %v1536 = vunpack.c.h.b16 %v1458
    %v1537 = vunpack.c.l.b16 %v1459
    %v1538 = vunpack.c.h.b16 %v1459
    %v1539 = vunpack.c.l.b16 %v1460
    %v1540 = vunpack.c.h.b16 %v1460
    %v1541 = vunpack.c.l.b16 %v1461
    %v1542 = vunpack.c.h.b16 %v1461
    %v1543 = vunpack.c.l.b16 %v1462
    %v1544 = vunpack.c.h.b16 %v1462
    %v1545 = vunpack.c.l.b16 %v1463
    %v1546 = vunpack.c.h.b16 %v1463
    %v1547 = vunpack.c.l.b16 %v1464
    %v1548 = vunpack.c.h.b16 %v1464
    %v1549 = vunpack.c.l.b16 %v1465
    %v1550 = vunpack.c.h.b16 %v1465
    %v1551 = vunpack.c.l.b16 %v1466
    %v1552 = vunpack.c.h.b16 %v1466
    %v1553 = vunpack.c.l.b16 %v1467
    %v1554 = vunpack.c.h.b16 %v1467
    %v1555 = vunpack.c.l.b16 %v1468
    %v1556 = vunpack.c.h.b16 %v1468
    %v1557 = vunpack.c.l.b16 %v1469
    %v1558 = vunpack.c.h.b16 %v1469
    %v1559 = vunpack.c.l.b16 %v1470
    %v1560 = vunpack.c.h.b16 %v1470
    %v1561 = vunpack.c.l.b16 %v1471
    %v1562 = vunpack.c.h.b16 %v1471
    %v1563 = vunpack.c.l.b16 %v1472
    %v1564 = vunpack.c.h.b16 %v1472
    %v1565 = vunpack.c.l.b16 %v1473
    %v1566 = vunpack.c.h.b16 %v1473
    %v1567 = vunpack.c.l.b16 %v1474
    %v1568 = vunpack.c.h.b16 %v1474
    %v1569 = vunpack.c.l.b16 %v1475
    %v1570 = vunpack.c.h.b16 %v1475
    %v1571 = vunpack.c.l.b16 %v1476
    %v1572 = vunpack.c.h.b16 %v1476
    %v1573 = vpack.c.b16 %v1509, %v1509
    %v1574 = vpack.c.b16 %v1510, %v1510
    %v1575 = vpack.c.b16 %v1511, %v1511
    %v1576 = vpack.c.b16 %v1512, %v1512
    %v1577 = vpack.c.b16 %v1513, %v1513
    %v1578 = vpack.c.b16 %v1514, %v1514
    %v1579 = vpack.c.b16 %v1515, %v1515
    %v1580 = vpack.c.b16 %v1516, %v1516
    %v1581 = vpack.c.b16 %v1517, %v1517
    %v1582 = vpack.c.b16 %v1518, %v1518
    %v1583 = vpack.c.b16 %v1519, %v1519
    %v1584 = vpack.c.b16 %v1520, %v1520
    %v1585 = vpack.c.b16 %v1521, %v1521
    %v1586 = vpack.c.b16 %v1522, %v1522
    %v1587 = vpack.c.b16 %v1523, %v1523
    %v1588 = vpack.c.b16 %v1524, %v1524
    %v1589 = vpack.c.b16 %v1525, %v1525
    %v1590 = vpack.c.b16 %v1526, %v1526
    %v1591 = vpack.c.b16 %v1527, %v1527
    %v1592 = vpack.c.b16 %v1528, %v1528
    %v1593 = vpack.c.b16 %v1529, %v1529
    %v1594 = vpack.c.b16 %v1530, %v1530
    %v1595 = vpack.c.b16 %v1531, %v1531
    %v1596 = vpack.c.b16 %v1532, %v1532
    %v1597 = vpack.c.b16 %v1533, %v1533
    %v1598 = vpack.c.b16 %v1534, %v1534
    %v1599 = vpack.c.b16 %v1535, %v1535
    %v1600 = vpack.c.b16 %v1536, %v1536
    %v1601 = vpack.c.b16 %v1537, %v1537
    %v1602 = vpack.c.b16 %v1538, %v1538
    %v1603 = vpack.c.b16 %v1539, %v1539
    %v1604 = vpack.c.b16 %v1540, %v1540
    %v1605 = vpack.c.b16 %v1541, %v1541
    %v1606 = vpack.c.b16 %v1542, %v1542
    %v1607 = vpack.c.b16 %v1543, %v1543
    %v1608 = vpack.c.b16 %v1544, %v1544
    %v1609 = vpack.c.b16 %v1545, %v1545
    %v1610 = vpack.c.b16 %v1546, %v1546
    %v1611 = vpack.c.b16 %v1547, %v1547
    %v1612 = vpack.c.b16 %v1548, %v1548
    %v1613 = vpack.c.b16 %v1549, %v1549
    %v1614 = vpack.c.b16 %v1550, %v1550
    %v1615 = vpack.c.b16 %v1551, %v1551
    %v1616 = vpack.c.b16 %v1552, %v1552
    %v1617 = vpack.c.b16 %v1553, %v1553
    %v1618 = vpack.c.b16 %v1554, %v1554
    %v1619 = vpack.c.b16 %v1555, %v1555
    %v1620 = vpack.c.b16 %v1556, %v1556
    %v1621 = vpack.c.b16 %v1557, %v1557
    %v1622 = vpack.c.b16 %v1558, %v1558
    %v1623 = vpack.c.b16 %v1559, %v1559
    %v1624 = vpack.c.b16 %v1560, %v1560
    %v1625 = vpack.c.b16 %v1561, %v1561
    %v1626 = vpack.c.b16 %v1562, %v1562
    %v1627 = vpack.c.b16 %v1563, %v1563
    %v1628 = vpack.c.b16 %v1564, %v1564
    %v1629 = vpack.c.b16 %v1565, %v1565
    %v1630 = vpack.c.b16 %v1566, %v1566
    %v1631 = vpack.c.b16 %v1567, %v1567
    %v1632 = vpack.c.b16 %v1568, %v1568
    %v1633 = vpack.c.b16 %v1569, %v1569
    %v1634 = vpack.c.b16 %v1570, %v1570
    %v1635 = vpack.c.b16 %v1571, %v1571
    %v1636 = vpack.c.b16 %v1572, %v1572
    %1701 = vst [vmem:[#allocation2] sm:$0xf] %v1573
    %1702 = vst [vmem:[#allocation2 + $0x4] sm:$0xf] %v1574
    %1703 = vst [vmem:[#allocation2 + $0x8] sm:$0xf] %v1575
    %1704 = vst [vmem:[#allocation2 + $0xc] sm:$0xf] %v1576
    %1705 = vst [vmem:[#allocation2 + $0x10] sm:$0xf] %v1577
    %1706 = vst [vmem:[#allocation2 + $0x14] sm:$0xf] %v1578
    %1707 = vst [vmem:[#allocation2 + $0x18] sm:$0xf] %v1579
    %1708 = vst [vmem:[#allocation2 + $0x1c] sm:$0xf] %v1580
    %1709 = vst [vmem:[#allocation2 + $0x20] sm:$0xf] %v1581
    %1710 = vst [vmem:[#allocation2 + $0x24] sm:$0xf] %v1582
    %1711 = vst [vmem:[#allocation2 + $0x28] sm:$0xf] %v1583
    %1712 = vst [vmem:[#allocation2 + $0x2c] sm:$0xf] %v1584
    %1713 = vst [vmem:[#allocation2 + $0x30] sm:$0xf] %v1585
    %1714 = vst [vmem:[#allocation2 + $0x34] sm:$0xf] %v1586
    %1715 = vst [vmem:[#allocation2 + $0x38] sm:$0xf] %v1587
    %1716 = vst [vmem:[#allocation2 + $0x3c] sm:$0xf] %v1588
    %1717 = vst [vmem:[#allocation2 + $0x40] sm:$0xf] %v1589
    %1718 = vst [vmem:[#allocation2 + $0x44] sm:$0xf] %v1590
    %1719 = vst [vmem:[#allocation2 + $0x48] sm:$0xf] %v1591
    %1720 = vst [vmem:[#allocation2 + $0x4c] sm:$0xf] %v1592
    %1721 = vst [vmem:[#allocation2 + $0x50] sm:$0xf] %v1593
    %1722 = vst [vmem:[#allocation2 + $0x54] sm:$0xf] %v1594
    %1723 = vst [vmem:[#allocation2 + $0x58] sm:$0xf] %v1595
    %1724 = vst [vmem:[#allocation2 + $0x5c] sm:$0xf] %v1596
    %1725 = vst [vmem:[#allocation2 + $0x60] sm:$0xf] %v1597
    %1726 = vst [vmem:[#allocation2 + $0x64] sm:$0xf] %v1598
    %1727 = vst [vmem:[#allocation2 + $0x68] sm:$0xf] %v1599
    %1728 = vst [vmem:[#allocation2 + $0x6c] sm:$0xf] %v1600
    %1729 = vst [vmem:[#allocation2 + $0x70] sm:$0xf] %v1601
    %1730 = vst [vmem:[#allocation2 + $0x74] sm:$0xf] %v1602
    %1731 = vst [vmem:[#allocation2 + $0x78] sm:$0xf] %v1603
    %1732 = vst [vmem:[#allocation2 + $0x7c] sm:$0xf] %v1604
    %1733 = vst [vmem:[#allocation2 + $0x80] sm:$0xf] %v1605
    %1734 = vst [vmem:[#allocation2 + $0x84] sm:$0xf] %v1606
    %1735 = vst [vmem:[#allocation2 + $0x88] sm:$0xf] %v1607
    %1736 = vst [vmem:[#allocation2 + $0x8c] sm:$0xf] %v1608
    %1737 = vst [vmem:[#allocation2 + $0x90] sm:$0xf] %v1609
    %1738 = vst [vmem:[#allocation2 + $0x94] sm:$0xf] %v1610
    %1739 = vst [vmem:[#allocation2 + $0x98] sm:$0xf] %v1611
    %1740 = vst [vmem:[#allocation2 + $0x9c] sm:$0xf] %v1612
    %1741 = vst [vmem:[#allocation2 + $0xa0] sm:$0xf] %v1613
    %1742 = vst [vmem:[#allocation2 + $0xa4] sm:$0xf] %v1614
    %1743 = vst [vmem:[#allocation2 + $0xa8] sm:$0xf] %v1615
    %1744 = vst [vmem:[#allocation2 + $0xac] sm:$0xf] %v1616
    %1745 = vst [vmem:[#allocation2 + $0xb0] sm:$0xf] %v1617
    %1746 = vst [vmem:[#allocation2 + $0xb4] sm:$0xf] %v1618
    %1747 = vst [vmem:[#allocation2 + $0xb8] sm:$0xf] %v1619
    %1748 = vst [vmem:[#allocation2 + $0xbc] sm:$0xf] %v1620
    %1749 = vst [vmem:[#allocation2 + $0xc0] sm:$0xf] %v1621
    %1750 = vst [vmem:[#allocation2 + $0xc4] sm:$0xf] %v1622
    %1751 = vst [vmem:[#allocation2 + $0xc8] sm:$0xf] %v1623
    %1752 = vst [vmem:[#allocation2 + $0xcc] sm:$0xf] %v1624
    %1753 = vst [vmem:[#allocation2 + $0xd0] sm:$0xf] %v1625
    %1754 = vst [vmem:[#allocation2 + $0xd4] sm:$0xf] %v1626
    %1755 = vst [vmem:[#allocation2 + $0xd8] sm:$0xf] %v1627
    %1756 = vst [vmem:[#allocation2 + $0xdc] sm:$0xf] %v1628
    %1757 = vst [vmem:[#allocation2 + $0xe0] sm:$0xf] %v1629
    %1758 = vst [vmem:[#allocation2 + $0xe4] sm:$0xf] %v1630
    %1759 = vst [vmem:[#allocation2 + $0xe8] sm:$0xf] %v1631
    %1760 = vst [vmem:[#allocation2 + $0xec] sm:$0xf] %v1632
    %1761 = vst [vmem:[#allocation2 + $0xf0] sm:$0xf] %v1633
    %1762 = vst [vmem:[#allocation2 + $0xf4] sm:$0xf] %v1634
    %1763 = vst [vmem:[#allocation2 + $0xf8] sm:$0xf] %v1635
    %1764 = vst [vmem:[#allocation2 + $0xfc] sm:$0xf] %v1636
    // Predicated region
    $region30: #{tpu_custom_call.1} parent=1 // pred_check
      _
    $region31: #{tpu_custom_call.1} parent=1 // pred_check_branch
      %1766 = sbr.rel (0) target = $region33
    $region32: #{tpu_custom_call.1} parent=1 // pred_region
      %s1768 = ssub.s32 4096, 4096
      %1769 = vsyncadd [#allocation3], %s1768
      %s1770 = sshll.u32 [#allocation2], 4
      %s1771 = int_to_ptr.vmem [resolvable:$true] %s1770
      %1776 = dma.vmem_to_hbm [thread:$0]  %s1771, 4096, %s7, [#allocation3], 64, 64, 4
    $region33: #{tpu_custom_call.1} parent=1 // pred_fallthru
      _
    // Predicated region
    $region34: #{tpu_custom_call.1} parent=1 // pred_check
      _
    $region35: #{tpu_custom_call.1} parent=1 // pred_check_branch
      %1778 = sbr.rel (0) target = $region37
    $region36: #{tpu_custom_call.1} parent=1 // pred_region
      %1779 = dma.done [#allocation3], 4096
    $region37: #{tpu_custom_call.1} parent=1 // pred_fallthru
      _
    %1780 = vsyncpa [#allocation3], 1

</llo_original>
